<compile_context>
chip_gen: v7x
topology: tpu7x:2x2x1
jax: 0.10.0
libtpu: 0.0.40
codegen_flags: <defaults>
</compile_context>

<pallas_src>
import functools

import jax
import jax.numpy as jnp
from jax.experimental import pallas as pl
from jax.experimental.pallas import tpu as pltpu

PAD = 128      # lane width; every physical row is 128 lanes
HIDDEN = 16    # real hidden width (matches the PyTorch module)


def actor_kernel(x_ref, w_ref, b_ref, o_ref, *,
                 groups_per_block, rows_per_instance):
    # x_ref: (tb*B, PAD) f32    w_ref: (4, PAD, PAD) bf16    b_ref: (4, PAD) f32
    # o_ref: (tb*B, PAD) f32
    bias = b_ref[...]                      # hoist the bias load once
    h = x_ref[...]                         # lane-dense packed activations

    for layer in range(3):
        acc = jnp.dot(h.astype(jnp.bfloat16), w_ref[layer],
                      preferred_element_type=jnp.float32)
        h = jnp.maximum(acc + bias[layer:layer + 1, :], 0.0)

    logits = (jnp.dot(h.astype(jnp.bfloat16), w_ref[3],
                      preferred_element_type=jnp.float32)
              + bias[3:4, :])

    # softmax over dim=0 (the B rows of each forward pass).  With lane packing
    # each lane belongs to exactly one (instance, output-index) pair, so the
    # per-lane reduction over axis=1 is exactly the per-instance softmax.
    tb, B = groups_per_block, rows_per_instance
    l3 = logits.reshape(tb, B, PAD)        # B % 8 == 0 -> layout-clean reshape
    m = jnp.max(l3, axis=1, keepdims=True)
    e = jnp.exp(l3 - m)
    denom = jnp.sum(e, axis=1, keepdims=True)
    sm = e / denom                         # exact normalization (columns sum to 1)
    o_ref[...] = sm.reshape(tb * B, PAD)


def pack_params(params, group):
    """Pack (w1,b1,...,w4,b4) (real shapes) into one block-diagonal bf16 weight
    slab (4, PAD, PAD) — `group` copies of each layer's weight on the diagonal —
    and one tiled f32 bias slab (4, PAD).  Zero off-diagonal blocks keep the
    per-instance math exact."""
    (w1, b1, w2, b2, w3, b3, w4, b4) = params
    w_slab = jnp.zeros((4, PAD, PAD), jnp.float32)
    b_slab = jnp.zeros((4, PAD), jnp.float32)
    for i, (w, b) in enumerate(((w1, b1), (w2, b2), (w3, b3), (w4, b4))):
        din, dout = w.shape
        assert group * din <= PAD and group * dout <= PAD
        for g in range(group):
            w_slab = w_slab.at[i, g * din:(g + 1) * din,
                               g * dout:(g + 1) * dout].set(w)
            b_slab = b_slab.at[i, g * dout:(g + 1) * dout].set(b.reshape(-1))
    return w_slab.astype(jnp.bfloat16), b_slab


def actor_forward(x, w_slab, b_slab, *, output_dim, group, groups_per_block=64):
    """x: (N, B, input_dim) — N independent forward passes, each a batch of B
    rows with softmax over dim=0 (the B rows).  Returns (N, B, output_dim)."""
    N, B, input_dim = x.shape
    assert B % 8 == 0, "rows per forward pass must be a multiple of 8"
    lane_in = group * input_dim
    assert lane_in <= PAD

    n_groups = pl.cdiv(N, group)
    # >=2 grid steps whenever possible (both v7x TensorCores), <= 64 groups
    # (512 physical rows) per step.
    gpb = max(1, min(groups_per_block, pl.cdiv(n_groups, 2)))
    n_groups_pad = pl.cdiv(n_groups, gpb) * gpb
    n_inst_pad = n_groups_pad * group
    if n_inst_pad != N:
        x = jnp.concatenate(
            [x, jnp.zeros((n_inst_pad - N, B, input_dim), x.dtype)], axis=0)

    # Lane-pack `group` instances per physical row:
    #   physical row = (lane-group index, b), lanes = (instance-in-group, feature).
    # This is a dense transpose — exactly the real bytes, no padding slab.
    x_packed = (x.reshape(n_groups_pad, group, B, input_dim)
                  .transpose(0, 2, 1, 3)
                  .reshape(n_groups_pad * B, lane_in))
    if lane_in != PAD:   # not taken for the demo shapes (4 * 32 == 128)
        x_packed = jnp.pad(x_packed, ((0, 0), (0, PAD - lane_in)))

    rows = n_groups_pad * B
    block_rows = gpb * B
    kernel = functools.partial(actor_kernel,
                               groups_per_block=gpb,
                               rows_per_instance=B)

    out = pl.pallas_call(
        kernel,
        out_shape=jax.ShapeDtypeStruct((rows, PAD), jnp.float32),
        grid_spec=pltpu.PrefetchScalarGridSpec(
            num_scalar_prefetch=0,
            grid=(n_groups_pad // gpb,),
            in_specs=[
                pl.BlockSpec((block_rows, PAD), lambda i: (i, 0)),  # activations
                pl.BlockSpec((4, PAD, PAD), lambda i: (0, 0, 0)),   # weights (resident)
                pl.BlockSpec((4, PAD), lambda i: (0, 0)),           # biases  (resident)
            ],
            out_specs=pl.BlockSpec((block_rows, PAD), lambda i: (i, 0)),
        ),
        compiler_params=pltpu.CompilerParams(
            dimension_semantics=("parallel",),  # shard groups across TCs (v7x)
        ),
    )(x_packed, w_slab, b_slab)

    # Unpack lanes -> (N, B, output_dim).  Real output lanes: group*output_dim.
    out = out.reshape(n_groups_pad, B, PAD)[:, :, :group * output_dim]
    out = (out.reshape(n_groups_pad, B, group, output_dim)
              .transpose(0, 2, 1, 3)
              .reshape(n_inst_pad, B, output_dim))
    return out[:N]


def xavier_uniform(key, fan_in, fan_out):
    # matches torch.nn.init.xavier_uniform_ (gain=1), stored as (in, out)
    bound = (6.0 / (fan_in + fan_out)) ** 0.5
    return jax.random.uniform(key, (fan_in, fan_out), jnp.float32,
                              minval=-bound, maxval=bound)


def init_params(key, input_dim, output_dim):
    h = HIDDEN
    k1, k2, k3, k4 = jax.random.split(key, 4)
    w1 = xavier_uniform(k1, input_dim, h)
    w2 = xavier_uniform(k2, h, h)
    w3 = xavier_uniform(k3, h, h)
    w4 = xavier_uniform(k4, h, output_dim)
    b1 = jnp.zeros((1, h), jnp.float32)
    b2 = jnp.zeros((1, h), jnp.float32)
    b3 = jnp.zeros((1, h), jnp.float32)
    b4 = jnp.zeros((1, output_dim), jnp.float32)
    return (w1, b1, w2, b2, w3, b3, w4, b4)


def reference_forward(x, params, matmul_dtype=jnp.float32):
    # x: (N, B, input_dim); softmax over dim=0 within each instance -> axis=1.
    (w1, b1, w2, b2, w3, b3, w4, b4) = params

    def lin(h, w, b):
        return jnp.dot(h.astype(matmul_dtype), w.astype(matmul_dtype),
                       preferred_element_type=jnp.float32) + b

    h = jax.nn.relu(lin(x, w1, b1))
    h = jax.nn.relu(lin(h, w2, b2))
    h = jax.nn.relu(lin(h, w3, b3))
    return jax.nn.softmax(lin(h, w4, b4), axis=1)


if __name__ == "__main__":
    input_dim = 32
    output_dim = 8
    B = 8      # rows per forward pass (softmax dim=0 couples exactly these rows)
    N = 512    # independent forward passes batched into one pallas_call

    # 4 instances share one 128-lane row: 4*32 input lanes (fully dense),
    # 4*16 hidden lanes, 4*8 output lanes.
    group = PAD // max(input_dim, HIDDEN, output_dim)

    key = jax.random.PRNGKey(0)
    kx, kp = jax.random.split(key)
    x = jax.random.normal(kx, (N, B, input_dim), jnp.float32)
    params = init_params(kp, input_dim, output_dim)
    w_slab, b_slab = pack_params(params, group)   # pack once, reuse every call

    out = actor_forward(x, w_slab, b_slab, output_dim=output_dim, group=group)
    jax.block_until_ready(out)

    assert out.shape == (N, B, output_dim)

    # Tight check vs a reference that matches the kernel's bf16 MXU operands.
    ref_bf16 = reference_forward(x, params, matmul_dtype=jnp.bfloat16)
    assert jnp.allclose(out, ref_bf16, atol=2e-3, rtol=2e-3), \
        float(jnp.max(jnp.abs(out - ref_bf16)))

    # Sanity check vs the exact f32 module semantics (bf16 operand rounding).
    ref_f32 = reference_forward(x, params)
    assert jnp.allclose(out, ref_f32, atol=5e-2, rtol=5e-2), \
        float(jnp.max(jnp.abs(out - ref_f32)))

    # softmax(dim=0): each (instance, output) column sums to 1 over the B rows.
    col_sums = out.sum(axis=1)
    assert jnp.allclose(col_sums, 1.0, atol=1e-3), \
        float(jnp.max(jnp.abs(col_sums - 1.0)))

    print("KERNEL_OK")
</pallas_src>

<mosaic_0001>
module attributes {stable_mosaic.version = 11 : i64} {
  func.func @actor_kernel(%arg0: i32, %arg1: memref<512x128xf32, #tpu.memory_space<vmem>>, %arg2: memref<4x128x128xbf16, #tpu.memory_space<vmem>>, %arg3: memref<4x128xf32, #tpu.memory_space<vmem>>, %arg4: memref<512x128xf32, #tpu.memory_space<vmem>>) attributes {dimension_semantics = [#tpu.dimension_semantics<parallel>], iteration_bounds = array<i64: 2>, scalar_prefetch = 0 : i64, scratch_operands = 0 : i64, tpu.core_type = #tpu.core_type<tc>, window_params = [{transform_indices = @transform_0, window_bounds = array<i64: 512, 128>}, {pipeline_mode = #tpu.pipeline_mode<synchronous>, transform_indices = @transform_1, window_bounds = array<i64: 4, 128, 128>}, {pipeline_mode = #tpu.pipeline_mode<synchronous>, transform_indices = @transform_2, window_bounds = array<i64: 4, 128>}, {transform_indices = @transform_3, window_bounds = array<i64: 512, 128>}]} {
    %c0 = arith.constant 0 : index
    %c0_0 = arith.constant 0 : index
    %0 = vector.load %arg3[%c0, %c0_0] : memref<4x128xf32, #tpu.memory_space<vmem>>, vector<4x128xf32>
    %c0_1 = arith.constant 0 : index
    %c0_2 = arith.constant 0 : index
    %1 = vector.load %arg1[%c0_1, %c0_2] : memref<512x128xf32, #tpu.memory_space<vmem>>, vector<512x128xf32>
    %2 = arith.truncf %1 : vector<512x128xf32> to vector<512x128xbf16>
    %c0_3 = arith.constant 0 : index
    %c0_4 = arith.constant 0 : index
    %c0_5 = arith.constant 0 : index
    %3 = vector.load %arg2[%c0_3, %c0_4, %c0_5] : memref<4x128x128xbf16, #tpu.memory_space<vmem>>, vector<1x128x128xbf16>
    %4 = vector.shape_cast %3 : vector<1x128x128xbf16> to vector<128x128xbf16>
    %cst = arith.constant dense<0.000000e+00> : vector<512x128xf32>
    %5 = tpu.matmul %2, %4, %cst {dimension_numbers = #tpu.dot_dimension_numbers<[1], [0], [0], [1], [0, 0, 1, 1], [], []>} : vector<512x128xbf16>, vector<128x128xbf16>, vector<512x128xf32> -> vector<512x128xf32>
    %6 = vector.extract_strided_slice %0 {offsets = [0, 0], sizes = [1, 128], strides = [1, 1]} : vector<4x128xf32> to vector<1x128xf32>
    %7 = vector.broadcast %6 : vector<1x128xf32> to vector<512x128xf32>
    %8 = arith.addf %5, %7 : vector<512x128xf32>
    %cst_6 = arith.constant 0.000000e+00 : f32
    %9 = vector.broadcast %cst_6 : f32 to vector<512x128xf32>
    %10 = arith.maximumf %8, %9 : vector<512x128xf32>
    %11 = arith.truncf %10 : vector<512x128xf32> to vector<512x128xbf16>
    %c1 = arith.constant 1 : index
    %c0_7 = arith.constant 0 : index
    %c0_8 = arith.constant 0 : index
    %12 = vector.load %arg2[%c1, %c0_7, %c0_8] : memref<4x128x128xbf16, #tpu.memory_space<vmem>>, vector<1x128x128xbf16>
    %13 = vector.shape_cast %12 : vector<1x128x128xbf16> to vector<128x128xbf16>
    %cst_9 = arith.constant dense<0.000000e+00> : vector<512x128xf32>
    %14 = tpu.matmul %11, %13, %cst_9 {dimension_numbers = #tpu.dot_dimension_numbers<[1], [0], [0], [1], [0, 0, 1, 1], [], []>} : vector<512x128xbf16>, vector<128x128xbf16>, vector<512x128xf32> -> vector<512x128xf32>
    %15 = vector.extract_strided_slice %0 {offsets = [1, 0], sizes = [1, 128], strides = [1, 1]} : vector<4x128xf32> to vector<1x128xf32>
    %16 = vector.broadcast %15 : vector<1x128xf32> to vector<512x128xf32>
    %17 = arith.addf %14, %16 : vector<512x128xf32>
    %cst_10 = arith.constant 0.000000e+00 : f32
    %18 = vector.broadcast %cst_10 : f32 to vector<512x128xf32>
    %19 = arith.maximumf %17, %18 : vector<512x128xf32>
    %20 = arith.truncf %19 : vector<512x128xf32> to vector<512x128xbf16>
    %c2 = arith.constant 2 : index
    %c0_11 = arith.constant 0 : index
    %c0_12 = arith.constant 0 : index
    %21 = vector.load %arg2[%c2, %c0_11, %c0_12] : memref<4x128x128xbf16, #tpu.memory_space<vmem>>, vector<1x128x128xbf16>
    %22 = vector.shape_cast %21 : vector<1x128x128xbf16> to vector<128x128xbf16>
    %cst_13 = arith.constant dense<0.000000e+00> : vector<512x128xf32>
    %23 = tpu.matmul %20, %22, %cst_13 {dimension_numbers = #tpu.dot_dimension_numbers<[1], [0], [0], [1], [0, 0, 1, 1], [], []>} : vector<512x128xbf16>, vector<128x128xbf16>, vector<512x128xf32> -> vector<512x128xf32>
    %24 = vector.extract_strided_slice %0 {offsets = [2, 0], sizes = [1, 128], strides = [1, 1]} : vector<4x128xf32> to vector<1x128xf32>
    %25 = vector.broadcast %24 : vector<1x128xf32> to vector<512x128xf32>
    %26 = arith.addf %23, %25 : vector<512x128xf32>
    %cst_14 = arith.constant 0.000000e+00 : f32
    %27 = vector.broadcast %cst_14 : f32 to vector<512x128xf32>
    %28 = arith.maximumf %26, %27 : vector<512x128xf32>
    %29 = arith.truncf %28 : vector<512x128xf32> to vector<512x128xbf16>
    %c3 = arith.constant 3 : index
    %c0_15 = arith.constant 0 : index
    %c0_16 = arith.constant 0 : index
    %30 = vector.load %arg2[%c3, %c0_15, %c0_16] : memref<4x128x128xbf16, #tpu.memory_space<vmem>>, vector<1x128x128xbf16>
    %31 = vector.shape_cast %30 : vector<1x128x128xbf16> to vector<128x128xbf16>
    %cst_17 = arith.constant dense<0.000000e+00> : vector<512x128xf32>
    %32 = tpu.matmul %29, %31, %cst_17 {dimension_numbers = #tpu.dot_dimension_numbers<[1], [0], [0], [1], [0, 0, 1, 1], [], []>} : vector<512x128xbf16>, vector<128x128xbf16>, vector<512x128xf32> -> vector<512x128xf32>
    %33 = vector.extract_strided_slice %0 {offsets = [3, 0], sizes = [1, 128], strides = [1, 1]} : vector<4x128xf32> to vector<1x128xf32>
    %34 = vector.broadcast %33 : vector<1x128xf32> to vector<512x128xf32>
    %35 = arith.addf %32, %34 : vector<512x128xf32>
    %36 = vector.shape_cast %35 : vector<512x128xf32> to vector<64x8x128xf32>
    %cst_18 = arith.constant dense<0xFF800000> : vector<64x128xf32>
    %37 = vector.multi_reduction <maximumf>, %36, %cst_18 [1] : vector<64x8x128xf32> to vector<64x128xf32>
    %38 = vector.shape_cast %37 : vector<64x128xf32> to vector<64x1x128xf32>
    %39 = vector.broadcast %38 : vector<64x1x128xf32> to vector<64x8x128xf32>
    %40 = arith.subf %36, %39 : vector<64x8x128xf32>
    %41 = math.exp %40 : vector<64x8x128xf32>
    %cst_19 = arith.constant dense<0.000000e+00> : vector<64x128xf32>
    %42 = vector.multi_reduction <add>, %41, %cst_19 [1] : vector<64x8x128xf32> to vector<64x128xf32>
    %43 = vector.shape_cast %42 : vector<64x128xf32> to vector<64x1x128xf32>
    %44 = vector.broadcast %43 : vector<64x1x128xf32> to vector<64x8x128xf32>
    %45 = arith.divf %41, %44 : vector<64x8x128xf32>
    %46 = vector.shape_cast %45 : vector<64x8x128xf32> to vector<512x128xf32>
    %c0_20 = arith.constant 0 : index
    %c0_21 = arith.constant 0 : index
    %47 = vector.load %arg4[%c0_20, %c0_21] : memref<512x128xf32, #tpu.memory_space<vmem>>, vector<512x128xf32>
    tpu.vector_store %arg4[%c0_20, %c0_21], %46 {strides = array<i32>} : memref<512x128xf32, #tpu.memory_space<vmem>>, vector<512x128xf32>,
    return
  }
  func.func @transform_0(%arg0: i32) -> (i32, i32) {
    %c0_i32 = arith.constant 0 : i32
    %c0_i32_0 = arith.constant 0 : i32
    return %arg0, %c0_i32 : i32, i32
  }
  func.func @transform_1(%arg0: i32) -> (i32, i32, i32) {
    %c0_i32 = arith.constant 0 : i32
    %c0_i32_0 = arith.constant 0 : i32
    %c0_i32_1 = arith.constant 0 : i32
    %c0_i32_2 = arith.constant 0 : i32
    return %c0_i32, %c0_i32_0, %c0_i32_1 : i32, i32, i32
  }
  func.func @transform_2(%arg0: i32) -> (i32, i32) {
    %c0_i32 = arith.constant 0 : i32
    %c0_i32_0 = arith.constant 0 : i32
    %c0_i32_1 = arith.constant 0 : i32
    return %c0_i32, %c0_i32_0 : i32, i32
  }
  func.func @transform_3(%arg0: i32) -> (i32, i32) {
    %c0_i32 = arith.constant 0 : i32
    %c0_i32_0 = arith.constant 0 : i32
    return %arg0, %c0_i32 : i32, i32
  }
}

</mosaic_0001>

<llo_original>
// kernel: tpu_custom_call.1
$region0: #{tpu_custom_call.1}
  #allocation0 [shape = 'u32[]', space=smem, size = 0x4, offset = 0x4, fixed_abs, tag = 'smem constant byte address 0x4 - core index']
  #allocation1 [shape = 'u32[144,128]{1,0:T(1,128)}', space=vmem, size = 0x12000, scoped, tag = 'internal scratch']
  %s0 = inlined_call_operand.hbm [shape: f32[1024,128], index: 0, kind: input, shape index: {}]
  %s1 = inlined_call_operand.hbm [shape: bf16[4,128,128], index: 1, kind: input, shape index: {}]
  %s2 = inlined_call_operand.vmem [shape: f32[4,128], index: 2, kind: input, shape index: {}]
  %s3 = inlined_call_operand.hbm [shape: f32[1024,128], index: 3, kind: output, shape index: {}]
  %s4 = sld [smem:[#allocation0]]
  $region53: #{tpu_custom_call.1} parent=0
    _
  %s6 = ssub.s32 1, %s4
  %s7 = scalar_select 0, %s6, %s4
  $region1: #{tpu_custom_call.1} parent=0
    #allocation2 [shape = 'u8[524288]{0}', space=vmem, size = 0x80000, scoped, tag = 'input window, operand 0']
    #allocation3 [shape = 's32[2]{0}', space=sflag, size = 0x8, scoped, tag = 'scoped memory for tpu_custom_call.1']
    #allocation4 [shape = 's32[2]{0}', space=sflag, size = 0x8, scoped, tag = 'scoped memory for tpu_custom_call.1']
    #allocation5 [shape = 'u8[131072]{0}', space=vmem, size = 0x20000, scoped, tag = 'input window, operand 1, single buffered']
    #allocation6 [shape = 's32[1]{0}', space=sflag, size = 0x4, scoped, tag = 'scoped memory for tpu_custom_call.1']
    #allocation7 [shape = 'u8[524288]{0}', space=vmem, size = 0x80000, scoped, tag = 'output window, operand 0']
    %8 = vsyncpa [#allocation3], 0
    %s9 = scalar_lea.sflag [#allocation3], 1
    %10 = vsyncpa %s9, 0
    %11 = vsyncpa [#allocation6], 0
    %12 = vsyncpa [#allocation4], 0
    %s13 = scalar_lea.sflag [#allocation4], 1
    %14 = vsyncpa %s13, 0
    loop: start=0, step=1, limit=4
    $region2: #{tpu_custom_call.1} parent=1 // loop_pre_header
      _
    $region3: #{tpu_custom_call.1} parent=1 // loop_header
      %s16 = sphi 0, %s20
      %p17 = scmp.ge.s32.totalorder %s16, 4
      %s26 = sphi 0, %s28
      %s29 = sphi 0, %s26
      %s30 = sphi 0, %s29
      %s46 = sphi 0, %s30
      %s50 = sphi 0, %s50
      %s52 = sphi 0, %s50
      %s53 = sphi 0, %s52
      %s67 = sphi 0, %s53
      %s71 = sphi 0, %s71
      %s73 = sphi 0, %s71
      %s74 = sphi 0, %s73
      %s88 = sphi 0, %s74
      %s94 = sphi 0, %s96
      %s97 = sphi 0, %s94
      %s98 = sphi 0, %s97
      %s114 = sphi 0, %s98
    $region4: #{tpu_custom_call.1} parent=1 // loop_header_branch
      %19 = sbr.rel (%p17) target = $region8
    $region5: #{tpu_custom_call.1} parent=1 // loop_body
      %s21 = ssub.s32 %s16, 1
      %s22 = ssub.s32 %s16, 2
      %s23 = sadd.s32 %s16, 1
      %s24 = ssub.s32 %s16, %s23
      %p25 = scmp.eq.s32.totalorder %s24, 0
      %s27 = sadd.s32 %s26, 1
      %s28 = scalar_select %p25, %s26, %s27
      %p31 = pneg %p25
      %p32 = scmp.eq.s32.totalorder %s16, 1
      %p33 = por %p31, %p32
      %p34 = scmp.ne.s32.totalorder %s26, %s29
      %p35 = scmp.eq.s32.totalorder %s16, 0
      %p36 = por %p34, %p35
      %p37 = scmp.ne.s32.totalorder %s26, %s29
      %p38 = scmp.eq.s32.totalorder %s21, 1
      %p39 = por %p37, %p38
      %p40 = scmp.ne.s32.totalorder %s29, %s30
      %p41 = scmp.eq.s32.totalorder %s21, 0
      %p42 = por %p40, %p41
      %p43 = scmp.ne.s32.totalorder %s29, %s30
      %p44 = scmp.eq.s32.totalorder %s22, 1
      %p45 = por %p43, %p44
      %p47 = scmp.ne.s32.totalorder %s30, %s46
      %p48 = scmp.eq.s32.totalorder %s22, 0
      %p49 = por %p47, %p48
      %s51 = sadd.s32 %s50, 1
      %p54 = scmp.eq.s32.totalorder %s16, 1
      %p55 = scmp.ne.s32.totalorder %s50, %s52
      %p56 = scmp.eq.s32.totalorder %s16, 0
      %p57 = por %p55, %p56
      %p58 = scmp.ne.s32.totalorder %s50, %s52
      %p59 = scmp.eq.s32.totalorder %s21, 1
      %p60 = por %p58, %p59
      %p61 = scmp.ne.s32.totalorder %s52, %s53
      %p62 = scmp.eq.s32.totalorder %s21, 0
      %p63 = por %p61, %p62
      %p64 = scmp.ne.s32.totalorder %s52, %s53
      %p65 = scmp.eq.s32.totalorder %s22, 1
      %p66 = por %p64, %p65
      %p68 = scmp.ne.s32.totalorder %s53, %s67
      %p69 = scmp.eq.s32.totalorder %s22, 0
      %p70 = por %p68, %p69
      %s72 = sadd.s32 %s71, 1
      %p75 = scmp.eq.s32.totalorder %s16, 1
      %p76 = scmp.ne.s32.totalorder %s71, %s73
      %p77 = scmp.eq.s32.totalorder %s16, 0
      %p78 = por %p76, %p77
      %p79 = scmp.ne.s32.totalorder %s71, %s73
      %p80 = scmp.eq.s32.totalorder %s21, 1
      %p81 = por %p79, %p80
      %p82 = scmp.ne.s32.totalorder %s73, %s74
      %p83 = scmp.eq.s32.totalorder %s21, 0
      %p84 = por %p82, %p83
      %p85 = scmp.ne.s32.totalorder %s73, %s74
      %p86 = scmp.eq.s32.totalorder %s22, 1
      %p87 = por %p85, %p86
      %p89 = scmp.ne.s32.totalorder %s74, %s88
      %p90 = scmp.eq.s32.totalorder %s22, 0
      %p91 = por %p89, %p90
      %s92 = ssub.s32 %s16, %s23
      %p93 = scmp.eq.s32.totalorder %s92, 0
      %s95 = sadd.s32 %s94, 1
      %s96 = scalar_select %p93, %s94, %s95
      %p99 = pneg %p93
      %p100 = scmp.eq.s32.totalorder %s16, 1
      %p101 = por %p99, %p100
      %p102 = scmp.ne.s32.totalorder %s94, %s97
      %p103 = scmp.eq.s32.totalorder %s16, 0
      %p104 = por %p102, %p103
      %p105 = scmp.ne.s32.totalorder %s94, %s97
      %p106 = scmp.eq.s32.totalorder %s21, 1
      %p107 = por %p105, %p106
      %p108 = scmp.ne.s32.totalorder %s97, %s98
      %p109 = scmp.eq.s32.totalorder %s21, 0
      %p110 = por %p108, %p109
      %p111 = scmp.ne.s32.totalorder %s97, %s98
      %p112 = scmp.eq.s32.totalorder %s22, 1
      %p113 = por %p111, %p112
      %p115 = scmp.ne.s32.totalorder %s98, %s114
      %p116 = scmp.eq.s32.totalorder %s22, 0
      %p117 = por %p115, %p116
      %p118 = scmp.le.s32.totalorder 1, %s16
      %p119 = scmp.lt.s32.totalorder %s16, 3
      %p120 = pnand %p118, %p119
      %p121 = pneg %p120
      // Predicated region
      $region9: #{tpu_custom_call.1} parent=5 // pred_check
        _
      $region10: #{tpu_custom_call.1} parent=5 // pred_check_branch
        %123 = sbr.rel (%p120) target = $region12
      $region11: #{tpu_custom_call.1} parent=5 // pred_region
        %s124 = ssub.s32 %s16, 1
        // Predicated region
        $region13: #{tpu_custom_call.1} parent=11 // pred_check
          %p125 = pneg %p63
        $region14: #{tpu_custom_call.1} parent=11 // pred_check_branch
          %127 = sbr.rel (%p125) target = $region16
        $region15: #{tpu_custom_call.1} parent=11 // pred_region
          %s129 = ssub.s32 4096, 4096
          %130 = vsyncadd [#allocation6], %s129
          %s131 = sshll.u32 [#allocation5], 4
          %s132 = int_to_ptr.vmem [resolvable:$true] %s131
          %137 = dma.hbm_to_vmem [thread:$0]  %s1, 4096, %s132, [#allocation6], 64, 64, 4
        $region16: #{tpu_custom_call.1} parent=11 // pred_fallthru
          _
        // Predicated region
        $region17: #{tpu_custom_call.1} parent=11 // pred_check
          %p138 = pneg %p84
        $region18: #{tpu_custom_call.1} parent=11 // pred_check_branch
          %140 = sbr.rel (%p138) target = $region20
        $region19: #{tpu_custom_call.1} parent=11 // pred_region
          _
        $region20: #{tpu_custom_call.1} parent=11 // pred_fallthru
          _
      $region12: #{tpu_custom_call.1} parent=5 // pred_fallthru
        _
      %p141 = scmp.lt.s32.totalorder %s16, 2
      // Predicated region
      $region21: #{tpu_custom_call.1} parent=5 // pred_check
        %p142 = pneg %p141
      $region22: #{tpu_custom_call.1} parent=5 // pred_check_branch
        %144 = sbr.rel (%p142) target = $region24
      $region23: #{tpu_custom_call.1} parent=5 // pred_region
        // Predicated region
        $region25: #{tpu_custom_call.1} parent=23 // pred_check
          %p145 = pneg %p36
        $region26: #{tpu_custom_call.1} parent=23 // pred_check_branch
          %147 = sbr.rel (%p145) target = $region28
        $region27: #{tpu_custom_call.1} parent=23 // pred_region
          %s148 = sand.u32 %s26, 1
          %s149 = scalar_lea.sflag [#allocation3], %s148
          %s150 = sand.u32 %s26, 1
          %s151 = smul.addr %s150, 512
          %s152 = scalar_lea.vmem [#allocation2], %s151
          %s153 = smul.u32 64, %s16
          %s155 = ssub.s32 8192, 8192
          %156 = vsyncadd %s149, %s155
          %s157 = smul.addr %s153, 128
          %s158 = scalar_lea.hbm %s0, %s157
          %s159 = sshll.u32 %s152, 4
          %s160 = int_to_ptr.vmem [resolvable:$true] %s159
          %165 = dma.hbm_to_vmem [thread:$0]  %s158, 8192, %s160, %s149, 128, 128, 8
        $region28: #{tpu_custom_call.1} parent=23 // pred_fallthru
          _
      $region24: #{tpu_custom_call.1} parent=5 // pred_fallthru
        _
      %p166 = scmp.le.s32.totalorder 1, %s16
      %p167 = scmp.lt.s32.totalorder %s16, 3
      %p168 = pnand %p166, %p167
      %p169 = pneg %p168
      // Predicated region
      $region29: #{tpu_custom_call.1} parent=5 // pred_check
        _
      $region30: #{tpu_custom_call.1} parent=5 // pred_check_branch
        %171 = sbr.rel (%p168) target = $region32
      $region31: #{tpu_custom_call.1} parent=5 // pred_region
        %s172 = ssub.s32 %s16, 1
        %s173 = sand.u32 %s29, 1
        %s174 = scalar_lea.sflag [#allocation3], %s173
        %s175 = sand.u32 %s29, 1
        %s176 = smul.addr %s175, 512
        %s177 = scalar_lea.vmem [#allocation2], %s176
        // Predicated region
        $region33: #{tpu_custom_call.1} parent=31 // pred_check
          %p178 = pneg %p42
        $region34: #{tpu_custom_call.1} parent=31 // pred_check_branch
          %180 = sbr.rel (%p178) target = $region36
        $region35: #{tpu_custom_call.1} parent=31 // pred_region
          %181 = dma.done %s174, 8192
        $region36: #{tpu_custom_call.1} parent=31 // pred_fallthru
          _
        // Predicated region
        $region37: #{tpu_custom_call.1} parent=31 // pred_check
          %p182 = pneg %p63
        $region38: #{tpu_custom_call.1} parent=31 // pred_check_branch
          %184 = sbr.rel (%p182) target = $region40
        $region39: #{tpu_custom_call.1} parent=31 // pred_region
          %185 = dma.done [#allocation6], 4096
        $region40: #{tpu_custom_call.1} parent=31 // pred_fallthru
          _
        %s186 = sand.u32 %s29, 1
        %s187 = scalar_lea.sflag [#allocation3], %s186
        %s188 = sand.u32 %s29, 1
        %s189 = smul.addr %s188, 512
        %s190 = scalar_lea.vmem [#allocation2], %s189
        %p191 = pneg %p42
        %p192 = pneg %p39
        %p193 = pneg %p63
        %p194 = pneg %p60
        %p195 = pneg %p84
        %p196 = pneg %p81
        %p197 = pneg %p110
        %p198 = pneg %p107
        %s199 = sand.u32 %s97, 1
        %s200 = scalar_lea.sflag [#allocation4], %s199
        %s201 = sand.u32 %s97, 1
        %s202 = smul.addr %s201, 512
        %s203 = scalar_lea.vmem [#allocation7], %s202
        %s204 = smul.u32 64, %s21
        %s205 = smul.u32 64, %s21
        %v207 = vld [vmem:[%s2] sm:$0xf]
        %v208 = vld [vmem:[%s177] sm:$0xff]
        %v209 = vld [vmem:[%s177 + $0x8] sm:$0xff]
        %v210 = vld [vmem:[%s177 + $0x10] sm:$0xff]
        %v211 = vld [vmem:[%s177 + $0x18] sm:$0xff]
        %v212 = vld [vmem:[%s177 + $0x20] sm:$0xff]
        %v213 = vld [vmem:[%s177 + $0x28] sm:$0xff]
        %v214 = vld [vmem:[%s177 + $0x30] sm:$0xff]
        %v215 = vld [vmem:[%s177 + $0x38] sm:$0xff]
        %v216 = vld [vmem:[%s177 + $0x40] sm:$0xff]
        %v217 = vld [vmem:[%s177 + $0x48] sm:$0xff]
        %v218 = vld [vmem:[%s177 + $0x50] sm:$0xff]
        %v219 = vld [vmem:[%s177 + $0x58] sm:$0xff]
        %v220 = vld [vmem:[%s177 + $0x60] sm:$0xff]
        %v221 = vld [vmem:[%s177 + $0x68] sm:$0xff]
        %v222 = vld [vmem:[%s177 + $0x70] sm:$0xff]
        %v223 = vld [vmem:[%s177 + $0x78] sm:$0xff]
        %v224 = vld [vmem:[%s177 + $0x80] sm:$0xff]
        %v225 = vld [vmem:[%s177 + $0x88] sm:$0xff]
        %v226 = vld [vmem:[%s177 + $0x90] sm:$0xff]
        %v227 = vld [vmem:[%s177 + $0x98] sm:$0xff]
        %v228 = vld [vmem:[%s177 + $0xa0] sm:$0xff]
        %v229 = vld [vmem:[%s177 + $0xa8] sm:$0xff]
        %v230 = vld [vmem:[%s177 + $0xb0] sm:$0xff]
        %v231 = vld [vmem:[%s177 + $0xb8] sm:$0xff]
        %v232 = vld [vmem:[%s177 + $0xc0] sm:$0xff]
        %v233 = vld [vmem:[%s177 + $0xc8] sm:$0xff]
        %v234 = vld [vmem:[%s177 + $0xd0] sm:$0xff]
        %v235 = vld [vmem:[%s177 + $0xd8] sm:$0xff]
        %v236 = vld [vmem:[%s177 + $0xe0] sm:$0xff]
        %v237 = vld [vmem:[%s177 + $0xe8] sm:$0xff]
        %v238 = vld [vmem:[%s177 + $0xf0] sm:$0xff]
        %v239 = vld [vmem:[%s177 + $0xf8] sm:$0xff]
        %v240 = vld [vmem:[%s177 + $0x100] sm:$0xff]
        %v241 = vld [vmem:[%s177 + $0x108] sm:$0xff]
        %v242 = vld [vmem:[%s177 + $0x110] sm:$0xff]
        %v243 = vld [vmem:[%s177 + $0x118] sm:$0xff]
        %v244 = vld [vmem:[%s177 + $0x120] sm:$0xff]
        %v245 = vld [vmem:[%s177 + $0x128] sm:$0xff]
        %v246 = vld [vmem:[%s177 + $0x130] sm:$0xff]
        %v247 = vld [vmem:[%s177 + $0x138] sm:$0xff]
        %v248 = vld [vmem:[%s177 + $0x140] sm:$0xff]
        %v249 = vld [vmem:[%s177 + $0x148] sm:$0xff]
        %v250 = vld [vmem:[%s177 + $0x150] sm:$0xff]
        %v251 = vld [vmem:[%s177 + $0x158] sm:$0xff]
        %v252 = vld [vmem:[%s177 + $0x160] sm:$0xff]
        %v253 = vld [vmem:[%s177 + $0x168] sm:$0xff]
        %v254 = vld [vmem:[%s177 + $0x170] sm:$0xff]
        %v255 = vld [vmem:[%s177 + $0x178] sm:$0xff]
        %v256 = vld [vmem:[%s177 + $0x180] sm:$0xff]
        %v257 = vld [vmem:[%s177 + $0x188] sm:$0xff]
        %v258 = vld [vmem:[%s177 + $0x190] sm:$0xff]
        %v259 = vld [vmem:[%s177 + $0x198] sm:$0xff]
        %v260 = vld [vmem:[%s177 + $0x1a0] sm:$0xff]
        %v261 = vld [vmem:[%s177 + $0x1a8] sm:$0xff]
        %v262 = vld [vmem:[%s177 + $0x1b0] sm:$0xff]
        %v263 = vld [vmem:[%s177 + $0x1b8] sm:$0xff]
        %v264 = vld [vmem:[%s177 + $0x1c0] sm:$0xff]
        %v265 = vld [vmem:[%s177 + $0x1c8] sm:$0xff]
        %v266 = vld [vmem:[%s177 + $0x1d0] sm:$0xff]
        %v267 = vld [vmem:[%s177 + $0x1d8] sm:$0xff]
        %v268 = vld [vmem:[%s177 + $0x1e0] sm:$0xff]
        %v269 = vld [vmem:[%s177 + $0x1e8] sm:$0xff]
        %v270 = vld [vmem:[%s177 + $0x1f0] sm:$0xff]
        %v271 = vld [vmem:[%s177 + $0x1f8] sm:$0xff]
        %v272 = vpack.c.bf16 %v209, %v208
        %v273 = vpack.c.bf16 %v211, %v210
        %v274 = vpack.c.bf16 %v213, %v212
        %v275 = vpack.c.bf16 %v215, %v214
        %v276 = vpack.c.bf16 %v217, %v216
        %v277 = vpack.c.bf16 %v219, %v218
        %v278 = vpack.c.bf16 %v221, %v220
        %v279 = vpack.c.bf16 %v223, %v222
        %v280 = vpack.c.bf16 %v225, %v224
        %v281 = vpack.c.bf16 %v227, %v226
        %v282 = vpack.c.bf16 %v229, %v228
        %v283 = vpack.c.bf16 %v231, %v230
        %v284 = vpack.c.bf16 %v233, %v232
        %v285 = vpack.c.bf16 %v235, %v234
        %v286 = vpack.c.bf16 %v237, %v236
        %v287 = vpack.c.bf16 %v239, %v238
        %v288 = vpack.c.bf16 %v241, %v240
        %v289 = vpack.c.bf16 %v243, %v242
        %v290 = vpack.c.bf16 %v245, %v244
        %v291 = vpack.c.bf16 %v247, %v246
        %v292 = vpack.c.bf16 %v249, %v248
        %v293 = vpack.c.bf16 %v251, %v250
        %v294 = vpack.c.bf16 %v253, %v252
        %v295 = vpack.c.bf16 %v255, %v254
        %v296 = vpack.c.bf16 %v257, %v256
        %v297 = vpack.c.bf16 %v259, %v258
        %v298 = vpack.c.bf16 %v261, %v260
        %v299 = vpack.c.bf16 %v263, %v262
        %v300 = vpack.c.bf16 %v265, %v264
        %v301 = vpack.c.bf16 %v267, %v266
        %v302 = vpack.c.bf16 %v269, %v268
        %v303 = vpack.c.bf16 %v271, %v270
        %v304 = vld [vmem:[#allocation5] sm:$0xf]
        %v305 = vld [vmem:[#allocation5 + $0x4] sm:$0xf]
        %v306 = vld [vmem:[#allocation5 + $0x8] sm:$0xf]
        %v307 = vld [vmem:[#allocation5 + $0xc] sm:$0xf]
        %v308 = vld [vmem:[#allocation5 + $0x10] sm:$0xf]
        %v309 = vld [vmem:[#allocation5 + $0x14] sm:$0xf]
        %v310 = vld [vmem:[#allocation5 + $0x18] sm:$0xf]
        %v311 = vld [vmem:[#allocation5 + $0x1c] sm:$0xf]
        %v312 = vld [vmem:[#allocation5 + $0x20] sm:$0xf]
        %v313 = vld [vmem:[#allocation5 + $0x24] sm:$0xf]
        %v314 = vld [vmem:[#allocation5 + $0x28] sm:$0xf]
        %v315 = vld [vmem:[#allocation5 + $0x2c] sm:$0xf]
        %v316 = vld [vmem:[#allocation5 + $0x30] sm:$0xf]
        %v317 = vld [vmem:[#allocation5 + $0x34] sm:$0xf]
        %v318 = vld [vmem:[#allocation5 + $0x38] sm:$0xf]
        %v319 = vld [vmem:[#allocation5 + $0x3c] sm:$0xf]
        %v320 = vlaneseq
        %v321 = vshrl.u32 %v320, 7
        %v322 = vsub.s32 0, %v321
        %v323 = vrot.slane %v207, %v322
        %v340 = vunpack.c.l.b16 %v304
        %v341 = vunpack.c.l.b16 %v305
        %v342 = vunpack.c.l.b16 %v306
        %v343 = vunpack.c.l.b16 %v307
        %v344 = vunpack.c.l.b16 %v308
        %v345 = vunpack.c.l.b16 %v309
        %v346 = vunpack.c.l.b16 %v310
        %v347 = vunpack.c.l.b16 %v311
        %v348 = vunpack.c.l.b16 %v312
        %v349 = vunpack.c.l.b16 %v313
        %v350 = vunpack.c.l.b16 %v314
        %v351 = vunpack.c.l.b16 %v315
        %v352 = vunpack.c.l.b16 %v316
        %v353 = vunpack.c.l.b16 %v317
        %v354 = vunpack.c.l.b16 %v318
        %v355 = vunpack.c.l.b16 %v319
        %v356 = vpack.c.b16 %v341, %v340
        %v357 = vpack.c.b16 %v343, %v342
        %v358 = vpack.c.b16 %v345, %v344
        %v359 = vpack.c.b16 %v347, %v346
        %v360 = vpack.c.b16 %v349, %v348
        %v361 = vpack.c.b16 %v351, %v350
        %v362 = vpack.c.b16 %v353, %v352
        %v363 = vpack.c.b16 %v355, %v354
        %372 = vmatprep.subr.bf16.mxu0 0
        %373 = vmatpush1.bf16.msra.mxu0 %v356
        %374 = vmatprep.subr.bf16.mxu0 0
        %375 = vmatpush1.bf16.msra.mxu0 %v357
        %376 = vmatprep.subr.bf16.mxu0 0
        %377 = vmatpush1.bf16.msra.mxu0 %v358
        %378 = vmatprep.subr.bf16.mxu0 0
        %379 = vmatpush1.bf16.msra.mxu0 %v359
        %380 = vmatprep.subr.bf16.mxu0 0
        %381 = vmatpush1.bf16.msra.mxu0 %v360
        %382 = vmatprep.subr.bf16.mxu0 0
        %383 = vmatpush1.bf16.msra.mxu0 %v361
        %384 = vmatprep.subr.bf16.mxu0 0
        %385 = vmatpush1.bf16.msra.mxu0 %v362
        %386 = vmatprep.subr.bf16.mxu0 0
        %387 = vmatpush1.bf16.msra.mxu0 %v363
        %388 = vmatprep.subr.bf16.mxu0 0
        %389 = vmatpush1.bf16.msra.mxu0 0
        %390 = vmatprep.subr.bf16.mxu0 0
        %391 = vmatpush1.bf16.msra.mxu0 0
        %392 = vmatprep.subr.bf16.mxu0 0
        %393 = vmatpush1.bf16.msra.mxu0 0
        %394 = vmatprep.subr.bf16.mxu0 0
        %395 = vmatpush1.bf16.msra.mxu0 0
        %396 = vmatprep.subr.bf16.mxu0 0
        %397 = vmatpush1.bf16.msra.mxu0 0
        %398 = vmatprep.subr.bf16.mxu0 0
        %399 = vmatpush1.bf16.msra.mxu0 0
        %400 = vmatprep.subr.bf16.mxu0 0
        %401 = vmatpush1.bf16.msra.mxu0 0
        %402 = vmatprep.subr.bf16.mxu0 0
        %403 = vmatpush1.bf16.msra.mxu0 0
        %404 = vmatprep.mubr.bf16.mxu0 0
        %405 = vmatmul.mubr.bf16.gmra.mrb[0].mxu0 %v272
        %v406 = vpop.f32.mrb[0].mxu0
        %v407 = vadd.f32 %v323, %v406
        %v408 = vpop.f32.mrb[0].mxu0
        %v409 = vpop.f32.mrb[0].mxu0
        %v410 = vadd.f32 %v323, %v409
        %v411 = vpop.f32.mrb[0].mxu0
        %412 = vmatprep.mubr.bf16.mxu0 0
        %413 = vmatmul.mubr.bf16.gmra.mrb[0].mxu0 %v273
        %v414 = vpop.f32.mrb[0].mxu0
        %v415 = vadd.f32 %v323, %v414
        %v416 = vpop.f32.mrb[0].mxu0
        %v417 = vpop.f32.mrb[0].mxu0
        %v418 = vadd.f32 %v323, %v417
        %v419 = vpop.f32.mrb[0].mxu0
        %420 = vmatprep.mubr.bf16.mxu0 0
        %421 = vmatmul.mubr.bf16.gmra.mrb[0].mxu0 %v274
        %v422 = vpop.f32.mrb[0].mxu0
        %v423 = vadd.f32 %v323, %v422
        %v424 = vpop.f32.mrb[0].mxu0
        %v425 = vpop.f32.mrb[0].mxu0
        %v426 = vadd.f32 %v323, %v425
        %v427 = vpop.f32.mrb[0].mxu0
        %428 = vmatprep.mubr.bf16.mxu0 0
        %429 = vmatmul.mubr.bf16.gmra.mrb[0].mxu0 %v275
        %v430 = vpop.f32.mrb[0].mxu0
        %v431 = vadd.f32 %v323, %v430
        %v432 = vpop.f32.mrb[0].mxu0
        %v433 = vpop.f32.mrb[0].mxu0
        %v434 = vadd.f32 %v323, %v433
        %v435 = vpop.f32.mrb[0].mxu0
        %436 = vmatprep.mubr.bf16.mxu0 0
        %437 = vmatmul.mubr.bf16.gmra.mrb[0].mxu0 %v276
        %v438 = vpop.f32.mrb[0].mxu0
        %v439 = vadd.f32 %v323, %v438
        %v440 = vpop.f32.mrb[0].mxu0
        %v441 = vpop.f32.mrb[0].mxu0
        %v442 = vadd.f32 %v323, %v441
        %v443 = vpop.f32.mrb[0].mxu0
        %444 = vmatprep.mubr.bf16.mxu0 0
        %445 = vmatmul.mubr.bf16.gmra.mrb[0].mxu0 %v277
        %v446 = vpop.f32.mrb[0].mxu0
        %v447 = vadd.f32 %v323, %v446
        %v448 = vpop.f32.mrb[0].mxu0
        %v449 = vpop.f32.mrb[0].mxu0
        %v450 = vadd.f32 %v323, %v449
        %v451 = vpop.f32.mrb[0].mxu0
        %452 = vmatprep.mubr.bf16.mxu0 0
        %453 = vmatmul.mubr.bf16.gmra.mrb[0].mxu0 %v278
        %v454 = vpop.f32.mrb[0].mxu0
        %v455 = vadd.f32 %v323, %v454
        %v456 = vpop.f32.mrb[0].mxu0
        %v457 = vpop.f32.mrb[0].mxu0
        %v458 = vadd.f32 %v323, %v457
        %v459 = vpop.f32.mrb[0].mxu0
        %460 = vmatprep.mubr.bf16.mxu0 0
        %461 = vmatmul.mubr.bf16.gmra.mrb[0].mxu0 %v279
        %v462 = vpop.f32.mrb[0].mxu0
        %v463 = vadd.f32 %v323, %v462
        %v464 = vpop.f32.mrb[0].mxu0
        %v465 = vpop.f32.mrb[0].mxu0
        %v466 = vadd.f32 %v323, %v465
        %v467 = vpop.f32.mrb[0].mxu0
        %468 = vmatprep.mubr.bf16.mxu0 0
        %469 = vmatmul.mubr.bf16.gmra.mrb[0].mxu0 %v280
        %v470 = vpop.f32.mrb[0].mxu0
        %v471 = vadd.f32 %v323, %v470
        %v472 = vpop.f32.mrb[0].mxu0
        %v473 = vpop.f32.mrb[0].mxu0
        %v474 = vadd.f32 %v323, %v473
        %v475 = vpop.f32.mrb[0].mxu0
        %476 = vmatprep.mubr.bf16.mxu0 0
        %477 = vmatmul.mubr.bf16.gmra.mrb[0].mxu0 %v281
        %v478 = vpop.f32.mrb[0].mxu0
        %v479 = vadd.f32 %v323, %v478
        %v480 = vpop.f32.mrb[0].mxu0
        %v481 = vpop.f32.mrb[0].mxu0
        %v482 = vadd.f32 %v323, %v481
        %v483 = vpop.f32.mrb[0].mxu0
        %484 = vmatprep.mubr.bf16.mxu0 0
        %485 = vmatmul.mubr.bf16.gmra.mrb[0].mxu0 %v282
        %v486 = vpop.f32.mrb[0].mxu0
        %v487 = vadd.f32 %v323, %v486
        %v488 = vpop.f32.mrb[0].mxu0
        %v489 = vpop.f32.mrb[0].mxu0
        %v490 = vadd.f32 %v323, %v489
        %v491 = vpop.f32.mrb[0].mxu0
        %492 = vmatprep.mubr.bf16.mxu0 0
        %493 = vmatmul.mubr.bf16.gmra.mrb[0].mxu0 %v283
        %v494 = vpop.f32.mrb[0].mxu0
        %v495 = vadd.f32 %v323, %v494
        %v496 = vpop.f32.mrb[0].mxu0
        %v497 = vpop.f32.mrb[0].mxu0
        %v498 = vadd.f32 %v323, %v497
        %v499 = vpop.f32.mrb[0].mxu0
        %500 = vmatprep.mubr.bf16.mxu0 0
        %501 = vmatmul.mubr.bf16.gmra.mrb[0].mxu0 %v284
        %v502 = vpop.f32.mrb[0].mxu0
        %v503 = vadd.f32 %v323, %v502
        %v504 = vpop.f32.mrb[0].mxu0
        %v505 = vpop.f32.mrb[0].mxu0
        %v506 = vadd.f32 %v323, %v505
        %v507 = vpop.f32.mrb[0].mxu0
        %508 = vmatprep.mubr.bf16.mxu0 0
        %509 = vmatmul.mubr.bf16.gmra.mrb[0].mxu0 %v285
        %v510 = vpop.f32.mrb[0].mxu0
        %v511 = vadd.f32 %v323, %v510
        %v512 = vpop.f32.mrb[0].mxu0
        %v513 = vpop.f32.mrb[0].mxu0
        %v514 = vadd.f32 %v323, %v513
        %v515 = vpop.f32.mrb[0].mxu0
        %516 = vmatprep.mubr.bf16.mxu0 0
        %517 = vmatmul.mubr.bf16.gmra.mrb[0].mxu0 %v286
        %v518 = vpop.f32.mrb[0].mxu0
        %v519 = vadd.f32 %v323, %v518
        %v520 = vpop.f32.mrb[0].mxu0
        %v521 = vpop.f32.mrb[0].mxu0
        %v522 = vadd.f32 %v323, %v521
        %v523 = vpop.f32.mrb[0].mxu0
        %524 = vmatprep.mubr.bf16.mxu0 0
        %525 = vmatmul.mubr.bf16.gmra.mrb[0].mxu0 %v287
        %v526 = vpop.f32.mrb[0].mxu0
        %v527 = vadd.f32 %v323, %v526
        %v528 = vpop.f32.mrb[0].mxu0
        %v529 = vpop.f32.mrb[0].mxu0
        %v530 = vadd.f32 %v323, %v529
        %v531 = vpop.f32.mrb[0].mxu0
        %532 = vmatprep.mubr.bf16.mxu0 0
        %533 = vmatmul.mubr.bf16.gmra.mrb[0].mxu0 %v288
        %v534 = vpop.f32.mrb[0].mxu0
        %v535 = vadd.f32 %v323, %v534
        %v536 = vpop.f32.mrb[0].mxu0
        %v537 = vpop.f32.mrb[0].mxu0
        %v538 = vadd.f32 %v323, %v537
        %v539 = vpop.f32.mrb[0].mxu0
        %540 = vmatprep.mubr.bf16.mxu0 0
        %541 = vmatmul.mubr.bf16.gmra.mrb[0].mxu0 %v289
        %v542 = vpop.f32.mrb[0].mxu0
        %v543 = vadd.f32 %v323, %v542
        %v544 = vpop.f32.mrb[0].mxu0
        %v545 = vpop.f32.mrb[0].mxu0
        %v546 = vadd.f32 %v323, %v545
        %v547 = vpop.f32.mrb[0].mxu0
        %548 = vmatprep.mubr.bf16.mxu0 0
        %549 = vmatmul.mubr.bf16.gmra.mrb[0].mxu0 %v290
        %v550 = vpop.f32.mrb[0].mxu0
        %v551 = vadd.f32 %v323, %v550
        %v552 = vpop.f32.mrb[0].mxu0
        %v553 = vpop.f32.mrb[0].mxu0
        %v554 = vadd.f32 %v323, %v553
        %v555 = vpop.f32.mrb[0].mxu0
        %556 = vmatprep.mubr.bf16.mxu0 0
        %557 = vmatmul.mubr.bf16.gmra.mrb[0].mxu0 %v291
        %v558 = vpop.f32.mrb[0].mxu0
        %v559 = vadd.f32 %v323, %v558
        %v560 = vpop.f32.mrb[0].mxu0
        %v561 = vpop.f32.mrb[0].mxu0
        %v562 = vadd.f32 %v323, %v561
        %v563 = vpop.f32.mrb[0].mxu0
        %564 = vmatprep.mubr.bf16.mxu0 0
        %565 = vmatmul.mubr.bf16.gmra.mrb[0].mxu0 %v292
        %v566 = vpop.f32.mrb[0].mxu0
        %v567 = vadd.f32 %v323, %v566
        %v568 = vpop.f32.mrb[0].mxu0
        %v569 = vpop.f32.mrb[0].mxu0
        %v570 = vadd.f32 %v323, %v569
        %v571 = vpop.f32.mrb[0].mxu0
        %572 = vmatprep.mubr.bf16.mxu0 0
        %573 = vmatmul.mubr.bf16.gmra.mrb[0].mxu0 %v293
        %v574 = vpop.f32.mrb[0].mxu0
        %v575 = vadd.f32 %v323, %v574
        %v576 = vpop.f32.mrb[0].mxu0
        %v577 = vpop.f32.mrb[0].mxu0
        %v578 = vadd.f32 %v323, %v577
        %v579 = vpop.f32.mrb[0].mxu0
        %580 = vmatprep.mubr.bf16.mxu0 0
        %581 = vmatmul.mubr.bf16.gmra.mrb[0].mxu0 %v294
        %v582 = vpop.f32.mrb[0].mxu0
        %v583 = vadd.f32 %v323, %v582
        %v584 = vpop.f32.mrb[0].mxu0
        %v585 = vpop.f32.mrb[0].mxu0
        %v586 = vadd.f32 %v323, %v585
        %v587 = vpop.f32.mrb[0].mxu0
        %588 = vmatprep.mubr.bf16.mxu0 0
        %589 = vmatmul.mubr.bf16.gmra.mrb[0].mxu0 %v295
        %v590 = vpop.f32.mrb[0].mxu0
        %v591 = vadd.f32 %v323, %v590
        %v592 = vpop.f32.mrb[0].mxu0
        %v593 = vpop.f32.mrb[0].mxu0
        %v594 = vadd.f32 %v323, %v593
        %v595 = vpop.f32.mrb[0].mxu0
        %596 = vmatprep.mubr.bf16.mxu0 0
        %597 = vmatmul.mubr.bf16.gmra.mrb[0].mxu0 %v296
        %v598 = vpop.f32.mrb[0].mxu0
        %v599 = vadd.f32 %v323, %v598
        %v600 = vpop.f32.mrb[0].mxu0
        %v601 = vpop.f32.mrb[0].mxu0
        %v602 = vadd.f32 %v323, %v601
        %v603 = vpop.f32.mrb[0].mxu0
        %604 = vmatprep.mubr.bf16.mxu0 0
        %605 = vmatmul.mubr.bf16.gmra.mrb[0].mxu0 %v297
        %v606 = vpop.f32.mrb[0].mxu0
        %v607 = vadd.f32 %v323, %v606
        %v608 = vpop.f32.mrb[0].mxu0
        %v609 = vpop.f32.mrb[0].mxu0
        %v610 = vadd.f32 %v323, %v609
        %v611 = vpop.f32.mrb[0].mxu0
        %612 = vmatprep.mubr.bf16.mxu0 0
        %613 = vmatmul.mubr.bf16.gmra.mrb[0].mxu0 %v298
        %v614 = vpop.f32.mrb[0].mxu0
        %v615 = vadd.f32 %v323, %v614
        %v616 = vpop.f32.mrb[0].mxu0
        %v617 = vpop.f32.mrb[0].mxu0
        %v618 = vadd.f32 %v323, %v617
        %v619 = vpop.f32.mrb[0].mxu0
        %620 = vmatprep.mubr.bf16.mxu0 0
        %621 = vmatmul.mubr.bf16.gmra.mrb[0].mxu0 %v299
        %v622 = vpop.f32.mrb[0].mxu0
        %v623 = vadd.f32 %v323, %v622
        %v624 = vpop.f32.mrb[0].mxu0
        %v625 = vpop.f32.mrb[0].mxu0
        %v626 = vadd.f32 %v323, %v625
        %v627 = vpop.f32.mrb[0].mxu0
        %628 = vmatprep.mubr.bf16.mxu0 0
        %629 = vmatmul.mubr.bf16.gmra.mrb[0].mxu0 %v300
        %v630 = vpop.f32.mrb[0].mxu0
        %v631 = vadd.f32 %v323, %v630
        %v632 = vpop.f32.mrb[0].mxu0
        %v633 = vpop.f32.mrb[0].mxu0
        %v634 = vadd.f32 %v323, %v633
        %v635 = vpop.f32.mrb[0].mxu0
        %636 = vmatprep.mubr.bf16.mxu0 0
        %637 = vmatmul.mubr.bf16.gmra.mrb[0].mxu0 %v301
        %v638 = vpop.f32.mrb[0].mxu0
        %v639 = vadd.f32 %v323, %v638
        %v640 = vpop.f32.mrb[0].mxu0
        %v641 = vpop.f32.mrb[0].mxu0
        %v642 = vadd.f32 %v323, %v641
        %v643 = vpop.f32.mrb[0].mxu0
        %644 = vmatprep.mubr.bf16.mxu0 0
        %645 = vmatmul.mubr.bf16.gmra.mrb[0].mxu0 %v302
        %v646 = vpop.f32.mrb[0].mxu0
        %v647 = vadd.f32 %v323, %v646
        %v648 = vpop.f32.mrb[0].mxu0
        %v649 = vpop.f32.mrb[0].mxu0
        %v650 = vadd.f32 %v323, %v649
        %v651 = vpop.f32.mrb[0].mxu0
        %652 = vmatprep.mubr.bf16.mxu0 0
        %653 = vmatmul.mubr.bf16.gmra.mrb[0].mxu0 %v303
        %v654 = vpop.f32.mrb[0].mxu0
        %v655 = vadd.f32 %v323, %v654
        %v656 = vpop.f32.mrb[0].mxu0
        %v657 = vpop.f32.mrb[0].mxu0
        %v658 = vadd.f32 %v323, %v657
        %v659 = vpop.f32.mrb[0].mxu0
        %660 = vdwg.mxu0
        %v661 = vmax.f32 %v407, 0.0
        %v662 = vmax.f32 %v410, 0.0
        %v663 = vmax.f32 %v415, 0.0
        %v664 = vmax.f32 %v418, 0.0
        %v665 = vmax.f32 %v423, 0.0
        %v666 = vmax.f32 %v426, 0.0
        %v667 = vmax.f32 %v431, 0.0
        %v668 = vmax.f32 %v434, 0.0
        %v669 = vmax.f32 %v439, 0.0
        %v670 = vmax.f32 %v442, 0.0
        %v671 = vmax.f32 %v447, 0.0
        %v672 = vmax.f32 %v450, 0.0
        %v673 = vmax.f32 %v455, 0.0
        %v674 = vmax.f32 %v458, 0.0
        %v675 = vmax.f32 %v463, 0.0
        %v676 = vmax.f32 %v466, 0.0
        %v677 = vmax.f32 %v471, 0.0
        %v678 = vmax.f32 %v474, 0.0
        %v679 = vmax.f32 %v479, 0.0
        %v680 = vmax.f32 %v482, 0.0
        %v681 = vmax.f32 %v487, 0.0
        %v682 = vmax.f32 %v490, 0.0
        %v683 = vmax.f32 %v495, 0.0
        %v684 = vmax.f32 %v498, 0.0
        %v685 = vmax.f32 %v503, 0.0
        %v686 = vmax.f32 %v506, 0.0
        %v687 = vmax.f32 %v511, 0.0
        %v688 = vmax.f32 %v514, 0.0
        %v689 = vmax.f32 %v519, 0.0
        %v690 = vmax.f32 %v522, 0.0
        %v691 = vmax.f32 %v527, 0.0
        %v692 = vmax.f32 %v530, 0.0
        %v693 = vmax.f32 %v535, 0.0
        %v694 = vmax.f32 %v538, 0.0
        %v695 = vmax.f32 %v543, 0.0
        %v696 = vmax.f32 %v546, 0.0
        %v697 = vmax.f32 %v551, 0.0
        %v698 = vmax.f32 %v554, 0.0
        %v699 = vmax.f32 %v559, 0.0
        %v700 = vmax.f32 %v562, 0.0
        %v701 = vmax.f32 %v567, 0.0
        %v702 = vmax.f32 %v570, 0.0
        %v703 = vmax.f32 %v575, 0.0
        %v704 = vmax.f32 %v578, 0.0
        %v705 = vmax.f32 %v583, 0.0
        %v706 = vmax.f32 %v586, 0.0
        %v707 = vmax.f32 %v591, 0.0
        %v708 = vmax.f32 %v594, 0.0
        %v709 = vmax.f32 %v599, 0.0
        %v710 = vmax.f32 %v602, 0.0
        %v711 = vmax.f32 %v607, 0.0
        %v712 = vmax.f32 %v610, 0.0
        %v713 = vmax.f32 %v615, 0.0
        %v714 = vmax.f32 %v618, 0.0
        %v715 = vmax.f32 %v623, 0.0
        %v716 = vmax.f32 %v626, 0.0
        %v717 = vmax.f32 %v631, 0.0
        %v718 = vmax.f32 %v634, 0.0
        %v719 = vmax.f32 %v639, 0.0
        %v720 = vmax.f32 %v642, 0.0
        %v721 = vmax.f32 %v647, 0.0
        %v722 = vmax.f32 %v650, 0.0
        %v723 = vmax.f32 %v655, 0.0
        %v724 = vmax.f32 %v658, 0.0
        %v725 = vpack.c.bf16 %v662, %v661
        %v726 = vpack.c.bf16 %v664, %v663
        %v727 = vpack.c.bf16 %v666, %v665
        %v728 = vpack.c.bf16 %v668, %v667
        %v729 = vpack.c.bf16 %v670, %v669
        %v730 = vpack.c.bf16 %v672, %v671
        %v731 = vpack.c.bf16 %v674, %v673
        %v732 = vpack.c.bf16 %v676, %v675
        %v733 = vpack.c.bf16 %v678, %v677
        %v734 = vpack.c.bf16 %v680, %v679
        %v735 = vpack.c.bf16 %v682, %v681
        %v736 = vpack.c.bf16 %v684, %v683
        %v737 = vpack.c.bf16 %v686, %v685
        %v738 = vpack.c.bf16 %v688, %v687
        %v739 = vpack.c.bf16 %v690, %v689
        %v740 = vpack.c.bf16 %v692, %v691
        %v741 = vpack.c.bf16 %v694, %v693
        %v742 = vpack.c.bf16 %v696, %v695
        %v743 = vpack.c.bf16 %v698, %v697
        %v744 = vpack.c.bf16 %v700, %v699
        %v745 = vpack.c.bf16 %v702, %v701
        %v746 = vpack.c.bf16 %v704, %v703
        %v747 = vpack.c.bf16 %v706, %v705
        %v748 = vpack.c.bf16 %v708, %v707
        %v749 = vpack.c.bf16 %v710, %v709
        %v750 = vpack.c.bf16 %v712, %v711
        %v751 = vpack.c.bf16 %v714, %v713
        %v752 = vpack.c.bf16 %v716, %v715
        %v753 = vpack.c.bf16 %v718, %v717
        %v754 = vpack.c.bf16 %v720, %v719
        %v755 = vpack.c.bf16 %v722, %v721
        %v756 = vpack.c.bf16 %v724, %v723
        %s757 = scalar_lea.vmem [#allocation5], 64
        %v758 = vld [vmem:[%s757] sm:$0xf]
        %v759 = vld [vmem:[%s757 + $0x4] sm:$0xf]
        %v760 = vld [vmem:[%s757 + $0x8] sm:$0xf]
        %v761 = vld [vmem:[%s757 + $0xc] sm:$0xf]
        %v762 = vld [vmem:[%s757 + $0x10] sm:$0xf]
        %v763 = vld [vmem:[%s757 + $0x14] sm:$0xf]
        %v764 = vld [vmem:[%s757 + $0x18] sm:$0xf]
        %v765 = vld [vmem:[%s757 + $0x1c] sm:$0xf]
        %v766 = vld [vmem:[%s757 + $0x20] sm:$0xf]
        %v767 = vld [vmem:[%s757 + $0x24] sm:$0xf]
        %v768 = vld [vmem:[%s757 + $0x28] sm:$0xf]
        %v769 = vld [vmem:[%s757 + $0x2c] sm:$0xf]
        %v770 = vld [vmem:[%s757 + $0x30] sm:$0xf]
        %v771 = vld [vmem:[%s757 + $0x34] sm:$0xf]
        %v772 = vld [vmem:[%s757 + $0x38] sm:$0xf]
        %v773 = vld [vmem:[%s757 + $0x3c] sm:$0xf]
        %v774 = vlaneseq
        %v775 = vshrl.u32 %v774, 7
        %v776 = vsub.s32 1, %v775
        %v777 = vrot.slane %v207, %v776
        %v794 = vunpack.c.l.b16 %v758
        %v795 = vunpack.c.l.b16 %v759
        %v796 = vunpack.c.l.b16 %v760
        %v797 = vunpack.c.l.b16 %v761
        %v798 = vunpack.c.l.b16 %v762
        %v799 = vunpack.c.l.b16 %v763
        %v800 = vunpack.c.l.b16 %v764
        %v801 = vunpack.c.l.b16 %v765
        %v802 = vunpack.c.l.b16 %v766
        %v803 = vunpack.c.l.b16 %v767
        %v804 = vunpack.c.l.b16 %v768
        %v805 = vunpack.c.l.b16 %v769
        %v806 = vunpack.c.l.b16 %v770
        %v807 = vunpack.c.l.b16 %v771
        %v808 = vunpack.c.l.b16 %v772
        %v809 = vunpack.c.l.b16 %v773
        %v810 = vpack.c.b16 %v795, %v794
        %v811 = vpack.c.b16 %v797, %v796
        %v812 = vpack.c.b16 %v799, %v798
        %v813 = vpack.c.b16 %v801, %v800
        %v814 = vpack.c.b16 %v803, %v802
        %v815 = vpack.c.b16 %v805, %v804
        %v816 = vpack.c.b16 %v807, %v806
        %v817 = vpack.c.b16 %v809, %v808
        %826 = vmatprep.subr.bf16.mxu0 0
        %827 = vmatpush1.bf16.msra.mxu0 %v810
        %828 = vmatprep.subr.bf16.mxu0 0
        %829 = vmatpush1.bf16.msra.mxu0 %v811
        %830 = vmatprep.subr.bf16.mxu0 0
        %831 = vmatpush1.bf16.msra.mxu0 %v812
        %832 = vmatprep.subr.bf16.mxu0 0
        %833 = vmatpush1.bf16.msra.mxu0 %v813
        %834 = vmatprep.subr.bf16.mxu0 0
        %835 = vmatpush1.bf16.msra.mxu0 %v814
        %836 = vmatprep.subr.bf16.mxu0 0
        %837 = vmatpush1.bf16.msra.mxu0 %v815
        %838 = vmatprep.subr.bf16.mxu0 0
        %839 = vmatpush1.bf16.msra.mxu0 %v816
        %840 = vmatprep.subr.bf16.mxu0 0
        %841 = vmatpush1.bf16.msra.mxu0 %v817
        %842 = vmatprep.subr.bf16.mxu0 0
        %843 = vmatpush1.bf16.msra.mxu0 0
        %844 = vmatprep.subr.bf16.mxu0 0
        %845 = vmatpush1.bf16.msra.mxu0 0
        %846 = vmatprep.subr.bf16.mxu0 0
        %847 = vmatpush1.bf16.msra.mxu0 0
        %848 = vmatprep.subr.bf16.mxu0 0
        %849 = vmatpush1.bf16.msra.mxu0 0
        %850 = vmatprep.subr.bf16.mxu0 0
        %851 = vmatpush1.bf16.msra.mxu0 0
        %852 = vmatprep.subr.bf16.mxu0 0
        %853 = vmatpush1.bf16.msra.mxu0 0
        %854 = vmatprep.subr.bf16.mxu0 0
        %855 = vmatpush1.bf16.msra.mxu0 0
        %856 = vmatprep.subr.bf16.mxu0 0
        %857 = vmatpush1.bf16.msra.mxu0 0
        %858 = vmatprep.mubr.bf16.mxu0 0
        %859 = vmatmul.mubr.bf16.gmra.mrb[0].mxu0 %v725
        %v860 = vpop.f32.mrb[0].mxu0
        %v861 = vadd.f32 %v777, %v860
        %v862 = vpop.f32.mrb[0].mxu0
        %v863 = vpop.f32.mrb[0].mxu0
        %v864 = vadd.f32 %v777, %v863
        %v865 = vpop.f32.mrb[0].mxu0
        %866 = vmatprep.mubr.bf16.mxu0 0
        %867 = vmatmul.mubr.bf16.gmra.mrb[0].mxu0 %v726
        %v868 = vpop.f32.mrb[0].mxu0
        %v869 = vadd.f32 %v777, %v868
        %v870 = vpop.f32.mrb[0].mxu0
        %v871 = vpop.f32.mrb[0].mxu0
        %v872 = vadd.f32 %v777, %v871
        %v873 = vpop.f32.mrb[0].mxu0
        %874 = vmatprep.mubr.bf16.mxu0 0
        %875 = vmatmul.mubr.bf16.gmra.mrb[0].mxu0 %v727
        %v876 = vpop.f32.mrb[0].mxu0
        %v877 = vadd.f32 %v777, %v876
        %v878 = vpop.f32.mrb[0].mxu0
        %v879 = vpop.f32.mrb[0].mxu0
        %v880 = vadd.f32 %v777, %v879
        %v881 = vpop.f32.mrb[0].mxu0
        %882 = vmatprep.mubr.bf16.mxu0 0
        %883 = vmatmul.mubr.bf16.gmra.mrb[0].mxu0 %v728
        %v884 = vpop.f32.mrb[0].mxu0
        %v885 = vadd.f32 %v777, %v884
        %v886 = vpop.f32.mrb[0].mxu0
        %v887 = vpop.f32.mrb[0].mxu0
        %v888 = vadd.f32 %v777, %v887
        %v889 = vpop.f32.mrb[0].mxu0
        %890 = vmatprep.mubr.bf16.mxu0 0
        %891 = vmatmul.mubr.bf16.gmra.mrb[0].mxu0 %v729
        %v892 = vpop.f32.mrb[0].mxu0
        %v893 = vadd.f32 %v777, %v892
        %v894 = vpop.f32.mrb[0].mxu0
        %v895 = vpop.f32.mrb[0].mxu0
        %v896 = vadd.f32 %v777, %v895
        %v897 = vpop.f32.mrb[0].mxu0
        %898 = vmatprep.mubr.bf16.mxu0 0
        %899 = vmatmul.mubr.bf16.gmra.mrb[0].mxu0 %v730
        %v900 = vpop.f32.mrb[0].mxu0
        %v901 = vadd.f32 %v777, %v900
        %v902 = vpop.f32.mrb[0].mxu0
        %v903 = vpop.f32.mrb[0].mxu0
        %v904 = vadd.f32 %v777, %v903
        %v905 = vpop.f32.mrb[0].mxu0
        %906 = vmatprep.mubr.bf16.mxu0 0
        %907 = vmatmul.mubr.bf16.gmra.mrb[0].mxu0 %v731
        %v908 = vpop.f32.mrb[0].mxu0
        %v909 = vadd.f32 %v777, %v908
        %v910 = vpop.f32.mrb[0].mxu0
        %v911 = vpop.f32.mrb[0].mxu0
        %v912 = vadd.f32 %v777, %v911
        %v913 = vpop.f32.mrb[0].mxu0
        %914 = vmatprep.mubr.bf16.mxu0 0
        %915 = vmatmul.mubr.bf16.gmra.mrb[0].mxu0 %v732
        %v916 = vpop.f32.mrb[0].mxu0
        %v917 = vadd.f32 %v777, %v916
        %v918 = vpop.f32.mrb[0].mxu0
        %v919 = vpop.f32.mrb[0].mxu0
        %v920 = vadd.f32 %v777, %v919
        %v921 = vpop.f32.mrb[0].mxu0
        %922 = vmatprep.mubr.bf16.mxu0 0
        %923 = vmatmul.mubr.bf16.gmra.mrb[0].mxu0 %v733
        %v924 = vpop.f32.mrb[0].mxu0
        %v925 = vadd.f32 %v777, %v924
        %v926 = vpop.f32.mrb[0].mxu0
        %v927 = vpop.f32.mrb[0].mxu0
        %v928 = vadd.f32 %v777, %v927
        %v929 = vpop.f32.mrb[0].mxu0
        %930 = vmatprep.mubr.bf16.mxu0 0
        %931 = vmatmul.mubr.bf16.gmra.mrb[0].mxu0 %v734
        %v932 = vpop.f32.mrb[0].mxu0
        %v933 = vadd.f32 %v777, %v932
        %v934 = vpop.f32.mrb[0].mxu0
        %v935 = vpop.f32.mrb[0].mxu0
        %v936 = vadd.f32 %v777, %v935
        %v937 = vpop.f32.mrb[0].mxu0
        %938 = vmatprep.mubr.bf16.mxu0 0
        %939 = vmatmul.mubr.bf16.gmra.mrb[0].mxu0 %v735
        %v940 = vpop.f32.mrb[0].mxu0
        %v941 = vadd.f32 %v777, %v940
        %v942 = vpop.f32.mrb[0].mxu0
        %v943 = vpop.f32.mrb[0].mxu0
        %v944 = vadd.f32 %v777, %v943
        %v945 = vpop.f32.mrb[0].mxu0
        %946 = vmatprep.mubr.bf16.mxu0 0
        %947 = vmatmul.mubr.bf16.gmra.mrb[0].mxu0 %v736
        %v948 = vpop.f32.mrb[0].mxu0
        %v949 = vadd.f32 %v777, %v948
        %v950 = vpop.f32.mrb[0].mxu0
        %v951 = vpop.f32.mrb[0].mxu0
        %v952 = vadd.f32 %v777, %v951
        %v953 = vpop.f32.mrb[0].mxu0
        %954 = vmatprep.mubr.bf16.mxu0 0
        %955 = vmatmul.mubr.bf16.gmra.mrb[0].mxu0 %v737
        %v956 = vpop.f32.mrb[0].mxu0
        %v957 = vadd.f32 %v777, %v956
        %v958 = vpop.f32.mrb[0].mxu0
        %v959 = vpop.f32.mrb[0].mxu0
        %v960 = vadd.f32 %v777, %v959
        %v961 = vpop.f32.mrb[0].mxu0
        %962 = vmatprep.mubr.bf16.mxu0 0
        %963 = vmatmul.mubr.bf16.gmra.mrb[0].mxu0 %v738
        %v964 = vpop.f32.mrb[0].mxu0
        %v965 = vadd.f32 %v777, %v964
        %v966 = vpop.f32.mrb[0].mxu0
        %v967 = vpop.f32.mrb[0].mxu0
        %v968 = vadd.f32 %v777, %v967
        %v969 = vpop.f32.mrb[0].mxu0
        %970 = vmatprep.mubr.bf16.mxu0 0
        %971 = vmatmul.mubr.bf16.gmra.mrb[0].mxu0 %v739
        %v972 = vpop.f32.mrb[0].mxu0
        %v973 = vadd.f32 %v777, %v972
        %v974 = vpop.f32.mrb[0].mxu0
        %v975 = vpop.f32.mrb[0].mxu0
        %v976 = vadd.f32 %v777, %v975
        %v977 = vpop.f32.mrb[0].mxu0
        %978 = vmatprep.mubr.bf16.mxu0 0
        %979 = vmatmul.mubr.bf16.gmra.mrb[0].mxu0 %v740
        %v980 = vpop.f32.mrb[0].mxu0
        %v981 = vadd.f32 %v777, %v980
        %v982 = vpop.f32.mrb[0].mxu0
        %v983 = vpop.f32.mrb[0].mxu0
        %v984 = vadd.f32 %v777, %v983
        %v985 = vpop.f32.mrb[0].mxu0
        %986 = vmatprep.mubr.bf16.mxu0 0
        %987 = vmatmul.mubr.bf16.gmra.mrb[0].mxu0 %v741
        %v988 = vpop.f32.mrb[0].mxu0
        %v989 = vadd.f32 %v777, %v988
        %v990 = vpop.f32.mrb[0].mxu0
        %v991 = vpop.f32.mrb[0].mxu0
        %v992 = vadd.f32 %v777, %v991
        %v993 = vpop.f32.mrb[0].mxu0
        %994 = vmatprep.mubr.bf16.mxu0 0
        %995 = vmatmul.mubr.bf16.gmra.mrb[0].mxu0 %v742
        %v996 = vpop.f32.mrb[0].mxu0
        %v997 = vadd.f32 %v777, %v996
        %v998 = vpop.f32.mrb[0].mxu0
        %v999 = vpop.f32.mrb[0].mxu0
        %v1000 = vadd.f32 %v777, %v999
        %v1001 = vpop.f32.mrb[0].mxu0
        %1002 = vmatprep.mubr.bf16.mxu0 0
        %1003 = vmatmul.mubr.bf16.gmra.mrb[0].mxu0 %v743
        %v1004 = vpop.f32.mrb[0].mxu0
        %v1005 = vadd.f32 %v777, %v1004
        %v1006 = vpop.f32.mrb[0].mxu0
        %v1007 = vpop.f32.mrb[0].mxu0
        %v1008 = vadd.f32 %v777, %v1007
        %v1009 = vpop.f32.mrb[0].mxu0
        %1010 = vmatprep.mubr.bf16.mxu0 0
        %1011 = vmatmul.mubr.bf16.gmra.mrb[0].mxu0 %v744
        %v1012 = vpop.f32.mrb[0].mxu0
        %v1013 = vadd.f32 %v777, %v1012
        %v1014 = vpop.f32.mrb[0].mxu0
        %v1015 = vpop.f32.mrb[0].mxu0
        %v1016 = vadd.f32 %v777, %v1015
        %v1017 = vpop.f32.mrb[0].mxu0
        %1018 = vmatprep.mubr.bf16.mxu0 0
        %1019 = vmatmul.mubr.bf16.gmra.mrb[0].mxu0 %v745
        %v1020 = vpop.f32.mrb[0].mxu0
        %v1021 = vadd.f32 %v777, %v1020
        %v1022 = vpop.f32.mrb[0].mxu0
        %v1023 = vpop.f32.mrb[0].mxu0
        %v1024 = vadd.f32 %v777, %v1023
        %v1025 = vpop.f32.mrb[0].mxu0
        %1026 = vmatprep.mubr.bf16.mxu0 0
        %1027 = vmatmul.mubr.bf16.gmra.mrb[0].mxu0 %v746
        %v1028 = vpop.f32.mrb[0].mxu0
        %v1029 = vadd.f32 %v777, %v1028
        %v1030 = vpop.f32.mrb[0].mxu0
        %v1031 = vpop.f32.mrb[0].mxu0
        %v1032 = vadd.f32 %v777, %v1031
        %v1033 = vpop.f32.mrb[0].mxu0
        %1034 = vmatprep.mubr.bf16.mxu0 0
        %1035 = vmatmul.mubr.bf16.gmra.mrb[0].mxu0 %v747
        %v1036 = vpop.f32.mrb[0].mxu0
        %v1037 = vadd.f32 %v777, %v1036
        %v1038 = vpop.f32.mrb[0].mxu0
        %v1039 = vpop.f32.mrb[0].mxu0
        %v1040 = vadd.f32 %v777, %v1039
        %v1041 = vpop.f32.mrb[0].mxu0
        %1042 = vmatprep.mubr.bf16.mxu0 0
        %1043 = vmatmul.mubr.bf16.gmra.mrb[0].mxu0 %v748
        %v1044 = vpop.f32.mrb[0].mxu0
        %v1045 = vadd.f32 %v777, %v1044
        %v1046 = vpop.f32.mrb[0].mxu0
        %v1047 = vpop.f32.mrb[0].mxu0
        %v1048 = vadd.f32 %v777, %v1047
        %v1049 = vpop.f32.mrb[0].mxu0
        %1050 = vmatprep.mubr.bf16.mxu0 0
        %1051 = vmatmul.mubr.bf16.gmra.mrb[0].mxu0 %v749
        %v1052 = vpop.f32.mrb[0].mxu0
        %v1053 = vadd.f32 %v777, %v1052
        %v1054 = vpop.f32.mrb[0].mxu0
        %v1055 = vpop.f32.mrb[0].mxu0
        %v1056 = vadd.f32 %v777, %v1055
        %v1057 = vpop.f32.mrb[0].mxu0
        %1058 = vmatprep.mubr.bf16.mxu0 0
        %1059 = vmatmul.mubr.bf16.gmra.mrb[0].mxu0 %v750
        %v1060 = vpop.f32.mrb[0].mxu0
        %v1061 = vadd.f32 %v777, %v1060
        %v1062 = vpop.f32.mrb[0].mxu0
        %v1063 = vpop.f32.mrb[0].mxu0
        %v1064 = vadd.f32 %v777, %v1063
        %v1065 = vpop.f32.mrb[0].mxu0
        %1066 = vmatprep.mubr.bf16.mxu0 0
        %1067 = vmatmul.mubr.bf16.gmra.mrb[0].mxu0 %v751
        %v1068 = vpop.f32.mrb[0].mxu0
        %v1069 = vadd.f32 %v777, %v1068
        %v1070 = vpop.f32.mrb[0].mxu0
        %v1071 = vpop.f32.mrb[0].mxu0
        %v1072 = vadd.f32 %v777, %v1071
        %v1073 = vpop.f32.mrb[0].mxu0
        %1074 = vmatprep.mubr.bf16.mxu0 0
        %1075 = vmatmul.mubr.bf16.gmra.mrb[0].mxu0 %v752
        %v1076 = vpop.f32.mrb[0].mxu0
        %v1077 = vadd.f32 %v777, %v1076
        %v1078 = vpop.f32.mrb[0].mxu0
        %v1079 = vpop.f32.mrb[0].mxu0
        %v1080 = vadd.f32 %v777, %v1079
        %v1081 = vpop.f32.mrb[0].mxu0
        %1082 = vmatprep.mubr.bf16.mxu0 0
        %1083 = vmatmul.mubr.bf16.gmra.mrb[0].mxu0 %v753
        %v1084 = vpop.f32.mrb[0].mxu0
        %v1085 = vadd.f32 %v777, %v1084
        %v1086 = vpop.f32.mrb[0].mxu0
        %v1087 = vpop.f32.mrb[0].mxu0
        %v1088 = vadd.f32 %v777, %v1087
        %v1089 = vpop.f32.mrb[0].mxu0
        %1090 = vmatprep.mubr.bf16.mxu0 0
        %1091 = vmatmul.mubr.bf16.gmra.mrb[0].mxu0 %v754
        %v1092 = vpop.f32.mrb[0].mxu0
        %v1093 = vadd.f32 %v777, %v1092
        %v1094 = vpop.f32.mrb[0].mxu0
        %v1095 = vpop.f32.mrb[0].mxu0
        %v1096 = vadd.f32 %v777, %v1095
        %v1097 = vpop.f32.mrb[0].mxu0
        %1098 = vmatprep.mubr.bf16.mxu0 0
        %1099 = vmatmul.mubr.bf16.gmra.mrb[0].mxu0 %v755
        %v1100 = vpop.f32.mrb[0].mxu0
        %v1101 = vadd.f32 %v777, %v1100
        %v1102 = vpop.f32.mrb[0].mxu0
        %v1103 = vpop.f32.mrb[0].mxu0
        %v1104 = vadd.f32 %v777, %v1103
        %v1105 = vpop.f32.mrb[0].mxu0
        %1106 = vmatprep.mubr.bf16.mxu0 0
        %1107 = vmatmul.mubr.bf16.gmra.mrb[0].mxu0 %v756
        %v1108 = vpop.f32.mrb[0].mxu0
        %v1109 = vadd.f32 %v777, %v1108
        %v1110 = vpop.f32.mrb[0].mxu0
        %v1111 = vpop.f32.mrb[0].mxu0
        %v1112 = vadd.f32 %v777, %v1111
        %v1113 = vpop.f32.mrb[0].mxu0
        %1114 = vdwg.mxu0
        %v1115 = vmax.f32 %v861, 0.0
        %v1116 = vmax.f32 %v864, 0.0
        %v1117 = vmax.f32 %v869, 0.0
        %v1118 = vmax.f32 %v872, 0.0
        %v1119 = vmax.f32 %v877, 0.0
        %v1120 = vmax.f32 %v880, 0.0
        %v1121 = vmax.f32 %v885, 0.0
        %v1122 = vmax.f32 %v888, 0.0
        %v1123 = vmax.f32 %v893, 0.0
        %v1124 = vmax.f32 %v896, 0.0
        %v1125 = vmax.f32 %v901, 0.0
        %v1126 = vmax.f32 %v904, 0.0
        %v1127 = vmax.f32 %v909, 0.0
        %v1128 = vmax.f32 %v912, 0.0
        %v1129 = vmax.f32 %v917, 0.0
        %v1130 = vmax.f32 %v920, 0.0
        %v1131 = vmax.f32 %v925, 0.0
        %v1132 = vmax.f32 %v928, 0.0
        %v1133 = vmax.f32 %v933, 0.0
        %v1134 = vmax.f32 %v936, 0.0
        %v1135 = vmax.f32 %v941, 0.0
        %v1136 = vmax.f32 %v944, 0.0
        %v1137 = vmax.f32 %v949, 0.0
        %v1138 = vmax.f32 %v952, 0.0
        %v1139 = vmax.f32 %v957, 0.0
        %v1140 = vmax.f32 %v960, 0.0
        %v1141 = vmax.f32 %v965, 0.0
        %v1142 = vmax.f32 %v968, 0.0
        %v1143 = vmax.f32 %v973, 0.0
        %v1144 = vmax.f32 %v976, 0.0
        %v1145 = vmax.f32 %v981, 0.0
        %v1146 = vmax.f32 %v984, 0.0
        %v1147 = vmax.f32 %v989, 0.0
        %v1148 = vmax.f32 %v992, 0.0
        %v1149 = vmax.f32 %v997, 0.0
        %v1150 = vmax.f32 %v1000, 0.0
        %v1151 = vmax.f32 %v1005, 0.0
        %v1152 = vmax.f32 %v1008, 0.0
        %v1153 = vmax.f32 %v1013, 0.0
        %v1154 = vmax.f32 %v1016, 0.0
        %v1155 = vmax.f32 %v1021, 0.0
        %v1156 = vmax.f32 %v1024, 0.0
        %v1157 = vmax.f32 %v1029, 0.0
        %v1158 = vmax.f32 %v1032, 0.0
        %v1159 = vmax.f32 %v1037, 0.0
        %v1160 = vmax.f32 %v1040, 0.0
        %v1161 = vmax.f32 %v1045, 0.0
        %v1162 = vmax.f32 %v1048, 0.0
        %v1163 = vmax.f32 %v1053, 0.0
        %v1164 = vmax.f32 %v1056, 0.0
        %v1165 = vmax.f32 %v1061, 0.0
        %v1166 = vmax.f32 %v1064, 0.0
        %v1167 = vmax.f32 %v1069, 0.0
        %v1168 = vmax.f32 %v1072, 0.0
        %v1169 = vmax.f32 %v1077, 0.0
        %v1170 = vmax.f32 %v1080, 0.0
        %v1171 = vmax.f32 %v1085, 0.0
        %v1172 = vmax.f32 %v1088, 0.0
        %v1173 = vmax.f32 %v1093, 0.0
        %v1174 = vmax.f32 %v1096, 0.0
        %v1175 = vmax.f32 %v1101, 0.0
        %v1176 = vmax.f32 %v1104, 0.0
        %v1177 = vmax.f32 %v1109, 0.0
        %v1178 = vmax.f32 %v1112, 0.0
        %v1179 = vpack.c.bf16 %v1116, %v1115
        %v1180 = vpack.c.bf16 %v1118, %v1117
        %v1181 = vpack.c.bf16 %v1120, %v1119
        %v1182 = vpack.c.bf16 %v1122, %v1121
        %v1183 = vpack.c.bf16 %v1124, %v1123
        %v1184 = vpack.c.bf16 %v1126, %v1125
        %v1185 = vpack.c.bf16 %v1128, %v1127
        %v1186 = vpack.c.bf16 %v1130, %v1129
        %v1187 = vpack.c.bf16 %v1132, %v1131
        %v1188 = vpack.c.bf16 %v1134, %v1133
        %v1189 = vpack.c.bf16 %v1136, %v1135
        %v1190 = vpack.c.bf16 %v1138, %v1137
        %v1191 = vpack.c.bf16 %v1140, %v1139
        %v1192 = vpack.c.bf16 %v1142, %v1141
        %v1193 = vpack.c.bf16 %v1144, %v1143
        %v1194 = vpack.c.bf16 %v1146, %v1145
        %v1195 = vpack.c.bf16 %v1148, %v1147
        %v1196 = vpack.c.bf16 %v1150, %v1149
        %v1197 = vpack.c.bf16 %v1152, %v1151
        %v1198 = vpack.c.bf16 %v1154, %v1153
        %v1199 = vpack.c.bf16 %v1156, %v1155
        %v1200 = vpack.c.bf16 %v1158, %v1157
        %v1201 = vpack.c.bf16 %v1160, %v1159
        %v1202 = vpack.c.bf16 %v1162, %v1161
        %v1203 = vpack.c.bf16 %v1164, %v1163
        %v1204 = vpack.c.bf16 %v1166, %v1165
        %v1205 = vpack.c.bf16 %v1168, %v1167
        %v1206 = vpack.c.bf16 %v1170, %v1169
        %v1207 = vpack.c.bf16 %v1172, %v1171
        %v1208 = vpack.c.bf16 %v1174, %v1173
        %v1209 = vpack.c.bf16 %v1176, %v1175
        %v1210 = vpack.c.bf16 %v1178, %v1177
        %s1211 = scalar_lea.vmem [#allocation5], 128
        %v1212 = vld [vmem:[%s1211] sm:$0xf]
        %v1213 = vld [vmem:[%s1211 + $0x4] sm:$0xf]
        %v1214 = vld [vmem:[%s1211 + $0x8] sm:$0xf]
        %v1215 = vld [vmem:[%s1211 + $0xc] sm:$0xf]
        %v1216 = vld [vmem:[%s1211 + $0x10] sm:$0xf]
        %v1217 = vld [vmem:[%s1211 + $0x14] sm:$0xf]
        %v1218 = vld [vmem:[%s1211 + $0x18] sm:$0xf]
        %v1219 = vld [vmem:[%s1211 + $0x1c] sm:$0xf]
        %v1220 = vld [vmem:[%s1211 + $0x20] sm:$0xf]
        %v1221 = vld [vmem:[%s1211 + $0x24] sm:$0xf]
        %v1222 = vld [vmem:[%s1211 + $0x28] sm:$0xf]
        %v1223 = vld [vmem:[%s1211 + $0x2c] sm:$0xf]
        %v1224 = vld [vmem:[%s1211 + $0x30] sm:$0xf]
        %v1225 = vld [vmem:[%s1211 + $0x34] sm:$0xf]
        %v1226 = vld [vmem:[%s1211 + $0x38] sm:$0xf]
        %v1227 = vld [vmem:[%s1211 + $0x3c] sm:$0xf]
        %v1228 = vlaneseq
        %v1229 = vshrl.u32 %v1228, 7
        %v1230 = vsub.s32 2, %v1229
        %v1231 = vrot.slane %v207, %v1230
        %v1248 = vunpack.c.l.b16 %v1212
        %v1249 = vunpack.c.l.b16 %v1213
        %v1250 = vunpack.c.l.b16 %v1214
        %v1251 = vunpack.c.l.b16 %v1215
        %v1252 = vunpack.c.l.b16 %v1216
        %v1253 = vunpack.c.l.b16 %v1217
        %v1254 = vunpack.c.l.b16 %v1218
        %v1255 = vunpack.c.l.b16 %v1219
        %v1256 = vunpack.c.l.b16 %v1220
        %v1257 = vunpack.c.l.b16 %v1221
        %v1258 = vunpack.c.l.b16 %v1222
        %v1259 = vunpack.c.l.b16 %v1223
        %v1260 = vunpack.c.l.b16 %v1224
        %v1261 = vunpack.c.l.b16 %v1225
        %v1262 = vunpack.c.l.b16 %v1226
        %v1263 = vunpack.c.l.b16 %v1227
        %v1264 = vpack.c.b16 %v1249, %v1248
        %v1265 = vpack.c.b16 %v1251, %v1250
        %v1266 = vpack.c.b16 %v1253, %v1252
        %v1267 = vpack.c.b16 %v1255, %v1254
        %v1268 = vpack.c.b16 %v1257, %v1256
        %v1269 = vpack.c.b16 %v1259, %v1258
        %v1270 = vpack.c.b16 %v1261, %v1260
        %v1271 = vpack.c.b16 %v1263, %v1262
        %1280 = vmatprep.subr.bf16.mxu0 0
        %1281 = vmatpush1.bf16.msra.mxu0 %v1264
        %1282 = vmatprep.subr.bf16.mxu0 0
        %1283 = vmatpush1.bf16.msra.mxu0 %v1265
        %1284 = vmatprep.subr.bf16.mxu0 0
        %1285 = vmatpush1.bf16.msra.mxu0 %v1266
        %1286 = vmatprep.subr.bf16.mxu0 0
        %1287 = vmatpush1.bf16.msra.mxu0 %v1267
        %1288 = vmatprep.subr.bf16.mxu0 0
        %1289 = vmatpush1.bf16.msra.mxu0 %v1268
        %1290 = vmatprep.subr.bf16.mxu0 0
        %1291 = vmatpush1.bf16.msra.mxu0 %v1269
        %1292 = vmatprep.subr.bf16.mxu0 0
        %1293 = vmatpush1.bf16.msra.mxu0 %v1270
        %1294 = vmatprep.subr.bf16.mxu0 0
        %1295 = vmatpush1.bf16.msra.mxu0 %v1271
        %1296 = vmatprep.subr.bf16.mxu0 0
        %1297 = vmatpush1.bf16.msra.mxu0 0
        %1298 = vmatprep.subr.bf16.mxu0 0
        %1299 = vmatpush1.bf16.msra.mxu0 0
        %1300 = vmatprep.subr.bf16.mxu0 0
        %1301 = vmatpush1.bf16.msra.mxu0 0
        %1302 = vmatprep.subr.bf16.mxu0 0
        %1303 = vmatpush1.bf16.msra.mxu0 0
        %1304 = vmatprep.subr.bf16.mxu0 0
        %1305 = vmatpush1.bf16.msra.mxu0 0
        %1306 = vmatprep.subr.bf16.mxu0 0
        %1307 = vmatpush1.bf16.msra.mxu0 0
        %1308 = vmatprep.subr.bf16.mxu0 0
        %1309 = vmatpush1.bf16.msra.mxu0 0
        %1310 = vmatprep.subr.bf16.mxu0 0
        %1311 = vmatpush1.bf16.msra.mxu0 0
        %1312 = vmatprep.mubr.bf16.mxu0 0
        %1313 = vmatmul.mubr.bf16.gmra.mrb[0].mxu0 %v1179
        %v1314 = vpop.f32.mrb[0].mxu0
        %v1315 = vadd.f32 %v1231, %v1314
        %v1316 = vpop.f32.mrb[0].mxu0
        %v1317 = vpop.f32.mrb[0].mxu0
        %v1318 = vadd.f32 %v1231, %v1317
        %v1319 = vpop.f32.mrb[0].mxu0
        %1320 = vmatprep.mubr.bf16.mxu0 0
        %1321 = vmatmul.mubr.bf16.gmra.mrb[0].mxu0 %v1180
        %v1322 = vpop.f32.mrb[0].mxu0
        %v1323 = vadd.f32 %v1231, %v1322
        %v1324 = vpop.f32.mrb[0].mxu0
        %v1325 = vpop.f32.mrb[0].mxu0
        %v1326 = vadd.f32 %v1231, %v1325
        %v1327 = vpop.f32.mrb[0].mxu0
        %1328 = vmatprep.mubr.bf16.mxu0 0
        %1329 = vmatmul.mubr.bf16.gmra.mrb[0].mxu0 %v1181
        %v1330 = vpop.f32.mrb[0].mxu0
        %v1331 = vadd.f32 %v1231, %v1330
        %v1332 = vpop.f32.mrb[0].mxu0
        %v1333 = vpop.f32.mrb[0].mxu0
        %v1334 = vadd.f32 %v1231, %v1333
        %v1335 = vpop.f32.mrb[0].mxu0
        %1336 = vmatprep.mubr.bf16.mxu0 0
        %1337 = vmatmul.mubr.bf16.gmra.mrb[0].mxu0 %v1182
        %v1338 = vpop.f32.mrb[0].mxu0
        %v1339 = vadd.f32 %v1231, %v1338
        %v1340 = vpop.f32.mrb[0].mxu0
        %v1341 = vpop.f32.mrb[0].mxu0
        %v1342 = vadd.f32 %v1231, %v1341
        %v1343 = vpop.f32.mrb[0].mxu0
        %1344 = vmatprep.mubr.bf16.mxu0 0
        %1345 = vmatmul.mubr.bf16.gmra.mrb[0].mxu0 %v1183
        %v1346 = vpop.f32.mrb[0].mxu0
        %v1347 = vadd.f32 %v1231, %v1346
        %v1348 = vpop.f32.mrb[0].mxu0
        %v1349 = vpop.f32.mrb[0].mxu0
        %v1350 = vadd.f32 %v1231, %v1349
        %v1351 = vpop.f32.mrb[0].mxu0
        %1352 = vmatprep.mubr.bf16.mxu0 0
        %1353 = vmatmul.mubr.bf16.gmra.mrb[0].mxu0 %v1184
        %v1354 = vpop.f32.mrb[0].mxu0
        %v1355 = vadd.f32 %v1231, %v1354
        %v1356 = vpop.f32.mrb[0].mxu0
        %v1357 = vpop.f32.mrb[0].mxu0
        %v1358 = vadd.f32 %v1231, %v1357
        %v1359 = vpop.f32.mrb[0].mxu0
        %1360 = vmatprep.mubr.bf16.mxu0 0
        %1361 = vmatmul.mubr.bf16.gmra.mrb[0].mxu0 %v1185
        %v1362 = vpop.f32.mrb[0].mxu0
        %v1363 = vadd.f32 %v1231, %v1362
        %v1364 = vpop.f32.mrb[0].mxu0
        %v1365 = vpop.f32.mrb[0].mxu0
        %v1366 = vadd.f32 %v1231, %v1365
        %v1367 = vpop.f32.mrb[0].mxu0
        %1368 = vmatprep.mubr.bf16.mxu0 0
        %1369 = vmatmul.mubr.bf16.gmra.mrb[0].mxu0 %v1186
        %v1370 = vpop.f32.mrb[0].mxu0
        %v1371 = vadd.f32 %v1231, %v1370
        %v1372 = vpop.f32.mrb[0].mxu0
        %v1373 = vpop.f32.mrb[0].mxu0
        %v1374 = vadd.f32 %v1231, %v1373
        %v1375 = vpop.f32.mrb[0].mxu0
        %1376 = vmatprep.mubr.bf16.mxu0 0
        %1377 = vmatmul.mubr.bf16.gmra.mrb[0].mxu0 %v1187
        %v1378 = vpop.f32.mrb[0].mxu0
        %v1379 = vadd.f32 %v1231, %v1378
        %v1380 = vpop.f32.mrb[0].mxu0
        %v1381 = vpop.f32.mrb[0].mxu0
        %v1382 = vadd.f32 %v1231, %v1381
        %v1383 = vpop.f32.mrb[0].mxu0
        %1384 = vmatprep.mubr.bf16.mxu0 0
        %1385 = vmatmul.mubr.bf16.gmra.mrb[0].mxu0 %v1188
        %v1386 = vpop.f32.mrb[0].mxu0
        %v1387 = vadd.f32 %v1231, %v1386
        %v1388 = vpop.f32.mrb[0].mxu0
        %v1389 = vpop.f32.mrb[0].mxu0
        %v1390 = vadd.f32 %v1231, %v1389
        %v1391 = vpop.f32.mrb[0].mxu0
        %1392 = vmatprep.mubr.bf16.mxu0 0
        %1393 = vmatmul.mubr.bf16.gmra.mrb[0].mxu0 %v1189
        %v1394 = vpop.f32.mrb[0].mxu0
        %v1395 = vadd.f32 %v1231, %v1394
        %v1396 = vpop.f32.mrb[0].mxu0
        %v1397 = vpop.f32.mrb[0].mxu0
        %v1398 = vadd.f32 %v1231, %v1397
        %v1399 = vpop.f32.mrb[0].mxu0
        %1400 = vmatprep.mubr.bf16.mxu0 0
        %1401 = vmatmul.mubr.bf16.gmra.mrb[0].mxu0 %v1190
        %v1402 = vpop.f32.mrb[0].mxu0
        %v1403 = vadd.f32 %v1231, %v1402
        %v1404 = vpop.f32.mrb[0].mxu0
        %v1405 = vpop.f32.mrb[0].mxu0
        %v1406 = vadd.f32 %v1231, %v1405
        %v1407 = vpop.f32.mrb[0].mxu0
        %1408 = vmatprep.mubr.bf16.mxu0 0
        %1409 = vmatmul.mubr.bf16.gmra.mrb[0].mxu0 %v1191
        %v1410 = vpop.f32.mrb[0].mxu0
        %v1411 = vadd.f32 %v1231, %v1410
        %v1412 = vpop.f32.mrb[0].mxu0
        %v1413 = vpop.f32.mrb[0].mxu0
        %v1414 = vadd.f32 %v1231, %v1413
        %v1415 = vpop.f32.mrb[0].mxu0
        %1416 = vmatprep.mubr.bf16.mxu0 0
        %1417 = vmatmul.mubr.bf16.gmra.mrb[0].mxu0 %v1192
        %v1418 = vpop.f32.mrb[0].mxu0
        %v1419 = vadd.f32 %v1231, %v1418
        %v1420 = vpop.f32.mrb[0].mxu0
        %v1421 = vpop.f32.mrb[0].mxu0
        %v1422 = vadd.f32 %v1231, %v1421
        %v1423 = vpop.f32.mrb[0].mxu0
        %1424 = vmatprep.mubr.bf16.mxu0 0
        %1425 = vmatmul.mubr.bf16.gmra.mrb[0].mxu0 %v1193
        %v1426 = vpop.f32.mrb[0].mxu0
        %v1427 = vadd.f32 %v1231, %v1426
        %v1428 = vpop.f32.mrb[0].mxu0
        %v1429 = vpop.f32.mrb[0].mxu0
        %v1430 = vadd.f32 %v1231, %v1429
        %v1431 = vpop.f32.mrb[0].mxu0
        %1432 = vmatprep.mubr.bf16.mxu0 0
        %1433 = vmatmul.mubr.bf16.gmra.mrb[0].mxu0 %v1194
        %v1434 = vpop.f32.mrb[0].mxu0
        %v1435 = vadd.f32 %v1231, %v1434
        %v1436 = vpop.f32.mrb[0].mxu0
        %v1437 = vpop.f32.mrb[0].mxu0
        %v1438 = vadd.f32 %v1231, %v1437
        %v1439 = vpop.f32.mrb[0].mxu0
        %1440 = vmatprep.mubr.bf16.mxu0 0
        %1441 = vmatmul.mubr.bf16.gmra.mrb[0].mxu0 %v1195
        %v1442 = vpop.f32.mrb[0].mxu0
        %v1443 = vadd.f32 %v1231, %v1442
        %v1444 = vpop.f32.mrb[0].mxu0
        %v1445 = vpop.f32.mrb[0].mxu0
        %v1446 = vadd.f32 %v1231, %v1445
        %v1447 = vpop.f32.mrb[0].mxu0
        %1448 = vmatprep.mubr.bf16.mxu0 0
        %1449 = vmatmul.mubr.bf16.gmra.mrb[0].mxu0 %v1196
        %v1450 = vpop.f32.mrb[0].mxu0
        %v1451 = vadd.f32 %v1231, %v1450
        %v1452 = vpop.f32.mrb[0].mxu0
        %v1453 = vpop.f32.mrb[0].mxu0
        %v1454 = vadd.f32 %v1231, %v1453
        %v1455 = vpop.f32.mrb[0].mxu0
        %1456 = vmatprep.mubr.bf16.mxu0 0
        %1457 = vmatmul.mubr.bf16.gmra.mrb[0].mxu0 %v1197
        %v1458 = vpop.f32.mrb[0].mxu0
        %v1459 = vadd.f32 %v1231, %v1458
        %v1460 = vpop.f32.mrb[0].mxu0
        %v1461 = vpop.f32.mrb[0].mxu0
        %v1462 = vadd.f32 %v1231, %v1461
        %v1463 = vpop.f32.mrb[0].mxu0
        %1464 = vmatprep.mubr.bf16.mxu0 0
        %1465 = vmatmul.mubr.bf16.gmra.mrb[0].mxu0 %v1198
        %v1466 = vpop.f32.mrb[0].mxu0
        %v1467 = vadd.f32 %v1231, %v1466
        %v1468 = vpop.f32.mrb[0].mxu0
        %v1469 = vpop.f32.mrb[0].mxu0
        %v1470 = vadd.f32 %v1231, %v1469
        %v1471 = vpop.f32.mrb[0].mxu0
        %1472 = vmatprep.mubr.bf16.mxu0 0
        %1473 = vmatmul.mubr.bf16.gmra.mrb[0].mxu0 %v1199
        %v1474 = vpop.f32.mrb[0].mxu0
        %v1475 = vadd.f32 %v1231, %v1474
        %v1476 = vpop.f32.mrb[0].mxu0
        %v1477 = vpop.f32.mrb[0].mxu0
        %v1478 = vadd.f32 %v1231, %v1477
        %v1479 = vpop.f32.mrb[0].mxu0
        %1480 = vmatprep.mubr.bf16.mxu0 0
        %1481 = vmatmul.mubr.bf16.gmra.mrb[0].mxu0 %v1200
        %v1482 = vpop.f32.mrb[0].mxu0
        %v1483 = vadd.f32 %v1231, %v1482
        %v1484 = vpop.f32.mrb[0].mxu0
        %v1485 = vpop.f32.mrb[0].mxu0
        %v1486 = vadd.f32 %v1231, %v1485
        %v1487 = vpop.f32.mrb[0].mxu0
        %1488 = vmatprep.mubr.bf16.mxu0 0
        %1489 = vmatmul.mubr.bf16.gmra.mrb[0].mxu0 %v1201
        %v1490 = vpop.f32.mrb[0].mxu0
        %v1491 = vadd.f32 %v1231, %v1490
        %v1492 = vpop.f32.mrb[0].mxu0
        %v1493 = vpop.f32.mrb[0].mxu0
        %v1494 = vadd.f32 %v1231, %v1493
        %v1495 = vpop.f32.mrb[0].mxu0
        %1496 = vmatprep.mubr.bf16.mxu0 0
        %1497 = vmatmul.mubr.bf16.gmra.mrb[0].mxu0 %v1202
        %v1498 = vpop.f32.mrb[0].mxu0
        %v1499 = vadd.f32 %v1231, %v1498
        %v1500 = vpop.f32.mrb[0].mxu0
        %v1501 = vpop.f32.mrb[0].mxu0
        %v1502 = vadd.f32 %v1231, %v1501
        %v1503 = vpop.f32.mrb[0].mxu0
        %1504 = vmatprep.mubr.bf16.mxu0 0
        %1505 = vmatmul.mubr.bf16.gmra.mrb[0].mxu0 %v1203
        %v1506 = vpop.f32.mrb[0].mxu0
        %v1507 = vadd.f32 %v1231, %v1506
        %v1508 = vpop.f32.mrb[0].mxu0
        %v1509 = vpop.f32.mrb[0].mxu0
        %v1510 = vadd.f32 %v1231, %v1509
        %v1511 = vpop.f32.mrb[0].mxu0
        %1512 = vmatprep.mubr.bf16.mxu0 0
        %1513 = vmatmul.mubr.bf16.gmra.mrb[0].mxu0 %v1204
        %v1514 = vpop.f32.mrb[0].mxu0
        %v1515 = vadd.f32 %v1231, %v1514
        %v1516 = vpop.f32.mrb[0].mxu0
        %v1517 = vpop.f32.mrb[0].mxu0
        %v1518 = vadd.f32 %v1231, %v1517
        %v1519 = vpop.f32.mrb[0].mxu0
        %1520 = vmatprep.mubr.bf16.mxu0 0
        %1521 = vmatmul.mubr.bf16.gmra.mrb[0].mxu0 %v1205
        %v1522 = vpop.f32.mrb[0].mxu0
        %v1523 = vadd.f32 %v1231, %v1522
        %v1524 = vpop.f32.mrb[0].mxu0
        %v1525 = vpop.f32.mrb[0].mxu0
        %v1526 = vadd.f32 %v1231, %v1525
        %v1527 = vpop.f32.mrb[0].mxu0
        %1528 = vmatprep.mubr.bf16.mxu0 0
        %1529 = vmatmul.mubr.bf16.gmra.mrb[0].mxu0 %v1206
        %v1530 = vpop.f32.mrb[0].mxu0
        %v1531 = vadd.f32 %v1231, %v1530
        %v1532 = vpop.f32.mrb[0].mxu0
        %v1533 = vpop.f32.mrb[0].mxu0
        %v1534 = vadd.f32 %v1231, %v1533
        %v1535 = vpop.f32.mrb[0].mxu0
        %1536 = vmatprep.mubr.bf16.mxu0 0
        %1537 = vmatmul.mubr.bf16.gmra.mrb[0].mxu0 %v1207
        %v1538 = vpop.f32.mrb[0].mxu0
        %v1539 = vadd.f32 %v1231, %v1538
        %v1540 = vpop.f32.mrb[0].mxu0
        %v1541 = vpop.f32.mrb[0].mxu0
        %v1542 = vadd.f32 %v1231, %v1541
        %v1543 = vpop.f32.mrb[0].mxu0
        %1544 = vmatprep.mubr.bf16.mxu0 0
        %1545 = vmatmul.mubr.bf16.gmra.mrb[0].mxu0 %v1208
        %v1546 = vpop.f32.mrb[0].mxu0
        %v1547 = vadd.f32 %v1231, %v1546
        %v1548 = vpop.f32.mrb[0].mxu0
        %v1549 = vpop.f32.mrb[0].mxu0
        %v1550 = vadd.f32 %v1231, %v1549
        %v1551 = vpop.f32.mrb[0].mxu0
        %1552 = vmatprep.mubr.bf16.mxu0 0
        %1553 = vmatmul.mubr.bf16.gmra.mrb[0].mxu0 %v1209
        %v1554 = vpop.f32.mrb[0].mxu0
        %v1555 = vadd.f32 %v1231, %v1554
        %v1556 = vpop.f32.mrb[0].mxu0
        %v1557 = vpop.f32.mrb[0].mxu0
        %v1558 = vadd.f32 %v1231, %v1557
        %v1559 = vpop.f32.mrb[0].mxu0
        %1560 = vmatprep.mubr.bf16.mxu0 0
        %1561 = vmatmul.mubr.bf16.gmra.mrb[0].mxu0 %v1210
        %v1562 = vpop.f32.mrb[0].mxu0
        %v1563 = vadd.f32 %v1231, %v1562
        %v1564 = vpop.f32.mrb[0].mxu0
        %v1565 = vpop.f32.mrb[0].mxu0
        %v1566 = vadd.f32 %v1231, %v1565
        %v1567 = vpop.f32.mrb[0].mxu0
        %1568 = vdwg.mxu0
        %v1569 = vmax.f32 %v1315, 0.0
        %v1570 = vmax.f32 %v1318, 0.0
        %v1571 = vmax.f32 %v1323, 0.0
        %v1572 = vmax.f32 %v1326, 0.0
        %v1573 = vmax.f32 %v1331, 0.0
        %v1574 = vmax.f32 %v1334, 0.0
        %v1575 = vmax.f32 %v1339, 0.0
        %v1576 = vmax.f32 %v1342, 0.0
        %v1577 = vmax.f32 %v1347, 0.0
        %v1578 = vmax.f32 %v1350, 0.0
        %v1579 = vmax.f32 %v1355, 0.0
        %v1580 = vmax.f32 %v1358, 0.0
        %v1581 = vmax.f32 %v1363, 0.0
        %v1582 = vmax.f32 %v1366, 0.0
        %v1583 = vmax.f32 %v1371, 0.0
        %v1584 = vmax.f32 %v1374, 0.0
        %v1585 = vmax.f32 %v1379, 0.0
        %v1586 = vmax.f32 %v1382, 0.0
        %v1587 = vmax.f32 %v1387, 0.0
        %v1588 = vmax.f32 %v1390, 0.0
        %v1589 = vmax.f32 %v1395, 0.0
        %v1590 = vmax.f32 %v1398, 0.0
        %v1591 = vmax.f32 %v1403, 0.0
        %v1592 = vmax.f32 %v1406, 0.0
        %v1593 = vmax.f32 %v1411, 0.0
        %v1594 = vmax.f32 %v1414, 0.0
        %v1595 = vmax.f32 %v1419, 0.0
        %v1596 = vmax.f32 %v1422, 0.0
        %v1597 = vmax.f32 %v1427, 0.0
        %v1598 = vmax.f32 %v1430, 0.0
        %v1599 = vmax.f32 %v1435, 0.0
        %v1600 = vmax.f32 %v1438, 0.0
        %v1601 = vmax.f32 %v1443, 0.0
        %v1602 = vmax.f32 %v1446, 0.0
        %v1603 = vmax.f32 %v1451, 0.0
        %v1604 = vmax.f32 %v1454, 0.0
        %v1605 = vmax.f32 %v1459, 0.0
        %v1606 = vmax.f32 %v1462, 0.0
        %v1607 = vmax.f32 %v1467, 0.0
        %v1608 = vmax.f32 %v1470, 0.0
        %v1609 = vmax.f32 %v1475, 0.0
        %v1610 = vmax.f32 %v1478, 0.0
        %v1611 = vmax.f32 %v1483, 0.0
        %v1612 = vmax.f32 %v1486, 0.0
        %v1613 = vmax.f32 %v1491, 0.0
        %v1614 = vmax.f32 %v1494, 0.0
        %v1615 = vmax.f32 %v1499, 0.0
        %v1616 = vmax.f32 %v1502, 0.0
        %v1617 = vmax.f32 %v1507, 0.0
        %v1618 = vmax.f32 %v1510, 0.0
        %v1619 = vmax.f32 %v1515, 0.0
        %v1620 = vmax.f32 %v1518, 0.0
        %v1621 = vmax.f32 %v1523, 0.0
        %v1622 = vmax.f32 %v1526, 0.0
        %v1623 = vmax.f32 %v1531, 0.0
        %v1624 = vmax.f32 %v1534, 0.0
        %v1625 = vmax.f32 %v1539, 0.0
        %v1626 = vmax.f32 %v1542, 0.0
        %v1627 = vmax.f32 %v1547, 0.0
        %v1628 = vmax.f32 %v1550, 0.0
        %v1629 = vmax.f32 %v1555, 0.0
        %v1630 = vmax.f32 %v1558, 0.0
        %v1631 = vmax.f32 %v1563, 0.0
        %v1632 = vmax.f32 %v1566, 0.0
        %v1633 = vpack.c.bf16 %v1570, %v1569
        %v1634 = vpack.c.bf16 %v1572, %v1571
        %v1635 = vpack.c.bf16 %v1574, %v1573
        %v1636 = vpack.c.bf16 %v1576, %v1575
        %v1637 = vpack.c.bf16 %v1578, %v1577
        %v1638 = vpack.c.bf16 %v1580, %v1579
        %v1639 = vpack.c.bf16 %v1582, %v1581
        %v1640 = vpack.c.bf16 %v1584, %v1583
        %v1641 = vpack.c.bf16 %v1586, %v1585
        %v1642 = vpack.c.bf16 %v1588, %v1587
        %v1643 = vpack.c.bf16 %v1590, %v1589
        %v1644 = vpack.c.bf16 %v1592, %v1591
        %v1645 = vpack.c.bf16 %v1594, %v1593
        %v1646 = vpack.c.bf16 %v1596, %v1595
        %v1647 = vpack.c.bf16 %v1598, %v1597
        %v1648 = vpack.c.bf16 %v1600, %v1599
        %v1649 = vpack.c.bf16 %v1602, %v1601
        %v1650 = vpack.c.bf16 %v1604, %v1603
        %v1651 = vpack.c.bf16 %v1606, %v1605
        %v1652 = vpack.c.bf16 %v1608, %v1607
        %v1653 = vpack.c.bf16 %v1610, %v1609
        %v1654 = vpack.c.bf16 %v1612, %v1611
        %v1655 = vpack.c.bf16 %v1614, %v1613
        %v1656 = vpack.c.bf16 %v1616, %v1615
        %v1657 = vpack.c.bf16 %v1618, %v1617
        %v1658 = vpack.c.bf16 %v1620, %v1619
        %v1659 = vpack.c.bf16 %v1622, %v1621
        %v1660 = vpack.c.bf16 %v1624, %v1623
        %v1661 = vpack.c.bf16 %v1626, %v1625
        %v1662 = vpack.c.bf16 %v1628, %v1627
        %v1663 = vpack.c.bf16 %v1630, %v1629
        %v1664 = vpack.c.bf16 %v1632, %v1631
        %s1665 = scalar_lea.vmem [#allocation5], 192
        %v1666 = vld [vmem:[%s1665] sm:$0xf]
        %v1667 = vld [vmem:[%s1665 + $0x4] sm:$0xf]
        %v1668 = vld [vmem:[%s1665 + $0x8] sm:$0xf]
        %v1669 = vld [vmem:[%s1665 + $0xc] sm:$0xf]
        %v1670 = vld [vmem:[%s1665 + $0x10] sm:$0xf]
        %v1671 = vld [vmem:[%s1665 + $0x14] sm:$0xf]
        %v1672 = vld [vmem:[%s1665 + $0x18] sm:$0xf]
        %v1673 = vld [vmem:[%s1665 + $0x1c] sm:$0xf]
        %v1674 = vld [vmem:[%s1665 + $0x20] sm:$0xf]
        %v1675 = vld [vmem:[%s1665 + $0x24] sm:$0xf]
        %v1676 = vld [vmem:[%s1665 + $0x28] sm:$0xf]
        %v1677 = vld [vmem:[%s1665 + $0x2c] sm:$0xf]
        %v1678 = vld [vmem:[%s1665 + $0x30] sm:$0xf]
        %v1679 = vld [vmem:[%s1665 + $0x34] sm:$0xf]
        %v1680 = vld [vmem:[%s1665 + $0x38] sm:$0xf]
        %v1681 = vld [vmem:[%s1665 + $0x3c] sm:$0xf]
        %v1682 = vlaneseq
        %v1683 = vshrl.u32 %v1682, 7
        %v1684 = vsub.s32 3, %v1683
        %v1685 = vrot.slane %v207, %v1684
        %v1702 = vunpack.c.l.b16 %v1666
        %v1703 = vunpack.c.l.b16 %v1667
        %v1704 = vunpack.c.l.b16 %v1668
        %v1705 = vunpack.c.l.b16 %v1669
        %v1706 = vunpack.c.l.b16 %v1670
        %v1707 = vunpack.c.l.b16 %v1671
        %v1708 = vunpack.c.l.b16 %v1672
        %v1709 = vunpack.c.l.b16 %v1673
        %v1710 = vunpack.c.l.b16 %v1674
        %v1711 = vunpack.c.l.b16 %v1675
        %v1712 = vunpack.c.l.b16 %v1676
        %v1713 = vunpack.c.l.b16 %v1677
        %v1714 = vunpack.c.l.b16 %v1678
        %v1715 = vunpack.c.l.b16 %v1679
        %v1716 = vunpack.c.l.b16 %v1680
        %v1717 = vunpack.c.l.b16 %v1681
        %v1718 = vpack.c.b16 %v1703, %v1702
        %v1719 = vpack.c.b16 %v1705, %v1704
        %v1720 = vpack.c.b16 %v1707, %v1706
        %v1721 = vpack.c.b16 %v1709, %v1708
        %v1722 = vpack.c.b16 %v1711, %v1710
        %v1723 = vpack.c.b16 %v1713, %v1712
        %v1724 = vpack.c.b16 %v1715, %v1714
        %v1725 = vpack.c.b16 %v1717, %v1716
        %1734 = vmatprep.subr.bf16.mxu0 0
        %1735 = vmatpush1.bf16.msra.mxu0 %v1718
        %1736 = vmatprep.subr.bf16.mxu0 0
        %1737 = vmatpush1.bf16.msra.mxu0 %v1719
        %1738 = vmatprep.subr.bf16.mxu0 0
        %1739 = vmatpush1.bf16.msra.mxu0 %v1720
        %1740 = vmatprep.subr.bf16.mxu0 0
        %1741 = vmatpush1.bf16.msra.mxu0 %v1721
        %1742 = vmatprep.subr.bf16.mxu0 0
        %1743 = vmatpush1.bf16.msra.mxu0 %v1722
        %1744 = vmatprep.subr.bf16.mxu0 0
        %1745 = vmatpush1.bf16.msra.mxu0 %v1723
        %1746 = vmatprep.subr.bf16.mxu0 0
        %1747 = vmatpush1.bf16.msra.mxu0 %v1724
        %1748 = vmatprep.subr.bf16.mxu0 0
        %1749 = vmatpush1.bf16.msra.mxu0 %v1725
        %1750 = vmatprep.subr.bf16.mxu0 0
        %1751 = vmatpush1.bf16.msra.mxu0 0
        %1752 = vmatprep.subr.bf16.mxu0 0
        %1753 = vmatpush1.bf16.msra.mxu0 0
        %1754 = vmatprep.subr.bf16.mxu0 0
        %1755 = vmatpush1.bf16.msra.mxu0 0
        %1756 = vmatprep.subr.bf16.mxu0 0
        %1757 = vmatpush1.bf16.msra.mxu0 0
        %1758 = vmatprep.subr.bf16.mxu0 0
        %1759 = vmatpush1.bf16.msra.mxu0 0
        %1760 = vmatprep.subr.bf16.mxu0 0
        %1761 = vmatpush1.bf16.msra.mxu0 0
        %1762 = vmatprep.subr.bf16.mxu0 0
        %1763 = vmatpush1.bf16.msra.mxu0 0
        %1764 = vmatprep.subr.bf16.mxu0 0
        %1765 = vmatpush1.bf16.msra.mxu0 0
        %1766 = vmatprep.mubr.bf16.mxu0 0
        %1767 = vmatmul.mubr.bf16.gmra.mrb[0].mxu0 %v1633
        %v1768 = vpop.f32.mrb[0].mxu0
        %v1769 = vadd.f32 %v1685, %v1768
        %v1770 = vpop.f32.mrb[0].mxu0
        %v1771 = vpop.f32.mrb[0].mxu0
        %v1772 = vadd.f32 %v1685, %v1771
        %v1773 = vpop.f32.mrb[0].mxu0
        %1774 = vmatprep.mubr.bf16.mxu0 0
        %1775 = vmatmul.mubr.bf16.gmra.mrb[0].mxu0 %v1634
        %v1776 = vpop.f32.mrb[0].mxu0
        %v1777 = vadd.f32 %v1685, %v1776
        %v1778 = vpop.f32.mrb[0].mxu0
        %v1779 = vpop.f32.mrb[0].mxu0
        %v1780 = vadd.f32 %v1685, %v1779
        %v1781 = vpop.f32.mrb[0].mxu0
        %1782 = vmatprep.mubr.bf16.mxu0 0
        %1783 = vmatmul.mubr.bf16.gmra.mrb[0].mxu0 %v1635
        %v1784 = vpop.f32.mrb[0].mxu0
        %v1785 = vadd.f32 %v1685, %v1784
        %v1786 = vpop.f32.mrb[0].mxu0
        %v1787 = vpop.f32.mrb[0].mxu0
        %v1788 = vadd.f32 %v1685, %v1787
        %v1789 = vpop.f32.mrb[0].mxu0
        %1790 = vmatprep.mubr.bf16.mxu0 0
        %1791 = vmatmul.mubr.bf16.gmra.mrb[0].mxu0 %v1636
        %v1792 = vpop.f32.mrb[0].mxu0
        %v1793 = vadd.f32 %v1685, %v1792
        %v1794 = vpop.f32.mrb[0].mxu0
        %v1795 = vpop.f32.mrb[0].mxu0
        %v1796 = vadd.f32 %v1685, %v1795
        %v1797 = vpop.f32.mrb[0].mxu0
        %1798 = vmatprep.mubr.bf16.mxu0 0
        %1799 = vmatmul.mubr.bf16.gmra.mrb[0].mxu0 %v1637
        %v1800 = vpop.f32.mrb[0].mxu0
        %v1801 = vadd.f32 %v1685, %v1800
        %v1802 = vpop.f32.mrb[0].mxu0
        %v1803 = vpop.f32.mrb[0].mxu0
        %v1804 = vadd.f32 %v1685, %v1803
        %v1805 = vpop.f32.mrb[0].mxu0
        %1806 = vmatprep.mubr.bf16.mxu0 0
        %1807 = vmatmul.mubr.bf16.gmra.mrb[0].mxu0 %v1638
        %v1808 = vpop.f32.mrb[0].mxu0
        %v1809 = vadd.f32 %v1685, %v1808
        %v1810 = vpop.f32.mrb[0].mxu0
        %v1811 = vpop.f32.mrb[0].mxu0
        %v1812 = vadd.f32 %v1685, %v1811
        %v1813 = vpop.f32.mrb[0].mxu0
        %1814 = vmatprep.mubr.bf16.mxu0 0
        %1815 = vmatmul.mubr.bf16.gmra.mrb[0].mxu0 %v1639
        %v1816 = vpop.f32.mrb[0].mxu0
        %v1817 = vadd.f32 %v1685, %v1816
        %v1818 = vpop.f32.mrb[0].mxu0
        %v1819 = vpop.f32.mrb[0].mxu0
        %v1820 = vadd.f32 %v1685, %v1819
        %v1821 = vpop.f32.mrb[0].mxu0
        %1822 = vmatprep.mubr.bf16.mxu0 0
        %1823 = vmatmul.mubr.bf16.gmra.mrb[0].mxu0 %v1640
        %v1824 = vpop.f32.mrb[0].mxu0
        %v1825 = vadd.f32 %v1685, %v1824
        %v1826 = vpop.f32.mrb[0].mxu0
        %v1827 = vpop.f32.mrb[0].mxu0
        %v1828 = vadd.f32 %v1685, %v1827
        %v1829 = vpop.f32.mrb[0].mxu0
        %1830 = vmatprep.mubr.bf16.mxu0 0
        %1831 = vmatmul.mubr.bf16.gmra.mrb[0].mxu0 %v1641
        %v1832 = vpop.f32.mrb[0].mxu0
        %v1833 = vadd.f32 %v1685, %v1832
        %v1834 = vpop.f32.mrb[0].mxu0
        %v1835 = vpop.f32.mrb[0].mxu0
        %v1836 = vadd.f32 %v1685, %v1835
        %v1837 = vpop.f32.mrb[0].mxu0
        %1838 = vmatprep.mubr.bf16.mxu0 0
        %1839 = vmatmul.mubr.bf16.gmra.mrb[0].mxu0 %v1642
        %v1840 = vpop.f32.mrb[0].mxu0
        %v1841 = vadd.f32 %v1685, %v1840
        %v1842 = vpop.f32.mrb[0].mxu0
        %v1843 = vpop.f32.mrb[0].mxu0
        %v1844 = vadd.f32 %v1685, %v1843
        %v1845 = vpop.f32.mrb[0].mxu0
        %1846 = vmatprep.mubr.bf16.mxu0 0
        %1847 = vmatmul.mubr.bf16.gmra.mrb[0].mxu0 %v1643
        %v1848 = vpop.f32.mrb[0].mxu0
        %v1849 = vadd.f32 %v1685, %v1848
        %v1850 = vpop.f32.mrb[0].mxu0
        %v1851 = vpop.f32.mrb[0].mxu0
        %v1852 = vadd.f32 %v1685, %v1851
        %v1853 = vpop.f32.mrb[0].mxu0
        %1854 = vmatprep.mubr.bf16.mxu0 0
        %1855 = vmatmul.mubr.bf16.gmra.mrb[0].mxu0 %v1644
        %v1856 = vpop.f32.mrb[0].mxu0
        %v1857 = vadd.f32 %v1685, %v1856
        %v1858 = vpop.f32.mrb[0].mxu0
        %v1859 = vpop.f32.mrb[0].mxu0
        %v1860 = vadd.f32 %v1685, %v1859
        %v1861 = vpop.f32.mrb[0].mxu0
        %1862 = vmatprep.mubr.bf16.mxu0 0
        %1863 = vmatmul.mubr.bf16.gmra.mrb[0].mxu0 %v1645
        %v1864 = vpop.f32.mrb[0].mxu0
        %v1865 = vadd.f32 %v1685, %v1864
        %v1866 = vpop.f32.mrb[0].mxu0
        %v1867 = vpop.f32.mrb[0].mxu0
        %v1868 = vadd.f32 %v1685, %v1867
        %v1869 = vpop.f32.mrb[0].mxu0
        %1870 = vmatprep.mubr.bf16.mxu0 0
        %1871 = vmatmul.mubr.bf16.gmra.mrb[0].mxu0 %v1646
        %v1872 = vpop.f32.mrb[0].mxu0
        %v1873 = vadd.f32 %v1685, %v1872
        %v1874 = vpop.f32.mrb[0].mxu0
        %v1875 = vpop.f32.mrb[0].mxu0
        %v1876 = vadd.f32 %v1685, %v1875
        %v1877 = vpop.f32.mrb[0].mxu0
        %1878 = vmatprep.mubr.bf16.mxu0 0
        %1879 = vmatmul.mubr.bf16.gmra.mrb[0].mxu0 %v1647
        %v1880 = vpop.f32.mrb[0].mxu0
        %v1881 = vadd.f32 %v1685, %v1880
        %v1882 = vpop.f32.mrb[0].mxu0
        %v1883 = vpop.f32.mrb[0].mxu0
        %v1884 = vadd.f32 %v1685, %v1883
        %v1885 = vpop.f32.mrb[0].mxu0
        %1886 = vmatprep.mubr.bf16.mxu0 0
        %1887 = vmatmul.mubr.bf16.gmra.mrb[0].mxu0 %v1648
        %v1888 = vpop.f32.mrb[0].mxu0
        %v1889 = vadd.f32 %v1685, %v1888
        %v1890 = vpop.f32.mrb[0].mxu0
        %v1891 = vpop.f32.mrb[0].mxu0
        %v1892 = vadd.f32 %v1685, %v1891
        %v1893 = vpop.f32.mrb[0].mxu0
        %1894 = vmatprep.mubr.bf16.mxu0 0
        %1895 = vmatmul.mubr.bf16.gmra.mrb[0].mxu0 %v1649
        %v1896 = vpop.f32.mrb[0].mxu0
        %v1897 = vadd.f32 %v1685, %v1896
        %v1898 = vpop.f32.mrb[0].mxu0
        %v1899 = vpop.f32.mrb[0].mxu0
        %v1900 = vadd.f32 %v1685, %v1899
        %v1901 = vpop.f32.mrb[0].mxu0
        %1902 = vmatprep.mubr.bf16.mxu0 0
        %1903 = vmatmul.mubr.bf16.gmra.mrb[0].mxu0 %v1650
        %v1904 = vpop.f32.mrb[0].mxu0
        %v1905 = vadd.f32 %v1685, %v1904
        %v1906 = vpop.f32.mrb[0].mxu0
        %v1907 = vpop.f32.mrb[0].mxu0
        %v1908 = vadd.f32 %v1685, %v1907
        %v1909 = vpop.f32.mrb[0].mxu0
        %1910 = vmatprep.mubr.bf16.mxu0 0
        %1911 = vmatmul.mubr.bf16.gmra.mrb[0].mxu0 %v1651
        %v1912 = vpop.f32.mrb[0].mxu0
        %v1913 = vadd.f32 %v1685, %v1912
        %v1914 = vpop.f32.mrb[0].mxu0
        %v1915 = vpop.f32.mrb[0].mxu0
        %v1916 = vadd.f32 %v1685, %v1915
        %v1917 = vpop.f32.mrb[0].mxu0
        %1918 = vmatprep.mubr.bf16.mxu0 0
        %1919 = vmatmul.mubr.bf16.gmra.mrb[0].mxu0 %v1652
        %v1920 = vpop.f32.mrb[0].mxu0
        %v1921 = vadd.f32 %v1685, %v1920
        %v1922 = vpop.f32.mrb[0].mxu0
        %v1923 = vpop.f32.mrb[0].mxu0
        %v1924 = vadd.f32 %v1685, %v1923
        %v1925 = vpop.f32.mrb[0].mxu0
        %1926 = vmatprep.mubr.bf16.mxu0 0
        %1927 = vmatmul.mubr.bf16.gmra.mrb[0].mxu0 %v1653
        %v1928 = vpop.f32.mrb[0].mxu0
        %v1929 = vadd.f32 %v1685, %v1928
        %v1930 = vpop.f32.mrb[0].mxu0
        %v1931 = vpop.f32.mrb[0].mxu0
        %v1932 = vadd.f32 %v1685, %v1931
        %v1933 = vpop.f32.mrb[0].mxu0
        %1934 = vmatprep.mubr.bf16.mxu0 0
        %1935 = vmatmul.mubr.bf16.gmra.mrb[0].mxu0 %v1654
        %v1936 = vpop.f32.mrb[0].mxu0
        %v1937 = vadd.f32 %v1685, %v1936
        %v1938 = vpop.f32.mrb[0].mxu0
        %v1939 = vpop.f32.mrb[0].mxu0
        %v1940 = vadd.f32 %v1685, %v1939
        %v1941 = vpop.f32.mrb[0].mxu0
        %1942 = vmatprep.mubr.bf16.mxu0 0
        %1943 = vmatmul.mubr.bf16.gmra.mrb[0].mxu0 %v1655
        %v1944 = vpop.f32.mrb[0].mxu0
        %v1945 = vadd.f32 %v1685, %v1944
        %v1946 = vpop.f32.mrb[0].mxu0
        %v1947 = vpop.f32.mrb[0].mxu0
        %v1948 = vadd.f32 %v1685, %v1947
        %v1949 = vpop.f32.mrb[0].mxu0
        %1950 = vmatprep.mubr.bf16.mxu0 0
        %1951 = vmatmul.mubr.bf16.gmra.mrb[0].mxu0 %v1656
        %v1952 = vpop.f32.mrb[0].mxu0
        %v1953 = vadd.f32 %v1685, %v1952
        %v1954 = vpop.f32.mrb[0].mxu0
        %v1955 = vpop.f32.mrb[0].mxu0
        %v1956 = vadd.f32 %v1685, %v1955
        %v1957 = vpop.f32.mrb[0].mxu0
        %1958 = vmatprep.mubr.bf16.mxu0 0
        %1959 = vmatmul.mubr.bf16.gmra.mrb[0].mxu0 %v1657
        %v1960 = vpop.f32.mrb[0].mxu0
        %v1961 = vadd.f32 %v1685, %v1960
        %v1962 = vpop.f32.mrb[0].mxu0
        %v1963 = vpop.f32.mrb[0].mxu0
        %v1964 = vadd.f32 %v1685, %v1963
        %v1965 = vpop.f32.mrb[0].mxu0
        %1966 = vmatprep.mubr.bf16.mxu0 0
        %1967 = vmatmul.mubr.bf16.gmra.mrb[0].mxu0 %v1658
        %v1968 = vpop.f32.mrb[0].mxu0
        %v1969 = vadd.f32 %v1685, %v1968
        %v1970 = vpop.f32.mrb[0].mxu0
        %v1971 = vpop.f32.mrb[0].mxu0
        %v1972 = vadd.f32 %v1685, %v1971
        %v1973 = vpop.f32.mrb[0].mxu0
        %1974 = vmatprep.mubr.bf16.mxu0 0
        %1975 = vmatmul.mubr.bf16.gmra.mrb[0].mxu0 %v1659
        %v1976 = vpop.f32.mrb[0].mxu0
        %v1977 = vadd.f32 %v1685, %v1976
        %v1978 = vpop.f32.mrb[0].mxu0
        %v1979 = vpop.f32.mrb[0].mxu0
        %v1980 = vadd.f32 %v1685, %v1979
        %v1981 = vpop.f32.mrb[0].mxu0
        %1982 = vmatprep.mubr.bf16.mxu0 0
        %1983 = vmatmul.mubr.bf16.gmra.mrb[0].mxu0 %v1660
        %v1984 = vpop.f32.mrb[0].mxu0
        %v1985 = vadd.f32 %v1685, %v1984
        %v1986 = vpop.f32.mrb[0].mxu0
        %v1987 = vpop.f32.mrb[0].mxu0
        %v1988 = vadd.f32 %v1685, %v1987
        %v1989 = vpop.f32.mrb[0].mxu0
        %1990 = vmatprep.mubr.bf16.mxu0 0
        %1991 = vmatmul.mubr.bf16.gmra.mrb[0].mxu0 %v1661
        %v1992 = vpop.f32.mrb[0].mxu0
        %v1993 = vadd.f32 %v1685, %v1992
        %v1994 = vpop.f32.mrb[0].mxu0
        %v1995 = vpop.f32.mrb[0].mxu0
        %v1996 = vadd.f32 %v1685, %v1995
        %v1997 = vpop.f32.mrb[0].mxu0
        %1998 = vmatprep.mubr.bf16.mxu0 0
        %1999 = vmatmul.mubr.bf16.gmra.mrb[0].mxu0 %v1662
        %v2000 = vpop.f32.mrb[0].mxu0
        %v2001 = vadd.f32 %v1685, %v2000
        %v2002 = vpop.f32.mrb[0].mxu0
        %v2003 = vpop.f32.mrb[0].mxu0
        %v2004 = vadd.f32 %v1685, %v2003
        %v2005 = vpop.f32.mrb[0].mxu0
        %2006 = vmatprep.mubr.bf16.mxu0 0
        %2007 = vmatmul.mubr.bf16.gmra.mrb[0].mxu0 %v1663
        %v2008 = vpop.f32.mrb[0].mxu0
        %v2009 = vadd.f32 %v1685, %v2008
        %v2010 = vpop.f32.mrb[0].mxu0
        %v2011 = vpop.f32.mrb[0].mxu0
        %v2012 = vadd.f32 %v1685, %v2011
        %v2013 = vpop.f32.mrb[0].mxu0
        %2014 = vmatprep.mubr.bf16.mxu0 0
        %2015 = vmatmul.mubr.bf16.gmra.mrb[0].mxu0 %v1664
        %v2016 = vpop.f32.mrb[0].mxu0
        %v2017 = vadd.f32 %v1685, %v2016
        %v2018 = vpop.f32.mrb[0].mxu0
        %v2019 = vpop.f32.mrb[0].mxu0
        %v2020 = vadd.f32 %v1685, %v2019
        %v2021 = vpop.f32.mrb[0].mxu0
        %2022 = vdwg.mxu0
        %v2023 = vrot.slane %v1769, 4
        %v2024 = vmax.f32 %v1769, %v2023
        %v2025 = vrot.slane %v2024, 2
        %v2026 = vmax.f32 %v2024, %v2025
        %v2027 = vrot.slane %v2026, 1
        %v2028 = vmax.f32 %v2026, %v2027
        %v2029 = vrot.slane %v1772, 4
        %v2030 = vmax.f32 %v1772, %v2029
        %v2031 = vrot.slane %v2030, 2
        %v2032 = vmax.f32 %v2030, %v2031
        %v2033 = vrot.slane %v2032, 1
        %v2034 = vmax.f32 %v2032, %v2033
        %v2035 = vrot.slane %v1777, 4
        %v2036 = vmax.f32 %v1777, %v2035
        %v2037 = vrot.slane %v2036, 2
        %v2038 = vmax.f32 %v2036, %v2037
        %v2039 = vrot.slane %v2038, 1
        %v2040 = vmax.f32 %v2038, %v2039
        %v2041 = vrot.slane %v1780, 4
        %v2042 = vmax.f32 %v1780, %v2041
        %v2043 = vrot.slane %v2042, 2
        %v2044 = vmax.f32 %v2042, %v2043
        %v2045 = vrot.slane %v2044, 1
        %v2046 = vmax.f32 %v2044, %v2045
        %v2047 = vrot.slane %v1785, 4
        %v2048 = vmax.f32 %v1785, %v2047
        %v2049 = vrot.slane %v2048, 2
        %v2050 = vmax.f32 %v2048, %v2049
        %v2051 = vrot.slane %v2050, 1
        %v2052 = vmax.f32 %v2050, %v2051
        %v2053 = vrot.slane %v1788, 4
        %v2054 = vmax.f32 %v1788, %v2053
        %v2055 = vrot.slane %v2054, 2
        %v2056 = vmax.f32 %v2054, %v2055
        %v2057 = vrot.slane %v2056, 1
        %v2058 = vmax.f32 %v2056, %v2057
        %v2059 = vrot.slane %v1793, 4
        %v2060 = vmax.f32 %v1793, %v2059
        %v2061 = vrot.slane %v2060, 2
        %v2062 = vmax.f32 %v2060, %v2061
        %v2063 = vrot.slane %v2062, 1
        %v2064 = vmax.f32 %v2062, %v2063
        %v2065 = vrot.slane %v1796, 4
        %v2066 = vmax.f32 %v1796, %v2065
        %v2067 = vrot.slane %v2066, 2
        %v2068 = vmax.f32 %v2066, %v2067
        %v2069 = vrot.slane %v2068, 1
        %v2070 = vmax.f32 %v2068, %v2069
        %v2071 = vrot.slane %v1801, 4
        %v2072 = vmax.f32 %v1801, %v2071
        %v2073 = vrot.slane %v2072, 2
        %v2074 = vmax.f32 %v2072, %v2073
        %v2075 = vrot.slane %v2074, 1
        %v2076 = vmax.f32 %v2074, %v2075
        %v2077 = vrot.slane %v1804, 4
        %v2078 = vmax.f32 %v1804, %v2077
        %v2079 = vrot.slane %v2078, 2
        %v2080 = vmax.f32 %v2078, %v2079
        %v2081 = vrot.slane %v2080, 1
        %v2082 = vmax.f32 %v2080, %v2081
        %v2083 = vrot.slane %v1809, 4
        %v2084 = vmax.f32 %v1809, %v2083
        %v2085 = vrot.slane %v2084, 2
        %v2086 = vmax.f32 %v2084, %v2085
        %v2087 = vrot.slane %v2086, 1
        %v2088 = vmax.f32 %v2086, %v2087
        %v2089 = vrot.slane %v1812, 4
        %v2090 = vmax.f32 %v1812, %v2089
        %v2091 = vrot.slane %v2090, 2
        %v2092 = vmax.f32 %v2090, %v2091
        %v2093 = vrot.slane %v2092, 1
        %v2094 = vmax.f32 %v2092, %v2093
        %v2095 = vrot.slane %v1817, 4
        %v2096 = vmax.f32 %v1817, %v2095
        %v2097 = vrot.slane %v2096, 2
        %v2098 = vmax.f32 %v2096, %v2097
        %v2099 = vrot.slane %v2098, 1
        %v2100 = vmax.f32 %v2098, %v2099
        %v2101 = vrot.slane %v1820, 4
        %v2102 = vmax.f32 %v1820, %v2101
        %v2103 = vrot.slane %v2102, 2
        %v2104 = vmax.f32 %v2102, %v2103
        %v2105 = vrot.slane %v2104, 1
        %v2106 = vmax.f32 %v2104, %v2105
        %v2107 = vrot.slane %v1825, 4
        %v2108 = vmax.f32 %v1825, %v2107
        %v2109 = vrot.slane %v2108, 2
        %v2110 = vmax.f32 %v2108, %v2109
        %v2111 = vrot.slane %v2110, 1
        %v2112 = vmax.f32 %v2110, %v2111
        %v2113 = vrot.slane %v1828, 4
        %v2114 = vmax.f32 %v1828, %v2113
        %v2115 = vrot.slane %v2114, 2
        %v2116 = vmax.f32 %v2114, %v2115
        %v2117 = vrot.slane %v2116, 1
        %v2118 = vmax.f32 %v2116, %v2117
        %v2119 = vrot.slane %v1833, 4
        %v2120 = vmax.f32 %v1833, %v2119
        %v2121 = vrot.slane %v2120, 2
        %v2122 = vmax.f32 %v2120, %v2121
        %v2123 = vrot.slane %v2122, 1
        %v2124 = vmax.f32 %v2122, %v2123
        %v2125 = vrot.slane %v1836, 4
        %v2126 = vmax.f32 %v1836, %v2125
        %v2127 = vrot.slane %v2126, 2
        %v2128 = vmax.f32 %v2126, %v2127
        %v2129 = vrot.slane %v2128, 1
        %v2130 = vmax.f32 %v2128, %v2129
        %v2131 = vrot.slane %v1841, 4
        %v2132 = vmax.f32 %v1841, %v2131
        %v2133 = vrot.slane %v2132, 2
        %v2134 = vmax.f32 %v2132, %v2133
        %v2135 = vrot.slane %v2134, 1
        %v2136 = vmax.f32 %v2134, %v2135
        %v2137 = vrot.slane %v1844, 4
        %v2138 = vmax.f32 %v1844, %v2137
        %v2139 = vrot.slane %v2138, 2
        %v2140 = vmax.f32 %v2138, %v2139
        %v2141 = vrot.slane %v2140, 1
        %v2142 = vmax.f32 %v2140, %v2141
        %v2143 = vrot.slane %v1849, 4
        %v2144 = vmax.f32 %v1849, %v2143
        %v2145 = vrot.slane %v2144, 2
        %v2146 = vmax.f32 %v2144, %v2145
        %v2147 = vrot.slane %v2146, 1
        %v2148 = vmax.f32 %v2146, %v2147
        %v2149 = vrot.slane %v1852, 4
        %v2150 = vmax.f32 %v1852, %v2149
        %v2151 = vrot.slane %v2150, 2
        %v2152 = vmax.f32 %v2150, %v2151
        %v2153 = vrot.slane %v2152, 1
        %v2154 = vmax.f32 %v2152, %v2153
        %v2155 = vrot.slane %v1857, 4
        %v2156 = vmax.f32 %v1857, %v2155
        %v2157 = vrot.slane %v2156, 2
        %v2158 = vmax.f32 %v2156, %v2157
        %v2159 = vrot.slane %v2158, 1
        %v2160 = vmax.f32 %v2158, %v2159
        %v2161 = vrot.slane %v1860, 4
        %v2162 = vmax.f32 %v1860, %v2161
        %v2163 = vrot.slane %v2162, 2
        %v2164 = vmax.f32 %v2162, %v2163
        %v2165 = vrot.slane %v2164, 1
        %v2166 = vmax.f32 %v2164, %v2165
        %v2167 = vrot.slane %v1865, 4
        %v2168 = vmax.f32 %v1865, %v2167
        %v2169 = vrot.slane %v2168, 2
        %v2170 = vmax.f32 %v2168, %v2169
        %v2171 = vrot.slane %v2170, 1
        %v2172 = vmax.f32 %v2170, %v2171
        %v2173 = vrot.slane %v1868, 4
        %v2174 = vmax.f32 %v1868, %v2173
        %v2175 = vrot.slane %v2174, 2
        %v2176 = vmax.f32 %v2174, %v2175
        %v2177 = vrot.slane %v2176, 1
        %v2178 = vmax.f32 %v2176, %v2177
        %v2179 = vrot.slane %v1873, 4
        %v2180 = vmax.f32 %v1873, %v2179
        %v2181 = vrot.slane %v2180, 2
        %v2182 = vmax.f32 %v2180, %v2181
        %v2183 = vrot.slane %v2182, 1
        %v2184 = vmax.f32 %v2182, %v2183
        %v2185 = vrot.slane %v1876, 4
        %v2186 = vmax.f32 %v1876, %v2185
        %v2187 = vrot.slane %v2186, 2
        %v2188 = vmax.f32 %v2186, %v2187
        %v2189 = vrot.slane %v2188, 1
        %v2190 = vmax.f32 %v2188, %v2189
        %v2191 = vrot.slane %v1881, 4
        %v2192 = vmax.f32 %v1881, %v2191
        %v2193 = vrot.slane %v2192, 2
        %v2194 = vmax.f32 %v2192, %v2193
        %v2195 = vrot.slane %v2194, 1
        %v2196 = vmax.f32 %v2194, %v2195
        %v2197 = vrot.slane %v1884, 4
        %v2198 = vmax.f32 %v1884, %v2197
        %v2199 = vrot.slane %v2198, 2
        %v2200 = vmax.f32 %v2198, %v2199
        %v2201 = vrot.slane %v2200, 1
        %v2202 = vmax.f32 %v2200, %v2201
        %v2203 = vrot.slane %v1889, 4
        %v2204 = vmax.f32 %v1889, %v2203
        %v2205 = vrot.slane %v2204, 2
        %v2206 = vmax.f32 %v2204, %v2205
        %v2207 = vrot.slane %v2206, 1
        %v2208 = vmax.f32 %v2206, %v2207
        %v2209 = vrot.slane %v1892, 4
        %v2210 = vmax.f32 %v1892, %v2209
        %v2211 = vrot.slane %v2210, 2
        %v2212 = vmax.f32 %v2210, %v2211
        %v2213 = vrot.slane %v2212, 1
        %v2214 = vmax.f32 %v2212, %v2213
        %v2215 = vrot.slane %v1897, 4
        %v2216 = vmax.f32 %v1897, %v2215
        %v2217 = vrot.slane %v2216, 2
        %v2218 = vmax.f32 %v2216, %v2217
        %v2219 = vrot.slane %v2218, 1
        %v2220 = vmax.f32 %v2218, %v2219
        %v2221 = vrot.slane %v1900, 4
        %v2222 = vmax.f32 %v1900, %v2221
        %v2223 = vrot.slane %v2222, 2
        %v2224 = vmax.f32 %v2222, %v2223
        %v2225 = vrot.slane %v2224, 1
        %v2226 = vmax.f32 %v2224, %v2225
        %v2227 = vrot.slane %v1905, 4
        %v2228 = vmax.f32 %v1905, %v2227
        %v2229 = vrot.slane %v2228, 2
        %v2230 = vmax.f32 %v2228, %v2229
        %v2231 = vrot.slane %v2230, 1
        %v2232 = vmax.f32 %v2230, %v2231
        %v2233 = vrot.slane %v1908, 4
        %v2234 = vmax.f32 %v1908, %v2233
        %v2235 = vrot.slane %v2234, 2
        %v2236 = vmax.f32 %v2234, %v2235
        %v2237 = vrot.slane %v2236, 1
        %v2238 = vmax.f32 %v2236, %v2237
        %v2239 = vrot.slane %v1913, 4
        %v2240 = vmax.f32 %v1913, %v2239
        %v2241 = vrot.slane %v2240, 2
        %v2242 = vmax.f32 %v2240, %v2241
        %v2243 = vrot.slane %v2242, 1
        %v2244 = vmax.f32 %v2242, %v2243
        %v2245 = vrot.slane %v1916, 4
        %v2246 = vmax.f32 %v1916, %v2245
        %v2247 = vrot.slane %v2246, 2
        %v2248 = vmax.f32 %v2246, %v2247
        %v2249 = vrot.slane %v2248, 1
        %v2250 = vmax.f32 %v2248, %v2249
        %v2251 = vrot.slane %v1921, 4
        %v2252 = vmax.f32 %v1921, %v2251
        %v2253 = vrot.slane %v2252, 2
        %v2254 = vmax.f32 %v2252, %v2253
        %v2255 = vrot.slane %v2254, 1
        %v2256 = vmax.f32 %v2254, %v2255
        %v2257 = vrot.slane %v1924, 4
        %v2258 = vmax.f32 %v1924, %v2257
        %v2259 = vrot.slane %v2258, 2
        %v2260 = vmax.f32 %v2258, %v2259
        %v2261 = vrot.slane %v2260, 1
        %v2262 = vmax.f32 %v2260, %v2261
        %v2263 = vrot.slane %v1929, 4
        %v2264 = vmax.f32 %v1929, %v2263
        %v2265 = vrot.slane %v2264, 2
        %v2266 = vmax.f32 %v2264, %v2265
        %v2267 = vrot.slane %v2266, 1
        %v2268 = vmax.f32 %v2266, %v2267
        %v2269 = vrot.slane %v1932, 4
        %v2270 = vmax.f32 %v1932, %v2269
        %v2271 = vrot.slane %v2270, 2
        %v2272 = vmax.f32 %v2270, %v2271
        %v2273 = vrot.slane %v2272, 1
        %v2274 = vmax.f32 %v2272, %v2273
        %v2275 = vrot.slane %v1937, 4
        %v2276 = vmax.f32 %v1937, %v2275
        %v2277 = vrot.slane %v2276, 2
        %v2278 = vmax.f32 %v2276, %v2277
        %v2279 = vrot.slane %v2278, 1
        %v2280 = vmax.f32 %v2278, %v2279
        %v2281 = vrot.slane %v1940, 4
        %v2282 = vmax.f32 %v1940, %v2281
        %v2283 = vrot.slane %v2282, 2
        %v2284 = vmax.f32 %v2282, %v2283
        %v2285 = vrot.slane %v2284, 1
        %v2286 = vmax.f32 %v2284, %v2285
        %v2287 = vrot.slane %v1945, 4
        %v2288 = vmax.f32 %v1945, %v2287
        %v2289 = vrot.slane %v2288, 2
        %v2290 = vmax.f32 %v2288, %v2289
        %v2291 = vrot.slane %v2290, 1
        %v2292 = vmax.f32 %v2290, %v2291
        %v2293 = vrot.slane %v1948, 4
        %v2294 = vmax.f32 %v1948, %v2293
        %v2295 = vrot.slane %v2294, 2
        %v2296 = vmax.f32 %v2294, %v2295
        %v2297 = vrot.slane %v2296, 1
        %v2298 = vmax.f32 %v2296, %v2297
        %v2299 = vrot.slane %v1953, 4
        %v2300 = vmax.f32 %v1953, %v2299
        %v2301 = vrot.slane %v2300, 2
        %v2302 = vmax.f32 %v2300, %v2301
        %v2303 = vrot.slane %v2302, 1
        %v2304 = vmax.f32 %v2302, %v2303
        %v2305 = vrot.slane %v1956, 4
        %v2306 = vmax.f32 %v1956, %v2305
        %v2307 = vrot.slane %v2306, 2
        %v2308 = vmax.f32 %v2306, %v2307
        %v2309 = vrot.slane %v2308, 1
        %v2310 = vmax.f32 %v2308, %v2309
        %v2311 = vrot.slane %v1961, 4
        %v2312 = vmax.f32 %v1961, %v2311
        %v2313 = vrot.slane %v2312, 2
        %v2314 = vmax.f32 %v2312, %v2313
        %v2315 = vrot.slane %v2314, 1
        %v2316 = vmax.f32 %v2314, %v2315
        %v2317 = vrot.slane %v1964, 4
        %v2318 = vmax.f32 %v1964, %v2317
        %v2319 = vrot.slane %v2318, 2
        %v2320 = vmax.f32 %v2318, %v2319
        %v2321 = vrot.slane %v2320, 1
        %v2322 = vmax.f32 %v2320, %v2321
        %v2323 = vrot.slane %v1969, 4
        %v2324 = vmax.f32 %v1969, %v2323
        %v2325 = vrot.slane %v2324, 2
        %v2326 = vmax.f32 %v2324, %v2325
        %v2327 = vrot.slane %v2326, 1
        %v2328 = vmax.f32 %v2326, %v2327
        %v2329 = vrot.slane %v1972, 4
        %v2330 = vmax.f32 %v1972, %v2329
        %v2331 = vrot.slane %v2330, 2
        %v2332 = vmax.f32 %v2330, %v2331
        %v2333 = vrot.slane %v2332, 1
        %v2334 = vmax.f32 %v2332, %v2333
        %v2335 = vrot.slane %v1977, 4
        %v2336 = vmax.f32 %v1977, %v2335
        %v2337 = vrot.slane %v2336, 2
        %v2338 = vmax.f32 %v2336, %v2337
        %v2339 = vrot.slane %v2338, 1
        %v2340 = vmax.f32 %v2338, %v2339
        %v2341 = vrot.slane %v1980, 4
        %v2342 = vmax.f32 %v1980, %v2341
        %v2343 = vrot.slane %v2342, 2
        %v2344 = vmax.f32 %v2342, %v2343
        %v2345 = vrot.slane %v2344, 1
        %v2346 = vmax.f32 %v2344, %v2345
        %v2347 = vrot.slane %v1985, 4
        %v2348 = vmax.f32 %v1985, %v2347
        %v2349 = vrot.slane %v2348, 2
        %v2350 = vmax.f32 %v2348, %v2349
        %v2351 = vrot.slane %v2350, 1
        %v2352 = vmax.f32 %v2350, %v2351
        %v2353 = vrot.slane %v1988, 4
        %v2354 = vmax.f32 %v1988, %v2353
        %v2355 = vrot.slane %v2354, 2
        %v2356 = vmax.f32 %v2354, %v2355
        %v2357 = vrot.slane %v2356, 1
        %v2358 = vmax.f32 %v2356, %v2357
        %v2359 = vrot.slane %v1993, 4
        %v2360 = vmax.f32 %v1993, %v2359
        %v2361 = vrot.slane %v2360, 2
        %v2362 = vmax.f32 %v2360, %v2361
        %v2363 = vrot.slane %v2362, 1
        %v2364 = vmax.f32 %v2362, %v2363
        %v2365 = vrot.slane %v1996, 4
        %v2366 = vmax.f32 %v1996, %v2365
        %v2367 = vrot.slane %v2366, 2
        %v2368 = vmax.f32 %v2366, %v2367
        %v2369 = vrot.slane %v2368, 1
        %v2370 = vmax.f32 %v2368, %v2369
        %v2371 = vrot.slane %v2001, 4
        %v2372 = vmax.f32 %v2001, %v2371
        %v2373 = vrot.slane %v2372, 2
        %v2374 = vmax.f32 %v2372, %v2373
        %v2375 = vrot.slane %v2374, 1
        %v2376 = vmax.f32 %v2374, %v2375
        %v2377 = vrot.slane %v2004, 4
        %v2378 = vmax.f32 %v2004, %v2377
        %v2379 = vrot.slane %v2378, 2
        %v2380 = vmax.f32 %v2378, %v2379
        %v2381 = vrot.slane %v2380, 1
        %v2382 = vmax.f32 %v2380, %v2381
        %v2383 = vrot.slane %v2009, 4
        %v2384 = vmax.f32 %v2009, %v2383
        %v2385 = vrot.slane %v2384, 2
        %v2386 = vmax.f32 %v2384, %v2385
        %v2387 = vrot.slane %v2386, 1
        %v2388 = vmax.f32 %v2386, %v2387
        %v2389 = vrot.slane %v2012, 4
        %v2390 = vmax.f32 %v2012, %v2389
        %v2391 = vrot.slane %v2390, 2
        %v2392 = vmax.f32 %v2390, %v2391
        %v2393 = vrot.slane %v2392, 1
        %v2394 = vmax.f32 %v2392, %v2393
        %v2395 = vrot.slane %v2017, 4
        %v2396 = vmax.f32 %v2017, %v2395
        %v2397 = vrot.slane %v2396, 2
        %v2398 = vmax.f32 %v2396, %v2397
        %v2399 = vrot.slane %v2398, 1
        %v2400 = vmax.f32 %v2398, %v2399
        %v2401 = vrot.slane %v2020, 4
        %v2402 = vmax.f32 %v2020, %v2401
        %v2403 = vrot.slane %v2402, 2
        %v2404 = vmax.f32 %v2402, %v2403
        %v2405 = vrot.slane %v2404, 1
        %v2406 = vmax.f32 %v2404, %v2405
        %v2407 = vsub.f32 %v1769, %v2028
        %v2408 = vsub.f32 %v1772, %v2034
        %v2409 = vsub.f32 %v1777, %v2040
        %v2410 = vsub.f32 %v1780, %v2046
        %v2411 = vsub.f32 %v1785, %v2052
        %v2412 = vsub.f32 %v1788, %v2058
        %v2413 = vsub.f32 %v1793, %v2064
        %v2414 = vsub.f32 %v1796, %v2070
        %v2415 = vsub.f32 %v1801, %v2076
        %v2416 = vsub.f32 %v1804, %v2082
        %v2417 = vsub.f32 %v1809, %v2088
        %v2418 = vsub.f32 %v1812, %v2094
        %v2419 = vsub.f32 %v1817, %v2100
        %v2420 = vsub.f32 %v1820, %v2106
        %v2421 = vsub.f32 %v1825, %v2112
        %v2422 = vsub.f32 %v1828, %v2118
        %v2423 = vsub.f32 %v1833, %v2124
        %v2424 = vsub.f32 %v1836, %v2130
        %v2425 = vsub.f32 %v1841, %v2136
        %v2426 = vsub.f32 %v1844, %v2142
        %v2427 = vsub.f32 %v1849, %v2148
        %v2428 = vsub.f32 %v1852, %v2154
        %v2429 = vsub.f32 %v1857, %v2160
        %v2430 = vsub.f32 %v1860, %v2166
        %v2431 = vsub.f32 %v1865, %v2172
        %v2432 = vsub.f32 %v1868, %v2178
        %v2433 = vsub.f32 %v1873, %v2184
        %v2434 = vsub.f32 %v1876, %v2190
        %v2435 = vsub.f32 %v1881, %v2196
        %v2436 = vsub.f32 %v1884, %v2202
        %v2437 = vsub.f32 %v1889, %v2208
        %v2438 = vsub.f32 %v1892, %v2214
        %v2439 = vsub.f32 %v1897, %v2220
        %v2440 = vsub.f32 %v1900, %v2226
        %v2441 = vsub.f32 %v1905, %v2232
        %v2442 = vsub.f32 %v1908, %v2238
        %v2443 = vsub.f32 %v1913, %v2244
        %v2444 = vsub.f32 %v1916, %v2250
        %v2445 = vsub.f32 %v1921, %v2256
        %v2446 = vsub.f32 %v1924, %v2262
        %v2447 = vsub.f32 %v1929, %v2268
        %v2448 = vsub.f32 %v1932, %v2274
        %v2449 = vsub.f32 %v1937, %v2280
        %v2450 = vsub.f32 %v1940, %v2286
        %v2451 = vsub.f32 %v1945, %v2292
        %v2452 = vsub.f32 %v1948, %v2298
        %v2453 = vsub.f32 %v1953, %v2304
        %v2454 = vsub.f32 %v1956, %v2310
        %v2455 = vsub.f32 %v1961, %v2316
        %v2456 = vsub.f32 %v1964, %v2322
        %v2457 = vsub.f32 %v1969, %v2328
        %v2458 = vsub.f32 %v1972, %v2334
        %v2459 = vsub.f32 %v1977, %v2340
        %v2460 = vsub.f32 %v1980, %v2346
        %v2461 = vsub.f32 %v1985, %v2352
        %v2462 = vsub.f32 %v1988, %v2358
        %v2463 = vsub.f32 %v1993, %v2364
        %v2464 = vsub.f32 %v1996, %v2370
        %v2465 = vsub.f32 %v2001, %v2376
        %v2466 = vsub.f32 %v2004, %v2382
        %v2467 = vsub.f32 %v2009, %v2388
        %v2468 = vsub.f32 %v2012, %v2394
        %v2469 = vsub.f32 %v2017, %v2400
        %v2470 = vsub.f32 %v2020, %v2406
        %v2471 = vmul.f32 %v2407, 1.442695
        %v2472 = vpow.pop %v2471
        %v2473 = vmul.f32 %v2408, 1.442695
        %v2474 = vpow.pop %v2473
        %v2475 = vmul.f32 %v2409, 1.442695
        %v2476 = vpow.pop %v2475
        %v2477 = vmul.f32 %v2410, 1.442695
        %v2478 = vpow.pop %v2477
        %v2479 = vmul.f32 %v2411, 1.442695
        %v2480 = vpow.pop %v2479
        %v2481 = vmul.f32 %v2412, 1.442695
        %v2482 = vpow.pop %v2481
        %v2483 = vmul.f32 %v2413, 1.442695
        %v2484 = vpow.pop %v2483
        %v2485 = vmul.f32 %v2414, 1.442695
        %v2486 = vpow.pop %v2485
        %v2487 = vmul.f32 %v2415, 1.442695
        %v2488 = vpow.pop %v2487
        %v2489 = vmul.f32 %v2416, 1.442695
        %v2490 = vpow.pop %v2489
        %v2491 = vmul.f32 %v2417, 1.442695
        %v2492 = vpow.pop %v2491
        %v2493 = vmul.f32 %v2418, 1.442695
        %v2494 = vpow.pop %v2493
        %v2495 = vmul.f32 %v2419, 1.442695
        %v2496 = vpow.pop %v2495
        %v2497 = vmul.f32 %v2420, 1.442695
        %v2498 = vpow.pop %v2497
        %v2499 = vmul.f32 %v2421, 1.442695
        %v2500 = vpow.pop %v2499
        %v2501 = vmul.f32 %v2422, 1.442695
        %v2502 = vpow.pop %v2501
        %v2503 = vmul.f32 %v2423, 1.442695
        %v2504 = vpow.pop %v2503
        %v2505 = vmul.f32 %v2424, 1.442695
        %v2506 = vpow.pop %v2505
        %v2507 = vmul.f32 %v2425, 1.442695
        %v2508 = vpow.pop %v2507
        %v2509 = vmul.f32 %v2426, 1.442695
        %v2510 = vpow.pop %v2509
        %v2511 = vmul.f32 %v2427, 1.442695
        %v2512 = vpow.pop %v2511
        %v2513 = vmul.f32 %v2428, 1.442695
        %v2514 = vpow.pop %v2513
        %v2515 = vmul.f32 %v2429, 1.442695
        %v2516 = vpow.pop %v2515
        %v2517 = vmul.f32 %v2430, 1.442695
        %v2518 = vpow.pop %v2517
        %v2519 = vmul.f32 %v2431, 1.442695
        %v2520 = vpow.pop %v2519
        %v2521 = vmul.f32 %v2432, 1.442695
        %v2522 = vpow.pop %v2521
        %v2523 = vmul.f32 %v2433, 1.442695
        %v2524 = vpow.pop %v2523
        %v2525 = vmul.f32 %v2434, 1.442695
        %v2526 = vpow.pop %v2525
        %v2527 = vmul.f32 %v2435, 1.442695
        %v2528 = vpow.pop %v2527
        %v2529 = vmul.f32 %v2436, 1.442695
        %v2530 = vpow.pop %v2529
        %v2531 = vmul.f32 %v2437, 1.442695
        %v2532 = vpow.pop %v2531
        %v2533 = vmul.f32 %v2438, 1.442695
        %v2534 = vpow.pop %v2533
        %v2535 = vmul.f32 %v2439, 1.442695
        %v2536 = vpow.pop %v2535
        %v2537 = vmul.f32 %v2440, 1.442695
        %v2538 = vpow.pop %v2537
        %v2539 = vmul.f32 %v2441, 1.442695
        %v2540 = vpow.pop %v2539
        %v2541 = vmul.f32 %v2442, 1.442695
        %v2542 = vpow.pop %v2541
        %v2543 = vmul.f32 %v2443, 1.442695
        %v2544 = vpow.pop %v2543
        %v2545 = vmul.f32 %v2444, 1.442695
        %v2546 = vpow.pop %v2545
        %v2547 = vmul.f32 %v2445, 1.442695
        %v2548 = vpow.pop %v2547
        %v2549 = vmul.f32 %v2446, 1.442695
        %v2550 = vpow.pop %v2549
        %v2551 = vmul.f32 %v2447, 1.442695
        %v2552 = vpow.pop %v2551
        %v2553 = vmul.f32 %v2448, 1.442695
        %v2554 = vpow.pop %v2553
        %v2555 = vmul.f32 %v2449, 1.442695
        %v2556 = vpow.pop %v2555
        %v2557 = vmul.f32 %v2450, 1.442695
        %v2558 = vpow.pop %v2557
        %v2559 = vmul.f32 %v2451, 1.442695
        %v2560 = vpow.pop %v2559
        %v2561 = vmul.f32 %v2452, 1.442695
        %v2562 = vpow.pop %v2561
        %v2563 = vmul.f32 %v2453, 1.442695
        %v2564 = vpow.pop %v2563
        %v2565 = vmul.f32 %v2454, 1.442695
        %v2566 = vpow.pop %v2565
        %v2567 = vmul.f32 %v2455, 1.442695
        %v2568 = vpow.pop %v2567
        %v2569 = vmul.f32 %v2456, 1.442695
        %v2570 = vpow.pop %v2569
        %v2571 = vmul.f32 %v2457, 1.442695
        %v2572 = vpow.pop %v2571
        %v2573 = vmul.f32 %v2458, 1.442695
        %v2574 = vpow.pop %v2573
        %v2575 = vmul.f32 %v2459, 1.442695
        %v2576 = vpow.pop %v2575
        %v2577 = vmul.f32 %v2460, 1.442695
        %v2578 = vpow.pop %v2577
        %v2579 = vmul.f32 %v2461, 1.442695
        %v2580 = vpow.pop %v2579
        %v2581 = vmul.f32 %v2462, 1.442695
        %v2582 = vpow.pop %v2581
        %v2583 = vmul.f32 %v2463, 1.442695
        %v2584 = vpow.pop %v2583
        %v2585 = vmul.f32 %v2464, 1.442695
        %v2586 = vpow.pop %v2585
        %v2587 = vmul.f32 %v2465, 1.442695
        %v2588 = vpow.pop %v2587
        %v2589 = vmul.f32 %v2466, 1.442695
        %v2590 = vpow.pop %v2589
        %v2591 = vmul.f32 %v2467, 1.442695
        %v2592 = vpow.pop %v2591
        %v2593 = vmul.f32 %v2468, 1.442695
        %v2594 = vpow.pop %v2593
        %v2595 = vmul.f32 %v2469, 1.442695
        %v2596 = vpow.pop %v2595
        %v2597 = vmul.f32 %v2470, 1.442695
        %v2598 = vpow.pop %v2597
        %v2599 = vrot.slane %v2472, 4
        %v2600 = vadd.f32 %v2472, %v2599
        %v2601 = vrot.slane %v2600, 2
        %v2602 = vadd.f32 %v2600, %v2601
        %v2603 = vrot.slane %v2602, 1
        %v2604 = vadd.f32 %v2602, %v2603
        %v2605 = vrot.slane %v2474, 4
        %v2606 = vadd.f32 %v2474, %v2605
        %v2607 = vrot.slane %v2606, 2
        %v2608 = vadd.f32 %v2606, %v2607
        %v2609 = vrot.slane %v2608, 1
        %v2610 = vadd.f32 %v2608, %v2609
        %v2611 = vrot.slane %v2476, 4
        %v2612 = vadd.f32 %v2476, %v2611
        %v2613 = vrot.slane %v2612, 2
        %v2614 = vadd.f32 %v2612, %v2613
        %v2615 = vrot.slane %v2614, 1
        %v2616 = vadd.f32 %v2614, %v2615
        %v2617 = vrot.slane %v2478, 4
        %v2618 = vadd.f32 %v2478, %v2617
        %v2619 = vrot.slane %v2618, 2
        %v2620 = vadd.f32 %v2618, %v2619
        %v2621 = vrot.slane %v2620, 1
        %v2622 = vadd.f32 %v2620, %v2621
        %v2623 = vrot.slane %v2480, 4
        %v2624 = vadd.f32 %v2480, %v2623
        %v2625 = vrot.slane %v2624, 2
        %v2626 = vadd.f32 %v2624, %v2625
        %v2627 = vrot.slane %v2626, 1
        %v2628 = vadd.f32 %v2626, %v2627
        %v2629 = vrot.slane %v2482, 4
        %v2630 = vadd.f32 %v2482, %v2629
        %v2631 = vrot.slane %v2630, 2
        %v2632 = vadd.f32 %v2630, %v2631
        %v2633 = vrot.slane %v2632, 1
        %v2634 = vadd.f32 %v2632, %v2633
        %v2635 = vrot.slane %v2484, 4
        %v2636 = vadd.f32 %v2484, %v2635
        %v2637 = vrot.slane %v2636, 2
        %v2638 = vadd.f32 %v2636, %v2637
        %v2639 = vrot.slane %v2638, 1
        %v2640 = vadd.f32 %v2638, %v2639
        %v2641 = vrot.slane %v2486, 4
        %v2642 = vadd.f32 %v2486, %v2641
        %v2643 = vrot.slane %v2642, 2
        %v2644 = vadd.f32 %v2642, %v2643
        %v2645 = vrot.slane %v2644, 1
        %v2646 = vadd.f32 %v2644, %v2645
        %v2647 = vrot.slane %v2488, 4
        %v2648 = vadd.f32 %v2488, %v2647
        %v2649 = vrot.slane %v2648, 2
        %v2650 = vadd.f32 %v2648, %v2649
        %v2651 = vrot.slane %v2650, 1
        %v2652 = vadd.f32 %v2650, %v2651
        %v2653 = vrot.slane %v2490, 4
        %v2654 = vadd.f32 %v2490, %v2653
        %v2655 = vrot.slane %v2654, 2
        %v2656 = vadd.f32 %v2654, %v2655
        %v2657 = vrot.slane %v2656, 1
        %v2658 = vadd.f32 %v2656, %v2657
        %v2659 = vrot.slane %v2492, 4
        %v2660 = vadd.f32 %v2492, %v2659
        %v2661 = vrot.slane %v2660, 2
        %v2662 = vadd.f32 %v2660, %v2661
        %v2663 = vrot.slane %v2662, 1
        %v2664 = vadd.f32 %v2662, %v2663
        %v2665 = vrot.slane %v2494, 4
        %v2666 = vadd.f32 %v2494, %v2665
        %v2667 = vrot.slane %v2666, 2
        %v2668 = vadd.f32 %v2666, %v2667
        %v2669 = vrot.slane %v2668, 1
        %v2670 = vadd.f32 %v2668, %v2669
        %v2671 = vrot.slane %v2496, 4
        %v2672 = vadd.f32 %v2496, %v2671
        %v2673 = vrot.slane %v2672, 2
        %v2674 = vadd.f32 %v2672, %v2673
        %v2675 = vrot.slane %v2674, 1
        %v2676 = vadd.f32 %v2674, %v2675
        %v2677 = vrot.slane %v2498, 4
        %v2678 = vadd.f32 %v2498, %v2677
        %v2679 = vrot.slane %v2678, 2
        %v2680 = vadd.f32 %v2678, %v2679
        %v2681 = vrot.slane %v2680, 1
        %v2682 = vadd.f32 %v2680, %v2681
        %v2683 = vrot.slane %v2500, 4
        %v2684 = vadd.f32 %v2500, %v2683
        %v2685 = vrot.slane %v2684, 2
        %v2686 = vadd.f32 %v2684, %v2685
        %v2687 = vrot.slane %v2686, 1
        %v2688 = vadd.f32 %v2686, %v2687
        %v2689 = vrot.slane %v2502, 4
        %v2690 = vadd.f32 %v2502, %v2689
        %v2691 = vrot.slane %v2690, 2
        %v2692 = vadd.f32 %v2690, %v2691
        %v2693 = vrot.slane %v2692, 1
        %v2694 = vadd.f32 %v2692, %v2693
        %v2695 = vrot.slane %v2504, 4
        %v2696 = vadd.f32 %v2504, %v2695
        %v2697 = vrot.slane %v2696, 2
        %v2698 = vadd.f32 %v2696, %v2697
        %v2699 = vrot.slane %v2698, 1
        %v2700 = vadd.f32 %v2698, %v2699
        %v2701 = vrot.slane %v2506, 4
        %v2702 = vadd.f32 %v2506, %v2701
        %v2703 = vrot.slane %v2702, 2
        %v2704 = vadd.f32 %v2702, %v2703
        %v2705 = vrot.slane %v2704, 1
        %v2706 = vadd.f32 %v2704, %v2705
        %v2707 = vrot.slane %v2508, 4
        %v2708 = vadd.f32 %v2508, %v2707
        %v2709 = vrot.slane %v2708, 2
        %v2710 = vadd.f32 %v2708, %v2709
        %v2711 = vrot.slane %v2710, 1
        %v2712 = vadd.f32 %v2710, %v2711
        %v2713 = vrot.slane %v2510, 4
        %v2714 = vadd.f32 %v2510, %v2713
        %v2715 = vrot.slane %v2714, 2
        %v2716 = vadd.f32 %v2714, %v2715
        %v2717 = vrot.slane %v2716, 1
        %v2718 = vadd.f32 %v2716, %v2717
        %v2719 = vrot.slane %v2512, 4
        %v2720 = vadd.f32 %v2512, %v2719
        %v2721 = vrot.slane %v2720, 2
        %v2722 = vadd.f32 %v2720, %v2721
        %v2723 = vrot.slane %v2722, 1
        %v2724 = vadd.f32 %v2722, %v2723
        %v2725 = vrot.slane %v2514, 4
        %v2726 = vadd.f32 %v2514, %v2725
        %v2727 = vrot.slane %v2726, 2
        %v2728 = vadd.f32 %v2726, %v2727
        %v2729 = vrot.slane %v2728, 1
        %v2730 = vadd.f32 %v2728, %v2729
        %v2731 = vrot.slane %v2516, 4
        %v2732 = vadd.f32 %v2516, %v2731
        %v2733 = vrot.slane %v2732, 2
        %v2734 = vadd.f32 %v2732, %v2733
        %v2735 = vrot.slane %v2734, 1
        %v2736 = vadd.f32 %v2734, %v2735
        %v2737 = vrot.slane %v2518, 4
        %v2738 = vadd.f32 %v2518, %v2737
        %v2739 = vrot.slane %v2738, 2
        %v2740 = vadd.f32 %v2738, %v2739
        %v2741 = vrot.slane %v2740, 1
        %v2742 = vadd.f32 %v2740, %v2741
        %v2743 = vrot.slane %v2520, 4
        %v2744 = vadd.f32 %v2520, %v2743
        %v2745 = vrot.slane %v2744, 2
        %v2746 = vadd.f32 %v2744, %v2745
        %v2747 = vrot.slane %v2746, 1
        %v2748 = vadd.f32 %v2746, %v2747
        %v2749 = vrot.slane %v2522, 4
        %v2750 = vadd.f32 %v2522, %v2749
        %v2751 = vrot.slane %v2750, 2
        %v2752 = vadd.f32 %v2750, %v2751
        %v2753 = vrot.slane %v2752, 1
        %v2754 = vadd.f32 %v2752, %v2753
        %v2755 = vrot.slane %v2524, 4
        %v2756 = vadd.f32 %v2524, %v2755
        %v2757 = vrot.slane %v2756, 2
        %v2758 = vadd.f32 %v2756, %v2757
        %v2759 = vrot.slane %v2758, 1
        %v2760 = vadd.f32 %v2758, %v2759
        %v2761 = vrot.slane %v2526, 4
        %v2762 = vadd.f32 %v2526, %v2761
        %v2763 = vrot.slane %v2762, 2
        %v2764 = vadd.f32 %v2762, %v2763
        %v2765 = vrot.slane %v2764, 1
        %v2766 = vadd.f32 %v2764, %v2765
        %v2767 = vrot.slane %v2528, 4
        %v2768 = vadd.f32 %v2528, %v2767
        %v2769 = vrot.slane %v2768, 2
        %v2770 = vadd.f32 %v2768, %v2769
        %v2771 = vrot.slane %v2770, 1
        %v2772 = vadd.f32 %v2770, %v2771
        %v2773 = vrot.slane %v2530, 4
        %v2774 = vadd.f32 %v2530, %v2773
        %v2775 = vrot.slane %v2774, 2
        %v2776 = vadd.f32 %v2774, %v2775
        %v2777 = vrot.slane %v2776, 1
        %v2778 = vadd.f32 %v2776, %v2777
        %v2779 = vrot.slane %v2532, 4
        %v2780 = vadd.f32 %v2532, %v2779
        %v2781 = vrot.slane %v2780, 2
        %v2782 = vadd.f32 %v2780, %v2781
        %v2783 = vrot.slane %v2782, 1
        %v2784 = vadd.f32 %v2782, %v2783
        %v2785 = vrot.slane %v2534, 4
        %v2786 = vadd.f32 %v2534, %v2785
        %v2787 = vrot.slane %v2786, 2
        %v2788 = vadd.f32 %v2786, %v2787
        %v2789 = vrot.slane %v2788, 1
        %v2790 = vadd.f32 %v2788, %v2789
        %v2791 = vrot.slane %v2536, 4
        %v2792 = vadd.f32 %v2536, %v2791
        %v2793 = vrot.slane %v2792, 2
        %v2794 = vadd.f32 %v2792, %v2793
        %v2795 = vrot.slane %v2794, 1
        %v2796 = vadd.f32 %v2794, %v2795
        %v2797 = vrot.slane %v2538, 4
        %v2798 = vadd.f32 %v2538, %v2797
        %v2799 = vrot.slane %v2798, 2
        %v2800 = vadd.f32 %v2798, %v2799
        %v2801 = vrot.slane %v2800, 1
        %v2802 = vadd.f32 %v2800, %v2801
        %v2803 = vrot.slane %v2540, 4
        %v2804 = vadd.f32 %v2540, %v2803
        %v2805 = vrot.slane %v2804, 2
        %v2806 = vadd.f32 %v2804, %v2805
        %v2807 = vrot.slane %v2806, 1
        %v2808 = vadd.f32 %v2806, %v2807
        %v2809 = vrot.slane %v2542, 4
        %v2810 = vadd.f32 %v2542, %v2809
        %v2811 = vrot.slane %v2810, 2
        %v2812 = vadd.f32 %v2810, %v2811
        %v2813 = vrot.slane %v2812, 1
        %v2814 = vadd.f32 %v2812, %v2813
        %v2815 = vrot.slane %v2544, 4
        %v2816 = vadd.f32 %v2544, %v2815
        %v2817 = vrot.slane %v2816, 2
        %v2818 = vadd.f32 %v2816, %v2817
        %v2819 = vrot.slane %v2818, 1
        %v2820 = vadd.f32 %v2818, %v2819
        %v2821 = vrot.slane %v2546, 4
        %v2822 = vadd.f32 %v2546, %v2821
        %v2823 = vrot.slane %v2822, 2
        %v2824 = vadd.f32 %v2822, %v2823
        %v2825 = vrot.slane %v2824, 1
        %v2826 = vadd.f32 %v2824, %v2825
        %v2827 = vrot.slane %v2548, 4
        %v2828 = vadd.f32 %v2548, %v2827
        %v2829 = vrot.slane %v2828, 2
        %v2830 = vadd.f32 %v2828, %v2829
        %v2831 = vrot.slane %v2830, 1
        %v2832 = vadd.f32 %v2830, %v2831
        %v2833 = vrot.slane %v2550, 4
        %v2834 = vadd.f32 %v2550, %v2833
        %v2835 = vrot.slane %v2834, 2
        %v2836 = vadd.f32 %v2834, %v2835
        %v2837 = vrot.slane %v2836, 1
        %v2838 = vadd.f32 %v2836, %v2837
        %v2839 = vrot.slane %v2552, 4
        %v2840 = vadd.f32 %v2552, %v2839
        %v2841 = vrot.slane %v2840, 2
        %v2842 = vadd.f32 %v2840, %v2841
        %v2843 = vrot.slane %v2842, 1
        %v2844 = vadd.f32 %v2842, %v2843
        %v2845 = vrot.slane %v2554, 4
        %v2846 = vadd.f32 %v2554, %v2845
        %v2847 = vrot.slane %v2846, 2
        %v2848 = vadd.f32 %v2846, %v2847
        %v2849 = vrot.slane %v2848, 1
        %v2850 = vadd.f32 %v2848, %v2849
        %v2851 = vrot.slane %v2556, 4
        %v2852 = vadd.f32 %v2556, %v2851
        %v2853 = vrot.slane %v2852, 2
        %v2854 = vadd.f32 %v2852, %v2853
        %v2855 = vrot.slane %v2854, 1
        %v2856 = vadd.f32 %v2854, %v2855
        %v2857 = vrot.slane %v2558, 4
        %v2858 = vadd.f32 %v2558, %v2857
        %v2859 = vrot.slane %v2858, 2
        %v2860 = vadd.f32 %v2858, %v2859
        %v2861 = vrot.slane %v2860, 1
        %v2862 = vadd.f32 %v2860, %v2861
        %v2863 = vrot.slane %v2560, 4
        %v2864 = vadd.f32 %v2560, %v2863
        %v2865 = vrot.slane %v2864, 2
        %v2866 = vadd.f32 %v2864, %v2865
        %v2867 = vrot.slane %v2866, 1
        %v2868 = vadd.f32 %v2866, %v2867
        %v2869 = vrot.slane %v2562, 4
        %v2870 = vadd.f32 %v2562, %v2869
        %v2871 = vrot.slane %v2870, 2
        %v2872 = vadd.f32 %v2870, %v2871
        %v2873 = vrot.slane %v2872, 1
        %v2874 = vadd.f32 %v2872, %v2873
        %v2875 = vrot.slane %v2564, 4
        %v2876 = vadd.f32 %v2564, %v2875
        %v2877 = vrot.slane %v2876, 2
        %v2878 = vadd.f32 %v2876, %v2877
        %v2879 = vrot.slane %v2878, 1
        %v2880 = vadd.f32 %v2878, %v2879
        %v2881 = vrot.slane %v2566, 4
        %v2882 = vadd.f32 %v2566, %v2881
        %v2883 = vrot.slane %v2882, 2
        %v2884 = vadd.f32 %v2882, %v2883
        %v2885 = vrot.slane %v2884, 1
        %v2886 = vadd.f32 %v2884, %v2885
        %v2887 = vrot.slane %v2568, 4
        %v2888 = vadd.f32 %v2568, %v2887
        %v2889 = vrot.slane %v2888, 2
        %v2890 = vadd.f32 %v2888, %v2889
        %v2891 = vrot.slane %v2890, 1
        %v2892 = vadd.f32 %v2890, %v2891
        %v2893 = vrot.slane %v2570, 4
        %v2894 = vadd.f32 %v2570, %v2893
        %v2895 = vrot.slane %v2894, 2
        %v2896 = vadd.f32 %v2894, %v2895
        %v2897 = vrot.slane %v2896, 1
        %v2898 = vadd.f32 %v2896, %v2897
        %v2899 = vrot.slane %v2572, 4
        %v2900 = vadd.f32 %v2572, %v2899
        %v2901 = vrot.slane %v2900, 2
        %v2902 = vadd.f32 %v2900, %v2901
        %v2903 = vrot.slane %v2902, 1
        %v2904 = vadd.f32 %v2902, %v2903
        %v2905 = vrot.slane %v2574, 4
        %v2906 = vadd.f32 %v2574, %v2905
        %v2907 = vrot.slane %v2906, 2
        %v2908 = vadd.f32 %v2906, %v2907
        %v2909 = vrot.slane %v2908, 1
        %v2910 = vadd.f32 %v2908, %v2909
        %v2911 = vrot.slane %v2576, 4
        %v2912 = vadd.f32 %v2576, %v2911
        %v2913 = vrot.slane %v2912, 2
        %v2914 = vadd.f32 %v2912, %v2913
        %v2915 = vrot.slane %v2914, 1
        %v2916 = vadd.f32 %v2914, %v2915
        %v2917 = vrot.slane %v2578, 4
        %v2918 = vadd.f32 %v2578, %v2917
        %v2919 = vrot.slane %v2918, 2
        %v2920 = vadd.f32 %v2918, %v2919
        %v2921 = vrot.slane %v2920, 1
        %v2922 = vadd.f32 %v2920, %v2921
        %v2923 = vrot.slane %v2580, 4
        %v2924 = vadd.f32 %v2580, %v2923
        %v2925 = vrot.slane %v2924, 2
        %v2926 = vadd.f32 %v2924, %v2925
        %v2927 = vrot.slane %v2926, 1
        %v2928 = vadd.f32 %v2926, %v2927
        %v2929 = vrot.slane %v2582, 4
        %v2930 = vadd.f32 %v2582, %v2929
        %v2931 = vrot.slane %v2930, 2
        %v2932 = vadd.f32 %v2930, %v2931
        %v2933 = vrot.slane %v2932, 1
        %v2934 = vadd.f32 %v2932, %v2933
        %v2935 = vrot.slane %v2584, 4
        %v2936 = vadd.f32 %v2584, %v2935
        %v2937 = vrot.slane %v2936, 2
        %v2938 = vadd.f32 %v2936, %v2937
        %v2939 = vrot.slane %v2938, 1
        %v2940 = vadd.f32 %v2938, %v2939
        %v2941 = vrot.slane %v2586, 4
        %v2942 = vadd.f32 %v2586, %v2941
        %v2943 = vrot.slane %v2942, 2
        %v2944 = vadd.f32 %v2942, %v2943
        %v2945 = vrot.slane %v2944, 1
        %v2946 = vadd.f32 %v2944, %v2945
        %v2947 = vrot.slane %v2588, 4
        %v2948 = vadd.f32 %v2588, %v2947
        %v2949 = vrot.slane %v2948, 2
        %v2950 = vadd.f32 %v2948, %v2949
        %v2951 = vrot.slane %v2950, 1
        %v2952 = vadd.f32 %v2950, %v2951
        %v2953 = vrot.slane %v2590, 4
        %v2954 = vadd.f32 %v2590, %v2953
        %v2955 = vrot.slane %v2954, 2
        %v2956 = vadd.f32 %v2954, %v2955
        %v2957 = vrot.slane %v2956, 1
        %v2958 = vadd.f32 %v2956, %v2957
        %v2959 = vrot.slane %v2592, 4
        %v2960 = vadd.f32 %v2592, %v2959
        %v2961 = vrot.slane %v2960, 2
        %v2962 = vadd.f32 %v2960, %v2961
        %v2963 = vrot.slane %v2962, 1
        %v2964 = vadd.f32 %v2962, %v2963
        %v2965 = vrot.slane %v2594, 4
        %v2966 = vadd.f32 %v2594, %v2965
        %v2967 = vrot.slane %v2966, 2
        %v2968 = vadd.f32 %v2966, %v2967
        %v2969 = vrot.slane %v2968, 1
        %v2970 = vadd.f32 %v2968, %v2969
        %v2971 = vrot.slane %v2596, 4
        %v2972 = vadd.f32 %v2596, %v2971
        %v2973 = vrot.slane %v2972, 2
        %v2974 = vadd.f32 %v2972, %v2973
        %v2975 = vrot.slane %v2974, 1
        %v2976 = vadd.f32 %v2974, %v2975
        %v2977 = vrot.slane %v2598, 4
        %v2978 = vadd.f32 %v2598, %v2977
        %v2979 = vrot.slane %v2978, 2
        %v2980 = vadd.f32 %v2978, %v2979
        %v2981 = vrot.slane %v2980, 1
        %v2982 = vadd.f32 %v2980, %v2981
        %v2983 = vrcp.pop %v2604
        %v2984 = vmul.f32 %v2472, %v2983
        %v2985 = vrcp.pop %v2610
        %v2986 = vmul.f32 %v2474, %v2985
        %v2987 = vrcp.pop %v2616
        %v2988 = vmul.f32 %v2476, %v2987
        %v2989 = vrcp.pop %v2622
        %v2990 = vmul.f32 %v2478, %v2989
        %v2991 = vrcp.pop %v2628
        %v2992 = vmul.f32 %v2480, %v2991
        %v2993 = vrcp.pop %v2634
        %v2994 = vmul.f32 %v2482, %v2993
        %v2995 = vrcp.pop %v2640
        %v2996 = vmul.f32 %v2484, %v2995
        %v2997 = vrcp.pop %v2646
        %v2998 = vmul.f32 %v2486, %v2997
        %v2999 = vrcp.pop %v2652
        %v3000 = vmul.f32 %v2488, %v2999
        %v3001 = vrcp.pop %v2658
        %v3002 = vmul.f32 %v2490, %v3001
        %v3003 = vrcp.pop %v2664
        %v3004 = vmul.f32 %v2492, %v3003
        %v3005 = vrcp.pop %v2670
        %v3006 = vmul.f32 %v2494, %v3005
        %v3007 = vrcp.pop %v2676
        %v3008 = vmul.f32 %v2496, %v3007
        %v3009 = vrcp.pop %v2682
        %v3010 = vmul.f32 %v2498, %v3009
        %v3011 = vrcp.pop %v2688
        %v3012 = vmul.f32 %v2500, %v3011
        %v3013 = vrcp.pop %v2694
        %v3014 = vmul.f32 %v2502, %v3013
        %v3015 = vrcp.pop %v2700
        %v3016 = vmul.f32 %v2504, %v3015
        %v3017 = vrcp.pop %v2706
        %v3018 = vmul.f32 %v2506, %v3017
        %v3019 = vrcp.pop %v2712
        %v3020 = vmul.f32 %v2508, %v3019
        %v3021 = vrcp.pop %v2718
        %v3022 = vmul.f32 %v2510, %v3021
        %v3023 = vrcp.pop %v2724
        %v3024 = vmul.f32 %v2512, %v3023
        %v3025 = vrcp.pop %v2730
        %v3026 = vmul.f32 %v2514, %v3025
        %v3027 = vrcp.pop %v2736
        %v3028 = vmul.f32 %v2516, %v3027
        %v3029 = vrcp.pop %v2742
        %v3030 = vmul.f32 %v2518, %v3029
        %v3031 = vrcp.pop %v2748
        %v3032 = vmul.f32 %v2520, %v3031
        %v3033 = vrcp.pop %v2754
        %v3034 = vmul.f32 %v2522, %v3033
        %v3035 = vrcp.pop %v2760
        %v3036 = vmul.f32 %v2524, %v3035
        %v3037 = vrcp.pop %v2766
        %v3038 = vmul.f32 %v2526, %v3037
        %v3039 = vrcp.pop %v2772
        %v3040 = vmul.f32 %v2528, %v3039
        %v3041 = vrcp.pop %v2778
        %v3042 = vmul.f32 %v2530, %v3041
        %v3043 = vrcp.pop %v2784
        %v3044 = vmul.f32 %v2532, %v3043
        %v3045 = vrcp.pop %v2790
        %v3046 = vmul.f32 %v2534, %v3045
        %v3047 = vrcp.pop %v2796
        %v3048 = vmul.f32 %v2536, %v3047
        %v3049 = vrcp.pop %v2802
        %v3050 = vmul.f32 %v2538, %v3049
        %v3051 = vrcp.pop %v2808
        %v3052 = vmul.f32 %v2540, %v3051
        %v3053 = vrcp.pop %v2814
        %v3054 = vmul.f32 %v2542, %v3053
        %v3055 = vrcp.pop %v2820
        %v3056 = vmul.f32 %v2544, %v3055
        %v3057 = vrcp.pop %v2826
        %v3058 = vmul.f32 %v2546, %v3057
        %v3059 = vrcp.pop %v2832
        %v3060 = vmul.f32 %v2548, %v3059
        %v3061 = vrcp.pop %v2838
        %v3062 = vmul.f32 %v2550, %v3061
        %v3063 = vrcp.pop %v2844
        %v3064 = vmul.f32 %v2552, %v3063
        %v3065 = vrcp.pop %v2850
        %v3066 = vmul.f32 %v2554, %v3065
        %v3067 = vrcp.pop %v2856
        %v3068 = vmul.f32 %v2556, %v3067
        %v3069 = vrcp.pop %v2862
        %v3070 = vmul.f32 %v2558, %v3069
        %v3071 = vrcp.pop %v2868
        %v3072 = vmul.f32 %v2560, %v3071
        %v3073 = vrcp.pop %v2874
        %v3074 = vmul.f32 %v2562, %v3073
        %v3075 = vrcp.pop %v2880
        %v3076 = vmul.f32 %v2564, %v3075
        %v3077 = vrcp.pop %v2886
        %v3078 = vmul.f32 %v2566, %v3077
        %v3079 = vrcp.pop %v2892
        %v3080 = vmul.f32 %v2568, %v3079
        %v3081 = vrcp.pop %v2898
        %v3082 = vmul.f32 %v2570, %v3081
        %v3083 = vrcp.pop %v2904
        %v3084 = vmul.f32 %v2572, %v3083
        %v3085 = vrcp.pop %v2910
        %v3086 = vmul.f32 %v2574, %v3085
        %v3087 = vrcp.pop %v2916
        %v3088 = vmul.f32 %v2576, %v3087
        %v3089 = vrcp.pop %v2922
        %v3090 = vmul.f32 %v2578, %v3089
        %v3091 = vrcp.pop %v2928
        %v3092 = vmul.f32 %v2580, %v3091
        %v3093 = vrcp.pop %v2934
        %v3094 = vmul.f32 %v2582, %v3093
        %v3095 = vrcp.pop %v2940
        %v3096 = vmul.f32 %v2584, %v3095
        %v3097 = vrcp.pop %v2946
        %v3098 = vmul.f32 %v2586, %v3097
        %v3099 = vrcp.pop %v2952
        %v3100 = vmul.f32 %v2588, %v3099
        %v3101 = vrcp.pop %v2958
        %v3102 = vmul.f32 %v2590, %v3101
        %v3103 = vrcp.pop %v2964
        %v3104 = vmul.f32 %v2592, %v3103
        %v3105 = vrcp.pop %v2970
        %v3106 = vmul.f32 %v2594, %v3105
        %v3107 = vrcp.pop %v2976
        %v3108 = vmul.f32 %v2596, %v3107
        %v3109 = vrcp.pop %v2982
        %v3110 = vmul.f32 %v2598, %v3109
        %3111 = vst [vmem:[%s203] sm:$0xff] %v2984
        %3112 = vst [vmem:[%s203 + $0x8] sm:$0xff] %v2986
        %3113 = vst [vmem:[%s203 + $0x10] sm:$0xff] %v2988
        %3114 = vst [vmem:[%s203 + $0x18] sm:$0xff] %v2990
        %3115 = vst [vmem:[%s203 + $0x20] sm:$0xff] %v2992
        %3116 = vst [vmem:[%s203 + $0x28] sm:$0xff] %v2994
        %3117 = vst [vmem:[%s203 + $0x30] sm:$0xff] %v2996
        %3118 = vst [vmem:[%s203 + $0x38] sm:$0xff] %v2998
        %3119 = vst [vmem:[%s203 + $0x40] sm:$0xff] %v3000
        %3120 = vst [vmem:[%s203 + $0x48] sm:$0xff] %v3002
        %3121 = vst [vmem:[%s203 + $0x50] sm:$0xff] %v3004
        %3122 = vst [vmem:[%s203 + $0x58] sm:$0xff] %v3006
        %3123 = vst [vmem:[%s203 + $0x60] sm:$0xff] %v3008
        %3124 = vst [vmem:[%s203 + $0x68] sm:$0xff] %v3010
        %3125 = vst [vmem:[%s203 + $0x70] sm:$0xff] %v3012
        %3126 = vst [vmem:[%s203 + $0x78] sm:$0xff] %v3014
        %3127 = vst [vmem:[%s203 + $0x80] sm:$0xff] %v3016
        %3128 = vst [vmem:[%s203 + $0x88] sm:$0xff] %v3018
        %3129 = vst [vmem:[%s203 + $0x90] sm:$0xff] %v3020
        %3130 = vst [vmem:[%s203 + $0x98] sm:$0xff] %v3022
        %3131 = vst [vmem:[%s203 + $0xa0] sm:$0xff] %v3024
        %3132 = vst [vmem:[%s203 + $0xa8] sm:$0xff] %v3026
        %3133 = vst [vmem:[%s203 + $0xb0] sm:$0xff] %v3028
        %3134 = vst [vmem:[%s203 + $0xb8] sm:$0xff] %v3030
        %3135 = vst [vmem:[%s203 + $0xc0] sm:$0xff] %v3032
        %3136 = vst [vmem:[%s203 + $0xc8] sm:$0xff] %v3034
        %3137 = vst [vmem:[%s203 + $0xd0] sm:$0xff] %v3036
        %3138 = vst [vmem:[%s203 + $0xd8] sm:$0xff] %v3038
        %3139 = vst [vmem:[%s203 + $0xe0] sm:$0xff] %v3040
        %3140 = vst [vmem:[%s203 + $0xe8] sm:$0xff] %v3042
        %3141 = vst [vmem:[%s203 + $0xf0] sm:$0xff] %v3044
        %3142 = vst [vmem:[%s203 + $0xf8] sm:$0xff] %v3046
        %3143 = vst [vmem:[%s203 + $0x100] sm:$0xff] %v3048
        %3144 = vst [vmem:[%s203 + $0x108] sm:$0xff] %v3050
        %3145 = vst [vmem:[%s203 + $0x110] sm:$0xff] %v3052
        %3146 = vst [vmem:[%s203 + $0x118] sm:$0xff] %v3054
        %3147 = vst [vmem:[%s203 + $0x120] sm:$0xff] %v3056
        %3148 = vst [vmem:[%s203 + $0x128] sm:$0xff] %v3058
        %3149 = vst [vmem:[%s203 + $0x130] sm:$0xff] %v3060
        %3150 = vst [vmem:[%s203 + $0x138] sm:$0xff] %v3062
        %3151 = vst [vmem:[%s203 + $0x140] sm:$0xff] %v3064
        %3152 = vst [vmem:[%s203 + $0x148] sm:$0xff] %v3066
        %3153 = vst [vmem:[%s203 + $0x150] sm:$0xff] %v3068
        %3154 = vst [vmem:[%s203 + $0x158] sm:$0xff] %v3070
        %3155 = vst [vmem:[%s203 + $0x160] sm:$0xff] %v3072
        %3156 = vst [vmem:[%s203 + $0x168] sm:$0xff] %v3074
        %3157 = vst [vmem:[%s203 + $0x170] sm:$0xff] %v3076
        %3158 = vst [vmem:[%s203 + $0x178] sm:$0xff] %v3078
        %3159 = vst [vmem:[%s203 + $0x180] sm:$0xff] %v3080
        %3160 = vst [vmem:[%s203 + $0x188] sm:$0xff] %v3082
        %3161 = vst [vmem:[%s203 + $0x190] sm:$0xff] %v3084
        %3162 = vst [vmem:[%s203 + $0x198] sm:$0xff] %v3086
        %3163 = vst [vmem:[%s203 + $0x1a0] sm:$0xff] %v3088
        %3164 = vst [vmem:[%s203 + $0x1a8] sm:$0xff] %v3090
        %3165 = vst [vmem:[%s203 + $0x1b0] sm:$0xff] %v3092
        %3166 = vst [vmem:[%s203 + $0x1b8] sm:$0xff] %v3094
        %3167 = vst [vmem:[%s203 + $0x1c0] sm:$0xff] %v3096
        %3168 = vst [vmem:[%s203 + $0x1c8] sm:$0xff] %v3098
        %3169 = vst [vmem:[%s203 + $0x1d0] sm:$0xff] %v3100
        %3170 = vst [vmem:[%s203 + $0x1d8] sm:$0xff] %v3102
        %3171 = vst [vmem:[%s203 + $0x1e0] sm:$0xff] %v3104
        %3172 = vst [vmem:[%s203 + $0x1e8] sm:$0xff] %v3106
        %3173 = vst [vmem:[%s203 + $0x1f0] sm:$0xff] %v3108
        %3174 = vst [vmem:[%s203 + $0x1f8] sm:$0xff] %v3110
        %s3175 = sand.u32 %s97, 1
        %s3176 = scalar_lea.sflag [#allocation4], %s3175
        %s3177 = sand.u32 %s97, 1
        %s3178 = smul.addr %s3177, 512
        %s3179 = scalar_lea.vmem [#allocation7], %s3178
        // Predicated region
        $region41: #{tpu_custom_call.1} parent=31 // pred_check
          %p3180 = pneg %p107
        $region42: #{tpu_custom_call.1} parent=31 // pred_check_branch
          %3182 = sbr.rel (%p3180) target = $region44
        $region43: #{tpu_custom_call.1} parent=31 // pred_region
          %s3183 = smul.u32 64, %s21
          %s3185 = ssub.s32 8192, 8192
          %3186 = vsyncadd %s3176, %s3185
          %s3187 = smul.addr %s3183, 128
          %s3188 = scalar_lea.hbm %s3, %s3187
          %s3189 = sshll.u32 %s3179, 4
          %s3190 = int_to_ptr.vmem [resolvable:$true] %s3189
          %3195 = dma.vmem_to_hbm [thread:$0]  %s3190, 8192, %s3188, %s3176, 128, 128, 8
        $region44: #{tpu_custom_call.1} parent=31 // pred_fallthru
          _
      $region32: #{tpu_custom_call.1} parent=5 // pred_fallthru
        _
      %p3196 = scmp.le.s32.totalorder 2, %s16
      // Predicated region
      $region45: #{tpu_custom_call.1} parent=5 // pred_check
        %p3197 = pneg %p3196
      $region46: #{tpu_custom_call.1} parent=5 // pred_check_branch
        %3199 = sbr.rel (%p3197) target = $region48
      $region47: #{tpu_custom_call.1} parent=5 // pred_region
        %s3200 = ssub.s32 %s16, 2
        // Predicated region
        $region49: #{tpu_custom_call.1} parent=47 // pred_check
          %p3201 = pneg %p113
        $region50: #{tpu_custom_call.1} parent=47 // pred_check_branch
          %3203 = sbr.rel (%p3201) target = $region52
        $region51: #{tpu_custom_call.1} parent=47 // pred_region
          %s3204 = sand.u32 %s98, 1
          %s3205 = scalar_lea.sflag [#allocation4], %s3204
          %s3206 = sand.u32 %s98, 1
          %s3207 = smul.addr %s3206, 512
          %s3208 = scalar_lea.vmem [#allocation7], %s3207
          %3209 = dma.done %s3205, 8192
        $region52: #{tpu_custom_call.1} parent=47 // pred_fallthru
          _
      $region48: #{tpu_custom_call.1} parent=5 // pred_fallthru
        _
    $region6: #{tpu_custom_call.1} parent=1 // loop_footer
      %s20 = sadd.s32 1, %s16
    $region7: #{tpu_custom_call.1} parent=1 // loop_footer_branch
      %15 = sbr.rel target = $region3
    $region8: #{tpu_custom_call.1} parent=1 // loop_exit
      _
    %3210 = vsyncpa [#allocation3], 1
    %s3211 = scalar_lea.sflag [#allocation3], 1
    %3212 = vsyncpa %s3211, 1
    %3213 = vsyncpa [#allocation6], 1
    %3214 = vsyncpa [#allocation4], 1
    %s3215 = scalar_lea.sflag [#allocation4], 1
    %3216 = vsyncpa %s3215, 1

</llo_original>
